<compile_context>
chip_gen: v7x
topology: tpu7x:2x2x1
jax: 0.10.0
libtpu: 0.0.40
codegen_flags: <defaults>
</compile_context>

<pallas_src>
import functools

import jax
import jax.numpy as jnp
from jax import lax
from jax.experimental import pallas as pl
from jax.experimental.pallas import tpu as pltpu

IN_F = 4096
HID = 1024
OUT_F = 1
N_SLABS = 4                 # hidden-feature slabs (grid axis)
HID_SLAB = HID // N_SLABS   # 256
BN_EPS = 1e-5
DROP_P = 0.2
_DROP_THRESH = int(round(DROP_P * 2 ** 32))   # uint32: drop if bits < thresh


def _splitmix32(z):
    """Cheap counter-based hash; uint32 in -> uint32 out (VPU int ops only)."""
    z = (z ^ (z >> 16)) * jnp.uint32(0x7FEB352D)
    z = (z ^ (z >> 15)) * jnp.uint32(0x846CA68B)
    return z ^ (z >> 16)


def _classifier_kernel(seed_ref, x_ref, w1_ref, gamma_ref, beta_ref,
                       w2_ref, b2_ref, out_ref, *, flag_dropout: bool):
    j = pl.program_id(0)   # hidden-feature slab index

    # fc1 slab: (B,4096) bf16 @ (4096,256) bf16 -> f32 on the MXU.
    # x is cast in-kernel (no separate wrapper cast op / HBM round trip).
    h = jnp.dot(x_ref[...].astype(jnp.bfloat16), w1_ref[...],
                preferred_element_type=jnp.float32)
    # fc1 bias omitted: exact no-op through training-mode BatchNorm.

    # BatchNorm1d, training mode: one-pass batch stats per feature.
    b_inv = 1.0 / x_ref.shape[0]
    mean = jnp.sum(h, axis=0, keepdims=True) * b_inv
    msq = jnp.sum(h * h, axis=0, keepdims=True) * b_inv
    var = msq - mean * mean
    hn = (h - mean) * lax.rsqrt(var + BN_EPS)
    hn = hn * gamma_ref[...] + beta_ref[...]

    # ReLU
    hn = jnp.maximum(hn, 0.0)

    if flag_dropout:
        # Inverted dropout; mask = hash(seed, global element index).
        seed_u = seed_ref[0].astype(jnp.uint32)
        row = lax.broadcasted_iota(jnp.int32, hn.shape, 0).astype(jnp.uint32)
        col = lax.broadcasted_iota(jnp.int32, hn.shape, 1).astype(jnp.uint32)
        feat = col + jnp.uint32(HID_SLAB) * j.astype(jnp.uint32)
        idx = row * jnp.uint32(HID) + feat
        z = _splitmix32(idx + seed_u * jnp.uint32(0x9E3779B9))
        keep = z >= jnp.uint32(_DROP_THRESH)
        hn = jnp.where(keep, hn * (1.0 / (1.0 - DROP_P)), 0.0)

    # Partial fc2 for this slab: OUT_F == 1, so VPU multiply + lane reduce.
    psum = jnp.sum(hn * w2_ref[...], axis=-1, keepdims=True)   # (B, 1)

    # Accumulate straight into the resident output block; fold in b2 at j==0.
    @pl.when(j == 0)
    def _():
        out_ref[...] = psum + b2_ref[...]

    @pl.when(j > 0)
    def _():
        out_ref[...] = out_ref[...] + psum


def net_classifier_forward(x, params, flag_dropout=False, dropout_seed=0):
    B = x.shape[0]
    assert x.shape == (B, IN_F)
    w1, b1, gamma, beta, w2_row, b2 = params
    del b1   # cancels exactly in training-mode BatchNorm; never sent to kernel

    seed = jnp.asarray([dropout_seed], dtype=jnp.int32)
    kernel = functools.partial(_classifier_kernel,
                               flag_dropout=bool(flag_dropout))

    return pl.pallas_call(
        kernel,
        out_shape=jax.ShapeDtypeStruct((B, OUT_F), jnp.float32),
        grid_spec=pltpu.PrefetchScalarGridSpec(
            num_scalar_prefetch=1,           # dropout seed -> SMEM
            grid=(N_SLABS,),
            in_specs=[
                pl.BlockSpec((B, IN_F), lambda j, seed: (0, 0)),         # x (f32)
                pl.BlockSpec((IN_F, HID_SLAB), lambda j, seed: (0, j)),  # W1 slab
                pl.BlockSpec((1, HID_SLAB), lambda j, seed: (0, j)),     # gamma
                pl.BlockSpec((1, HID_SLAB), lambda j, seed: (0, j)),     # beta
                pl.BlockSpec((1, HID_SLAB), lambda j, seed: (0, j)),     # w2 row
                pl.BlockSpec((1, OUT_F), lambda j, seed: (0, 0)),        # b2
            ],
            out_specs=pl.BlockSpec((B, OUT_F), lambda j, seed: (0, 0)),
        ),
        compiler_params=pltpu.CompilerParams(
            dimension_semantics=("arbitrary",),
            vmem_limit_bytes=32 * 1024 * 1024),
    )(seed, x, w1.astype(jnp.bfloat16), gamma, beta, w2_row, b2)


def init_params(key):
    k1, k2, k3, k4 = jax.random.split(key, 4)
    # fc1: PyTorch stores weight as (1024, 4096); keep the transposed
    # (4096, 1024) layout so the kernel does x @ W1 directly.  Stored bf16.
    bound1 = 1.0 / jnp.sqrt(IN_F)
    w1 = jax.random.uniform(k1, (IN_F, HID), jnp.float32,
                            -bound1, bound1).astype(jnp.bfloat16)
    b1 = jax.random.uniform(k2, (1, HID), jnp.float32, -bound1, bound1)
    gamma = jnp.ones((1, HID), jnp.float32)   # BatchNorm1d default weight
    beta = jnp.zeros((1, HID), jnp.float32)   # BatchNorm1d default bias
    bound2 = 1.0 / jnp.sqrt(HID)
    # fc2 weight in PyTorch is (1, 1024): exactly the row form we use.
    w2_row = jax.random.uniform(k3, (1, HID), jnp.float32, -bound2, bound2)
    b2 = jax.random.uniform(k4, (1, OUT_F), jnp.float32, -bound2, bound2)
    return (w1, b1, gamma, beta, w2_row, b2)


def reference_forward(x, params):
    """Pure-JAX reference mirroring the torch graph (incl. fc1 bias, 2-pass BN),
    with the same bf16-quantized matmul operands."""
    w1, b1, gamma, beta, w2_row, b2 = params
    h = jnp.dot(x.astype(jnp.bfloat16), w1.astype(jnp.bfloat16),
                preferred_element_type=jnp.float32) + b1
    mean = jnp.mean(h, axis=0, keepdims=True)
    var = jnp.mean((h - mean) ** 2, axis=0, keepdims=True)
    hn = (h - mean) * lax.rsqrt(var + BN_EPS) * gamma + beta
    hn = jnp.maximum(hn, 0.0)
    return jnp.sum(hn * w2_row, axis=-1, keepdims=True) + b2


if __name__ == "__main__":
    key = jax.random.PRNGKey(0)
    kx, kp = jax.random.split(key)
    B = 8
    x = jax.random.normal(kx, (B, IN_F), jnp.float32)
    params = init_params(kp)

    # Eval-style call (no dropout) — compare against the reference.
    out = net_classifier_forward(x, params, flag_dropout=False)
    out = jax.block_until_ready(out)
    ref = reference_forward(x, params)
    assert out.shape == (B, OUT_F)
    assert jnp.allclose(out, ref, atol=2e-3, rtol=2e-3), (
        f"max err {jnp.max(jnp.abs(out - ref))}")

    # Exercise the dropout path once (shape / finiteness check only — mask
    # RNG intentionally differs from torch's stream).
    out_drop = net_classifier_forward(x, params, flag_dropout=True,
                                      dropout_seed=123)
    out_drop = jax.block_until_ready(out_drop)
    assert out_drop.shape == (B, OUT_F)
    assert bool(jnp.all(jnp.isfinite(out_drop)))

    print("KERNEL_OK")
</pallas_src>

<mosaic_0001>
module attributes {stable_mosaic.version = 11 : i64} {
  func.func @_classifier_kernel(%arg0: i32, %arg1: memref<1xi32, #tpu.memory_space<smem>>, %arg2: memref<8x4096xf32, #tpu.memory_space<vmem>>, %arg3: memref<4096x256xbf16, #tpu.memory_space<vmem>>, %arg4: memref<1x256xf32, #tpu.memory_space<vmem>>, %arg5: memref<1x256xf32, #tpu.memory_space<vmem>>, %arg6: memref<1x256xf32, #tpu.memory_space<vmem>>, %arg7: memref<1x1xf32, #tpu.memory_space<vmem>>, %arg8: memref<8x1xf32, #tpu.memory_space<vmem>>) attributes {dimension_semantics = [#tpu.dimension_semantics<arbitrary>], iteration_bounds = array<i64: 4>, scalar_prefetch = 1 : i64, scratch_operands = 0 : i64, tpu.core_type = #tpu.core_type<tc>, window_params = [{pipeline_mode = #tpu.pipeline_mode<synchronous>, transform_indices = @transform_0, window_bounds = array<i64: 8, 4096>}, {transform_indices = @transform_1, window_bounds = array<i64: 4096, 256>}, {transform_indices = @transform_2, window_bounds = array<i64: 1, 256>}, {transform_indices = @transform_3, window_bounds = array<i64: 1, 256>}, {transform_indices = @transform_4, window_bounds = array<i64: 1, 256>}, {pipeline_mode = #tpu.pipeline_mode<synchronous>, transform_indices = @transform_5, window_bounds = array<i64: 1, 1>}, {pipeline_mode = #tpu.pipeline_mode<synchronous>, transform_indices = @transform_6, window_bounds = array<i64: 8, 1>}]} {
    %c0 = arith.constant 0 : index
    %c0_0 = arith.constant 0 : index
    %0 = vector.load %arg2[%c0, %c0_0] : memref<8x4096xf32, #tpu.memory_space<vmem>>, vector<8x4096xf32>
    %1 = arith.truncf %0 : vector<8x4096xf32> to vector<8x4096xbf16>
    %c0_1 = arith.constant 0 : index
    %c0_2 = arith.constant 0 : index
    %2 = vector.load %arg3[%c0_1, %c0_2] : memref<4096x256xbf16, #tpu.memory_space<vmem>>, vector<4096x256xbf16>
    %cst = arith.constant dense<0.000000e+00> : vector<8x256xf32>
    %3 = tpu.matmul %1, %2, %cst {dimension_numbers = #tpu.dot_dimension_numbers<[1], [0], [0], [1], [0, 0, 1, 1], [], []>} : vector<8x4096xbf16>, vector<4096x256xbf16>, vector<8x256xf32> -> vector<8x256xf32>
    %cst_3 = arith.constant dense<0.000000e+00> : vector<256xf32>
    %4 = vector.multi_reduction <add>, %3, %cst_3 [0] : vector<8x256xf32> to vector<256xf32>
    %5 = vector.shape_cast %4 : vector<256xf32> to vector<1x256xf32>
    %cst_4 = arith.constant 1.250000e-01 : f32
    %6 = vector.broadcast %cst_4 : f32 to vector<1x256xf32>
    %7 = arith.mulf %5, %6 : vector<1x256xf32>
    %8 = arith.mulf %3, %3 : vector<8x256xf32>
    %cst_5 = arith.constant dense<0.000000e+00> : vector<256xf32>
    %9 = vector.multi_reduction <add>, %8, %cst_5 [0] : vector<8x256xf32> to vector<256xf32>
    %10 = vector.shape_cast %9 : vector<256xf32> to vector<1x256xf32>
    %cst_6 = arith.constant 1.250000e-01 : f32
    %11 = vector.broadcast %cst_6 : f32 to vector<1x256xf32>
    %12 = arith.mulf %10, %11 : vector<1x256xf32>
    %13 = arith.mulf %7, %7 : vector<1x256xf32>
    %14 = arith.subf %12, %13 : vector<1x256xf32>
    %15 = vector.broadcast %7 : vector<1x256xf32> to vector<8x256xf32>
    %16 = arith.subf %3, %15 : vector<8x256xf32>
    %cst_7 = arith.constant 9.99999974E-6 : f32
    %17 = vector.broadcast %cst_7 : f32 to vector<1x256xf32>
    %18 = arith.addf %14, %17 : vector<1x256xf32>
    %19 = math.rsqrt %18 : vector<1x256xf32>
    %20 = vector.broadcast %19 : vector<1x256xf32> to vector<8x256xf32>
    %21 = arith.mulf %16, %20 : vector<8x256xf32>
    %c0_8 = arith.constant 0 : index
    %c0_9 = arith.constant 0 : index
    %22 = vector.load %arg4[%c0_8, %c0_9] : memref<1x256xf32, #tpu.memory_space<vmem>>, vector<1x256xf32>
    %23 = vector.broadcast %22 : vector<1x256xf32> to vector<8x256xf32>
    %24 = arith.mulf %21, %23 : vector<8x256xf32>
    %c0_10 = arith.constant 0 : index
    %c0_11 = arith.constant 0 : index
    %25 = vector.load %arg5[%c0_10, %c0_11] : memref<1x256xf32, #tpu.memory_space<vmem>>, vector<1x256xf32>
    %26 = vector.broadcast %25 : vector<1x256xf32> to vector<8x256xf32>
    %27 = arith.addf %24, %26 : vector<8x256xf32>
    %cst_12 = arith.constant 0.000000e+00 : f32
    %28 = vector.broadcast %cst_12 : f32 to vector<8x256xf32>
    %29 = arith.maximumf %27, %28 : vector<8x256xf32>
    %c0_13 = arith.constant 0 : index
    %c0_14 = arith.constant 0 : index
    %30 = vector.load %arg6[%c0_13, %c0_14] : memref<1x256xf32, #tpu.memory_space<vmem>>, vector<1x256xf32>
    %31 = vector.broadcast %30 : vector<1x256xf32> to vector<8x256xf32>
    %32 = arith.mulf %29, %31 : vector<8x256xf32>
    %cst_15 = arith.constant dense<0.000000e+00> : vector<8xf32>
    %33 = vector.multi_reduction <add>, %32, %cst_15 [1] : vector<8x256xf32> to vector<8xf32>
    %34 = vector.shape_cast %33 : vector<8xf32> to vector<8x1xf32>
    %c0_i32 = arith.constant 0 : i32
    %35 = arith.cmpi eq, %arg0, %c0_i32 : i32
    %36 = arith.extui %35 : i1 to i32
    %c0_i32_16 = arith.constant 0 : i32
    %37 = arith.cmpi ne, %36, %c0_i32_16 : i32
    scf.if %37 {
      %c0_19 = arith.constant 0 : index
      %c0_20 = arith.constant 0 : index
      %41 = vector.load %arg7[%c0_19, %c0_20] : memref<1x1xf32, #tpu.memory_space<vmem>>, vector<1x1xf32>
      %42 = vector.broadcast %41 : vector<1x1xf32> to vector<8x1xf32>
      %43 = arith.addf %34, %42 : vector<8x1xf32>
      %c0_21 = arith.constant 0 : index
      %c0_22 = arith.constant 0 : index
      %44 = vector.load %arg8[%c0_21, %c0_22] : memref<8x1xf32, #tpu.memory_space<vmem>>, vector<8x1xf32>
      tpu.vector_store %arg8[%c0_21, %c0_22], %43 {strides = array<i32>} : memref<8x1xf32, #tpu.memory_space<vmem>>, vector<8x1xf32>,
    } else {
    }
    %c0_i32_17 = arith.constant 0 : i32
    %38 = arith.cmpi sgt, %arg0, %c0_i32_17 : i32
    %39 = arith.extui %38 : i1 to i32
    %c0_i32_18 = arith.constant 0 : i32
    %40 = arith.cmpi ne, %39, %c0_i32_18 : i32
    scf.if %40 {
      %c0_19 = arith.constant 0 : index
      %c0_20 = arith.constant 0 : index
      %41 = vector.load %arg8[%c0_19, %c0_20] : memref<8x1xf32, #tpu.memory_space<vmem>>, vector<8x1xf32>
      %42 = arith.addf %41, %34 : vector<8x1xf32>
      %c0_21 = arith.constant 0 : index
      %c0_22 = arith.constant 0 : index
      %43 = vector.load %arg8[%c0_21, %c0_22] : memref<8x1xf32, #tpu.memory_space<vmem>>, vector<8x1xf32>
      tpu.vector_store %arg8[%c0_21, %c0_22], %42 {strides = array<i32>} : memref<8x1xf32, #tpu.memory_space<vmem>>, vector<8x1xf32>,
    } else {
    }
    return
  }
  func.func @transform_0(%arg0: i32, %arg1: memref<1xi32, #tpu.memory_space<smem>>) -> (i32, i32) {
    %c0_i32 = arith.constant 0 : i32
    %c0_i32_0 = arith.constant 0 : i32
    %c0_i32_1 = arith.constant 0 : i32
    return %c0_i32, %c0_i32_0 : i32, i32
  }
  func.func @transform_1(%arg0: i32, %arg1: memref<1xi32, #tpu.memory_space<smem>>) -> (i32, i32) {
    %c0_i32 = arith.constant 0 : i32
    %c0_i32_0 = arith.constant 0 : i32
    return %c0_i32, %arg0 : i32, i32
  }
  func.func @transform_2(%arg0: i32, %arg1: memref<1xi32, #tpu.memory_space<smem>>) -> (i32, i32) {
    %c0_i32 = arith.constant 0 : i32
    %c0_i32_0 = arith.constant 0 : i32
    return %c0_i32, %arg0 : i32, i32
  }
  func.func @transform_3(%arg0: i32, %arg1: memref<1xi32, #tpu.memory_space<smem>>) -> (i32, i32) {
    %c0_i32 = arith.constant 0 : i32
    %c0_i32_0 = arith.constant 0 : i32
    return %c0_i32, %arg0 : i32, i32
  }
  func.func @transform_4(%arg0: i32, %arg1: memref<1xi32, #tpu.memory_space<smem>>) -> (i32, i32) {
    %c0_i32 = arith.constant 0 : i32
    %c0_i32_0 = arith.constant 0 : i32
    return %c0_i32, %arg0 : i32, i32
  }
  func.func @transform_5(%arg0: i32, %arg1: memref<1xi32, #tpu.memory_space<smem>>) -> (i32, i32) {
    %c0_i32 = arith.constant 0 : i32
    %c0_i32_0 = arith.constant 0 : i32
    %c0_i32_1 = arith.constant 0 : i32
    return %c0_i32, %c0_i32_0 : i32, i32
  }
  func.func @transform_6(%arg0: i32, %arg1: memref<1xi32, #tpu.memory_space<smem>>) -> (i32, i32) {
    %c0_i32 = arith.constant 0 : i32
    %c0_i32_0 = arith.constant 0 : i32
    %c0_i32_1 = arith.constant 0 : i32
    return %c0_i32, %c0_i32_0 : i32, i32
  }
}

</mosaic_0001>

<llo_original>
// kernel: tpu_custom_call.1
$region0: #{tpu_custom_call.1}
  #allocation0 [shape = 'u32[]', space=smem, size = 0x4, offset = 0x4, fixed_abs, tag = 'smem constant byte address 0x4 - core index']
  #allocation1 [shape = 'u32[144,128]{1,0:T(1,128)}', space=vmem, size = 0x12000, scoped, tag = 'internal scratch']
  #allocation2 [shape = 's32[1]{0}', space=sflag, size = 0x4, scoped, tag = 'scoped memory for tpu_custom_call.1']
  #allocation3 [shape = 's32[1]{0:T(128)S(6)}', space=smem, size = 0x200, scoped, tag = 'prefetched SMEM operand 0']
  #allocation4 [shape = 'f32[1,1]{1,0:T(1,128)S(1)}', space=vmem, size = 0x200, scoped, tag = 'scoped memory for tpu_custom_call.1']
  %s0 = inlined_call_operand.<no memory space> [shape: s32[1], index: 0, kind: input, shape index: {}]
  %s1 = inlined_call_operand.hbm [shape: f32[8,4096], index: 1, kind: input, shape index: {}]
  %s2 = inlined_call_operand.hbm [shape: bf16[4096,1024], index: 2, kind: input, shape index: {}]
  %s3 = inlined_call_operand.hbm [shape: f32[1,1024], index: 3, kind: input, shape index: {}]
  %s4 = inlined_call_operand.hbm [shape: f32[1,1024], index: 4, kind: input, shape index: {}]
  %s5 = inlined_call_operand.hbm [shape: f32[1,1024], index: 5, kind: input, shape index: {}]
  %s6 = inlined_call_operand.<no memory space> [shape: f32[1,1], index: 6, kind: input, shape index: {}]
  %s7 = inlined_call_operand.vmem [shape: f32[8,1], index: 7, kind: output, shape index: {}]
  %s8 = sld [smem:[#allocation0]]
  $region85: #{tpu_custom_call.1} parent=0
    _
  %s10 = ssub.s32 1, %s8
  %s11 = scalar_select 0, %s10, %s8
  %12 = sst [smem:[#allocation3]] %s0
  %v13 = vstv %s6
  %14 = vst [vmem:[#allocation4] sm:$0x1] %v13
  $region1: #{tpu_custom_call.1} parent=0
    #allocation5 [shape = 'u8[131072]{0}', space=vmem, size = 0x20000, scoped, tag = 'input window, operand 1, single buffered']
    #allocation6 [shape = 's32[2]{0}', space=sflag, size = 0x8, scoped, tag = 'scoped memory for tpu_custom_call.1']
    #allocation7 [shape = 'u8[4194304]{0}', space=vmem, size = 0x400000, scoped, tag = 'input window, operand 2']
    #allocation8 [shape = 's32[2]{0}', space=sflag, size = 0x8, scoped, tag = 'scoped memory for tpu_custom_call.1']
    #allocation9 [shape = 'u8[2048]{0}', space=vmem, size = 0x800, scoped, tag = 'input window, operand 3']
    #allocation10 [shape = 'u8[2048]{0}', space=vmem, size = 0x800, scoped, tag = 'input window, operand 4']
    #allocation11 [shape = 's32[2]{0}', space=sflag, size = 0x8, scoped, tag = 'scoped memory for tpu_custom_call.1']
    #allocation12 [shape = 'u8[2048]{0}', space=vmem, size = 0x800, scoped, tag = 'input window, operand 5']
    %15 = vsyncpa [#allocation6], 0
    %16 = vsyncpa [#allocation8], 0
    %s17 = scalar_lea.sflag [#allocation8], 1
    %18 = vsyncpa %s17, 0
    %19 = vsyncpa [#allocation11], 0
    %s20 = scalar_lea.sflag [#allocation11], 1
    %21 = vsyncpa %s20, 0
    loop: start=0, step=1, limit=6
    $region2: #{tpu_custom_call.1} parent=1 // loop_pre_header
      _
    $region3: #{tpu_custom_call.1} parent=1 // loop_header
      %s23 = sphi 0, %s27
      %p24 = scmp.ge.s32.totalorder %s23, 6
      %s31 = sphi 0, %s31
      %s33 = sphi 0, %s31
      %s34 = sphi 0, %s33
      %s48 = sphi 0, %s34
      %s54 = sphi 0, %s56
      %s57 = sphi 0, %s54
      %s58 = sphi 0, %s57
      %s74 = sphi 0, %s58
      %s80 = sphi 0, %s82
      %s83 = sphi 0, %s80
      %s84 = sphi 0, %s83
      %s100 = sphi 0, %s84
      %s106 = sphi 0, %s108
      %s109 = sphi 0, %s106
      %s110 = sphi 0, %s109
      %s126 = sphi 0, %s110
      %s132 = sphi 0, %s134
      %s135 = sphi 0, %s132
      %s136 = sphi 0, %s135
      %s152 = sphi 0, %s136
      %s156 = sphi 0, %s156
      %s158 = sphi 0, %s156
      %s159 = sphi 0, %s158
      %s173 = sphi 0, %s159
      %s177 = sphi 0, %s177
      %s179 = sphi 0, %s177
      %s180 = sphi 0, %s179
      %s194 = sphi 0, %s180
    $region4: #{tpu_custom_call.1} parent=1 // loop_header_branch
      %26 = sbr.rel (%p24) target = $region8
    $region5: #{tpu_custom_call.1} parent=1 // loop_body
      %s28 = ssub.s32 %s23, 1
      %s29 = ssub.s32 %s23, 2
      %s30 = sadd.s32 %s23, 1
      %s32 = sadd.s32 %s31, 1
      %p35 = scmp.eq.s32.totalorder %s23, 3
      %p36 = scmp.ne.s32.totalorder %s31, %s33
      %p37 = scmp.eq.s32.totalorder %s23, 0
      %p38 = por %p36, %p37
      %p39 = scmp.ne.s32.totalorder %s31, %s33
      %p40 = scmp.eq.s32.totalorder %s28, 3
      %p41 = por %p39, %p40
      %p42 = scmp.ne.s32.totalorder %s33, %s34
      %p43 = scmp.eq.s32.totalorder %s28, 0
      %p44 = por %p42, %p43
      %p45 = scmp.ne.s32.totalorder %s33, %s34
      %p46 = scmp.eq.s32.totalorder %s29, 3
      %p47 = por %p45, %p46
      %p49 = scmp.ne.s32.totalorder %s34, %s48
      %p50 = scmp.eq.s32.totalorder %s29, 0
      %p51 = por %p49, %p50
      %s52 = ssub.s32 %s23, %s30
      %p53 = scmp.eq.s32.totalorder %s52, 0
      %s55 = sadd.s32 %s54, 1
      %s56 = scalar_select %p53, %s54, %s55
      %p59 = pneg %p53
      %p60 = scmp.eq.s32.totalorder %s23, 3
      %p61 = por %p59, %p60
      %p62 = scmp.ne.s32.totalorder %s54, %s57
      %p63 = scmp.eq.s32.totalorder %s23, 0
      %p64 = por %p62, %p63
      %p65 = scmp.ne.s32.totalorder %s54, %s57
      %p66 = scmp.eq.s32.totalorder %s28, 3
      %p67 = por %p65, %p66
      %p68 = scmp.ne.s32.totalorder %s57, %s58
      %p69 = scmp.eq.s32.totalorder %s28, 0
      %p70 = por %p68, %p69
      %p71 = scmp.ne.s32.totalorder %s57, %s58
      %p72 = scmp.eq.s32.totalorder %s29, 3
      %p73 = por %p71, %p72
      %p75 = scmp.ne.s32.totalorder %s58, %s74
      %p76 = scmp.eq.s32.totalorder %s29, 0
      %p77 = por %p75, %p76
      %s78 = ssub.s32 %s23, %s30
      %p79 = scmp.eq.s32.totalorder %s78, 0
      %s81 = sadd.s32 %s80, 1
      %s82 = scalar_select %p79, %s80, %s81
      %p85 = pneg %p79
      %p86 = scmp.eq.s32.totalorder %s23, 3
      %p87 = por %p85, %p86
      %p88 = scmp.ne.s32.totalorder %s80, %s83
      %p89 = scmp.eq.s32.totalorder %s23, 0
      %p90 = por %p88, %p89
      %p91 = scmp.ne.s32.totalorder %s80, %s83
      %p92 = scmp.eq.s32.totalorder %s28, 3
      %p93 = por %p91, %p92
      %p94 = scmp.ne.s32.totalorder %s83, %s84
      %p95 = scmp.eq.s32.totalorder %s28, 0
      %p96 = por %p94, %p95
      %p97 = scmp.ne.s32.totalorder %s83, %s84
      %p98 = scmp.eq.s32.totalorder %s29, 3
      %p99 = por %p97, %p98
      %p101 = scmp.ne.s32.totalorder %s84, %s100
      %p102 = scmp.eq.s32.totalorder %s29, 0
      %p103 = por %p101, %p102
      %s104 = ssub.s32 %s23, %s30
      %p105 = scmp.eq.s32.totalorder %s104, 0
      %s107 = sadd.s32 %s106, 1
      %s108 = scalar_select %p105, %s106, %s107
      %p111 = pneg %p105
      %p112 = scmp.eq.s32.totalorder %s23, 3
      %p113 = por %p111, %p112
      %p114 = scmp.ne.s32.totalorder %s106, %s109
      %p115 = scmp.eq.s32.totalorder %s23, 0
      %p116 = por %p114, %p115
      %p117 = scmp.ne.s32.totalorder %s106, %s109
      %p118 = scmp.eq.s32.totalorder %s28, 3
      %p119 = por %p117, %p118
      %p120 = scmp.ne.s32.totalorder %s109, %s110
      %p121 = scmp.eq.s32.totalorder %s28, 0
      %p122 = por %p120, %p121
      %p123 = scmp.ne.s32.totalorder %s109, %s110
      %p124 = scmp.eq.s32.totalorder %s29, 3
      %p125 = por %p123, %p124
      %p127 = scmp.ne.s32.totalorder %s110, %s126
      %p128 = scmp.eq.s32.totalorder %s29, 0
      %p129 = por %p127, %p128
      %s130 = ssub.s32 %s23, %s30
      %p131 = scmp.eq.s32.totalorder %s130, 0
      %s133 = sadd.s32 %s132, 1
      %s134 = scalar_select %p131, %s132, %s133
      %p137 = pneg %p131
      %p138 = scmp.eq.s32.totalorder %s23, 3
      %p139 = por %p137, %p138
      %p140 = scmp.ne.s32.totalorder %s132, %s135
      %p141 = scmp.eq.s32.totalorder %s23, 0
      %p142 = por %p140, %p141
      %p143 = scmp.ne.s32.totalorder %s132, %s135
      %p144 = scmp.eq.s32.totalorder %s28, 3
      %p145 = por %p143, %p144
      %p146 = scmp.ne.s32.totalorder %s135, %s136
      %p147 = scmp.eq.s32.totalorder %s28, 0
      %p148 = por %p146, %p147
      %p149 = scmp.ne.s32.totalorder %s135, %s136
      %p150 = scmp.eq.s32.totalorder %s29, 3
      %p151 = por %p149, %p150
      %p153 = scmp.ne.s32.totalorder %s136, %s152
      %p154 = scmp.eq.s32.totalorder %s29, 0
      %p155 = por %p153, %p154
      %s157 = sadd.s32 %s156, 1
      %p160 = scmp.eq.s32.totalorder %s23, 3
      %p161 = scmp.ne.s32.totalorder %s156, %s158
      %p162 = scmp.eq.s32.totalorder %s23, 0
      %p163 = por %p161, %p162
      %p164 = scmp.ne.s32.totalorder %s156, %s158
      %p165 = scmp.eq.s32.totalorder %s28, 3
      %p166 = por %p164, %p165
      %p167 = scmp.ne.s32.totalorder %s158, %s159
      %p168 = scmp.eq.s32.totalorder %s28, 0
      %p169 = por %p167, %p168
      %p170 = scmp.ne.s32.totalorder %s158, %s159
      %p171 = scmp.eq.s32.totalorder %s29, 3
      %p172 = por %p170, %p171
      %p174 = scmp.ne.s32.totalorder %s159, %s173
      %p175 = scmp.eq.s32.totalorder %s29, 0
      %p176 = por %p174, %p175
      %s178 = sadd.s32 %s177, 1
      %p181 = scmp.eq.s32.totalorder %s23, 3
      %p182 = scmp.ne.s32.totalorder %s177, %s179
      %p183 = scmp.eq.s32.totalorder %s23, 0
      %p184 = por %p182, %p183
      %p185 = scmp.ne.s32.totalorder %s177, %s179
      %p186 = scmp.eq.s32.totalorder %s28, 3
      %p187 = por %p185, %p186
      %p188 = scmp.ne.s32.totalorder %s179, %s180
      %p189 = scmp.eq.s32.totalorder %s28, 0
      %p190 = por %p188, %p189
      %p191 = scmp.ne.s32.totalorder %s179, %s180
      %p192 = scmp.eq.s32.totalorder %s29, 3
      %p193 = por %p191, %p192
      %p195 = scmp.ne.s32.totalorder %s180, %s194
      %p196 = scmp.eq.s32.totalorder %s29, 0
      %p197 = por %p195, %p196
      %p198 = scmp.le.s32.totalorder 1, %s23
      %p199 = scmp.lt.s32.totalorder %s23, 5
      %p200 = pnand %p198, %p199
      %p201 = pneg %p200
      // Predicated region
      $region9: #{tpu_custom_call.1} parent=5 // pred_check
        _
      $region10: #{tpu_custom_call.1} parent=5 // pred_check_branch
        %203 = sbr.rel (%p200) target = $region12
      $region11: #{tpu_custom_call.1} parent=5 // pred_region
        %s204 = ssub.s32 %s23, 1
        // Predicated region
        $region13: #{tpu_custom_call.1} parent=11 // pred_check
          %p205 = pneg %p44
        $region14: #{tpu_custom_call.1} parent=11 // pred_check_branch
          %207 = sbr.rel (%p205) target = $region16
        $region15: #{tpu_custom_call.1} parent=11 // pred_region
          %s209 = ssub.s32 4096, 4096
          %210 = vsyncadd [#allocation6], %s209
          %s212 = sshll.u32 [#allocation5], 4
          %s213 = int_to_ptr.vmem [resolvable:$true] %s212
          %215 = dma.hbm_to_vmem [thread:$0]  %s1, 4096, %s213, [#allocation6]
        $region16: #{tpu_custom_call.1} parent=11 // pred_fallthru
          _
        // Predicated region
        $region17: #{tpu_custom_call.1} parent=11 // pred_check
          %p216 = pneg %p169
        $region18: #{tpu_custom_call.1} parent=11 // pred_check_branch
          %218 = sbr.rel (%p216) target = $region20
        $region19: #{tpu_custom_call.1} parent=11 // pred_region
          _
        $region20: #{tpu_custom_call.1} parent=11 // pred_fallthru
          _
      $region12: #{tpu_custom_call.1} parent=5 // pred_fallthru
        _
      %p219 = scmp.lt.s32.totalorder %s23, 4
      // Predicated region
      $region21: #{tpu_custom_call.1} parent=5 // pred_check
        %p220 = pneg %p219
      $region22: #{tpu_custom_call.1} parent=5 // pred_check_branch
        %222 = sbr.rel (%p220) target = $region24
      $region23: #{tpu_custom_call.1} parent=5 // pred_region
        // Predicated region
        $region25: #{tpu_custom_call.1} parent=23 // pred_check
          %p223 = pneg %p64
        $region26: #{tpu_custom_call.1} parent=23 // pred_check_branch
          %225 = sbr.rel (%p223) target = $region28
        $region27: #{tpu_custom_call.1} parent=23 // pred_region
          %s226 = sand.u32 %s23, 1
          %s227 = scalar_lea.sflag [#allocation8], %s226
          %s228 = sand.u32 %s54, 1
          %s229 = smul.addr %s228, 4096
          %s230 = scalar_lea.vmem [#allocation7], %s229
          %s231 = smul.u32 2, %s23
          %s233 = ssub.s32 65536, 65536
          %234 = vsyncadd %s227, %s233
          %s235 = smul.addr %s231, 64
          %s236 = scalar_lea.hbm %s2, %s235
          %s237 = sshll.u32 %s230, 4
          %s238 = int_to_ptr.vmem [resolvable:$true] %s237
          %243 = dma.hbm_to_vmem [thread:$0]  %s236, 65536, %s238, %s227, 512, 128, 8
        $region28: #{tpu_custom_call.1} parent=23 // pred_fallthru
          _
        // Predicated region
        $region29: #{tpu_custom_call.1} parent=23 // pred_check
          %p244 = pneg %p90
        $region30: #{tpu_custom_call.1} parent=23 // pred_check_branch
          %246 = sbr.rel (%p244) target = $region32
        $region31: #{tpu_custom_call.1} parent=23 // pred_region
          %s247 = sand.u32 %s23, 1
          %s248 = scalar_lea.sflag [#allocation8], %s247
          %s249 = sand.u32 %s80, 1
          %s250 = smul.addr %s249, 2
          %s251 = scalar_lea.vmem [#allocation9], %s250
          %s252 = smul.u32 2, %s23
          %s254 = ssub.s32 32, 32
          %255 = vsyncadd %s248, %s254
          %s256 = smul.addr %s252, 16
          %s257 = scalar_lea.hbm %s3, %s256
          %s259 = sshll.u32 %s251, 4
          %s260 = int_to_ptr.vmem [resolvable:$true] %s259
          %262 = dma.hbm_to_vmem [thread:$0]  %s257, 32, %s260, %s248
        $region32: #{tpu_custom_call.1} parent=23 // pred_fallthru
          _
        // Predicated region
        $region33: #{tpu_custom_call.1} parent=23 // pred_check
          %p263 = pneg %p116
        $region34: #{tpu_custom_call.1} parent=23 // pred_check_branch
          %265 = sbr.rel (%p263) target = $region36
        $region35: #{tpu_custom_call.1} parent=23 // pred_region
          %s266 = sand.u32 %s23, 1
          %s267 = scalar_lea.sflag [#allocation11], %s266
          %s268 = sand.u32 %s106, 1
          %s269 = smul.addr %s268, 2
          %s270 = scalar_lea.vmem [#allocation10], %s269
          %s271 = smul.u32 2, %s23
          %s273 = ssub.s32 32, 32
          %274 = vsyncadd %s267, %s273
          %s275 = smul.addr %s271, 16
          %s276 = scalar_lea.hbm %s4, %s275
          %s278 = sshll.u32 %s270, 4
          %s279 = int_to_ptr.vmem [resolvable:$true] %s278
          %281 = dma.hbm_to_vmem [thread:$0]  %s276, 32, %s279, %s267
        $region36: #{tpu_custom_call.1} parent=23 // pred_fallthru
          _
        // Predicated region
        $region37: #{tpu_custom_call.1} parent=23 // pred_check
          %p282 = pneg %p142
        $region38: #{tpu_custom_call.1} parent=23 // pred_check_branch
          %284 = sbr.rel (%p282) target = $region40
        $region39: #{tpu_custom_call.1} parent=23 // pred_region
          %s285 = sand.u32 %s23, 1
          %s286 = scalar_lea.sflag [#allocation11], %s285
          %s287 = sand.u32 %s132, 1
          %s288 = smul.addr %s287, 2
          %s289 = scalar_lea.vmem [#allocation12], %s288
          %s290 = smul.u32 2, %s23
          %s292 = ssub.s32 32, 32
          %293 = vsyncadd %s286, %s292
          %s294 = smul.addr %s290, 16
          %s295 = scalar_lea.hbm %s5, %s294
          %s297 = sshll.u32 %s289, 4
          %s298 = int_to_ptr.vmem [resolvable:$true] %s297
          %300 = dma.hbm_to_vmem [thread:$0]  %s295, 32, %s298, %s286
        $region40: #{tpu_custom_call.1} parent=23 // pred_fallthru
          _
      $region24: #{tpu_custom_call.1} parent=5 // pred_fallthru
        _
      %p301 = scmp.le.s32.totalorder 1, %s23
      %p302 = scmp.lt.s32.totalorder %s23, 5
      %p303 = pnand %p301, %p302
      %p304 = pneg %p303
      // Predicated region
      $region41: #{tpu_custom_call.1} parent=5 // pred_check
        _
      $region42: #{tpu_custom_call.1} parent=5 // pred_check_branch
        %306 = sbr.rel (%p303) target = $region44
      $region43: #{tpu_custom_call.1} parent=5 // pred_region
        %s307 = ssub.s32 %s23, 1
        // Predicated region
        $region45: #{tpu_custom_call.1} parent=43 // pred_check
          %p308 = pneg %p44
        $region46: #{tpu_custom_call.1} parent=43 // pred_check_branch
          %310 = sbr.rel (%p308) target = $region48
        $region47: #{tpu_custom_call.1} parent=43 // pred_region
          %311 = dma.done [#allocation6], 4096
        $region48: #{tpu_custom_call.1} parent=43 // pred_fallthru
          _
        %s312 = sand.u32 %s28, 1
        %s313 = scalar_lea.sflag [#allocation8], %s312
        %s314 = sand.u32 %s57, 1
        %s315 = smul.addr %s314, 4096
        %s316 = scalar_lea.vmem [#allocation7], %s315
        // Predicated region
        $region49: #{tpu_custom_call.1} parent=43 // pred_check
          %p317 = pneg %p70
        $region50: #{tpu_custom_call.1} parent=43 // pred_check_branch
          %319 = sbr.rel (%p317) target = $region52
        $region51: #{tpu_custom_call.1} parent=43 // pred_region
          %320 = dma.done %s313, 65536
        $region52: #{tpu_custom_call.1} parent=43 // pred_fallthru
          _
        %s321 = sand.u32 %s28, 1
        %s322 = scalar_lea.sflag [#allocation8], %s321
        %s323 = sand.u32 %s83, 1
        %s324 = smul.addr %s323, 2
        %s325 = scalar_lea.vmem [#allocation9], %s324
        // Predicated region
        $region53: #{tpu_custom_call.1} parent=43 // pred_check
          %p326 = pneg %p96
        $region54: #{tpu_custom_call.1} parent=43 // pred_check_branch
          %328 = sbr.rel (%p326) target = $region56
        $region55: #{tpu_custom_call.1} parent=43 // pred_region
          %329 = dma.done %s322, 32
        $region56: #{tpu_custom_call.1} parent=43 // pred_fallthru
          _
        %s330 = sand.u32 %s28, 1
        %s331 = scalar_lea.sflag [#allocation11], %s330
        %s332 = sand.u32 %s109, 1
        %s333 = smul.addr %s332, 2
        %s334 = scalar_lea.vmem [#allocation10], %s333
        // Predicated region
        $region57: #{tpu_custom_call.1} parent=43 // pred_check
          %p335 = pneg %p122
        $region58: #{tpu_custom_call.1} parent=43 // pred_check_branch
          %337 = sbr.rel (%p335) target = $region60
        $region59: #{tpu_custom_call.1} parent=43 // pred_region
          %338 = dma.done %s331, 32
        $region60: #{tpu_custom_call.1} parent=43 // pred_fallthru
          _
        %s339 = sand.u32 %s28, 1
        %s340 = scalar_lea.sflag [#allocation11], %s339
        %s341 = sand.u32 %s135, 1
        %s342 = smul.addr %s341, 2
        %s343 = scalar_lea.vmem [#allocation12], %s342
        // Predicated region
        $region61: #{tpu_custom_call.1} parent=43 // pred_check
          %p344 = pneg %p148
        $region62: #{tpu_custom_call.1} parent=43 // pred_check_branch
          %346 = sbr.rel (%p344) target = $region64
        $region63: #{tpu_custom_call.1} parent=43 // pred_region
          %347 = dma.done %s340, 32
        $region64: #{tpu_custom_call.1} parent=43 // pred_fallthru
          _
        %p348 = pneg %p44
        %p349 = pneg %p41
        %s350 = sand.u32 %s28, 1
        %s351 = scalar_lea.sflag [#allocation8], %s350
        %s352 = sand.u32 %s57, 1
        %s353 = smul.addr %s352, 4096
        %s354 = scalar_lea.vmem [#allocation7], %s353
        %p355 = pneg %p70
        %p356 = pneg %p67
        %s357 = sand.u32 %s28, 1
        %s358 = scalar_lea.sflag [#allocation8], %s357
        %s359 = sand.u32 %s83, 1
        %s360 = smul.addr %s359, 2
        %s361 = scalar_lea.vmem [#allocation9], %s360
        %p362 = pneg %p96
        %p363 = pneg %p93
        %s364 = sand.u32 %s28, 1
        %s365 = scalar_lea.sflag [#allocation11], %s364
        %s366 = sand.u32 %s109, 1
        %s367 = smul.addr %s366, 2
        %s368 = scalar_lea.vmem [#allocation10], %s367
        %p369 = pneg %p122
        %p370 = pneg %p119
        %s371 = sand.u32 %s28, 1
        %s372 = scalar_lea.sflag [#allocation11], %s371
        %s373 = sand.u32 %s135, 1
        %s374 = smul.addr %s373, 2
        %s375 = scalar_lea.vmem [#allocation12], %s374
        %p376 = pneg %p148
        %p377 = pneg %p145
        %p378 = pneg %p169
        %p379 = pneg %p166
        %p380 = pneg %p190
        %p381 = pneg %p187
        %s382 = smul.u32 2, %s28
        %s383 = smul.u32 2, %s28
        %s384 = smul.u32 2, %s28
        %s385 = smul.u32 2, %s28
        %v386 = vld [vmem:[#allocation5] sm:$0xff]
        %v387 = vld [vmem:[#allocation5 + $0x8] sm:$0xff]
        %v388 = vld [vmem:[#allocation5 + $0x10] sm:$0xff]
        %v389 = vld [vmem:[#allocation5 + $0x18] sm:$0xff]
        %v390 = vld [vmem:[#allocation5 + $0x20] sm:$0xff]
        %v391 = vld [vmem:[#allocation5 + $0x28] sm:$0xff]
        %v392 = vld [vmem:[#allocation5 + $0x30] sm:$0xff]
        %v393 = vld [vmem:[#allocation5 + $0x38] sm:$0xff]
        %v394 = vld [vmem:[#allocation5 + $0x40] sm:$0xff]
        %v395 = vld [vmem:[#allocation5 + $0x48] sm:$0xff]
        %v396 = vld [vmem:[#allocation5 + $0x50] sm:$0xff]
        %v397 = vld [vmem:[#allocation5 + $0x58] sm:$0xff]
        %v398 = vld [vmem:[#allocation5 + $0x60] sm:$0xff]
        %v399 = vld [vmem:[#allocation5 + $0x68] sm:$0xff]
        %v400 = vld [vmem:[#allocation5 + $0x70] sm:$0xff]
        %v401 = vld [vmem:[#allocation5 + $0x78] sm:$0xff]
        %v402 = vld [vmem:[#allocation5 + $0x80] sm:$0xff]
        %v403 = vld [vmem:[#allocation5 + $0x88] sm:$0xff]
        %v404 = vld [vmem:[#allocation5 + $0x90] sm:$0xff]
        %v405 = vld [vmem:[#allocation5 + $0x98] sm:$0xff]
        %v406 = vld [vmem:[#allocation5 + $0xa0] sm:$0xff]
        %v407 = vld [vmem:[#allocation5 + $0xa8] sm:$0xff]
        %v408 = vld [vmem:[#allocation5 + $0xb0] sm:$0xff]
        %v409 = vld [vmem:[#allocation5 + $0xb8] sm:$0xff]
        %v410 = vld [vmem:[#allocation5 + $0xc0] sm:$0xff]
        %v411 = vld [vmem:[#allocation5 + $0xc8] sm:$0xff]
        %v412 = vld [vmem:[#allocation5 + $0xd0] sm:$0xff]
        %v413 = vld [vmem:[#allocation5 + $0xd8] sm:$0xff]
        %v414 = vld [vmem:[#allocation5 + $0xe0] sm:$0xff]
        %v415 = vld [vmem:[#allocation5 + $0xe8] sm:$0xff]
        %v416 = vld [vmem:[#allocation5 + $0xf0] sm:$0xff]
        %v417 = vld [vmem:[#allocation5 + $0xf8] sm:$0xff]
        %v418 = vpack.c.bf16 %v386, %v386
        %v419 = vpack.c.bf16 %v387, %v387
        %v420 = vpack.c.bf16 %v388, %v388
        %v421 = vpack.c.bf16 %v389, %v389
        %v422 = vpack.c.bf16 %v390, %v390
        %v423 = vpack.c.bf16 %v391, %v391
        %v424 = vpack.c.bf16 %v392, %v392
        %v425 = vpack.c.bf16 %v393, %v393
        %v426 = vpack.c.bf16 %v394, %v394
        %v427 = vpack.c.bf16 %v395, %v395
        %v428 = vpack.c.bf16 %v396, %v396
        %v429 = vpack.c.bf16 %v397, %v397
        %v430 = vpack.c.bf16 %v398, %v398
        %v431 = vpack.c.bf16 %v399, %v399
        %v432 = vpack.c.bf16 %v400, %v400
        %v433 = vpack.c.bf16 %v401, %v401
        %v434 = vpack.c.bf16 %v402, %v402
        %v435 = vpack.c.bf16 %v403, %v403
        %v436 = vpack.c.bf16 %v404, %v404
        %v437 = vpack.c.bf16 %v405, %v405
        %v438 = vpack.c.bf16 %v406, %v406
        %v439 = vpack.c.bf16 %v407, %v407
        %v440 = vpack.c.bf16 %v408, %v408
        %v441 = vpack.c.bf16 %v409, %v409
        %v442 = vpack.c.bf16 %v410, %v410
        %v443 = vpack.c.bf16 %v411, %v411
        %v444 = vpack.c.bf16 %v412, %v412
        %v445 = vpack.c.bf16 %v413, %v413
        %v446 = vpack.c.bf16 %v414, %v414
        %v447 = vpack.c.bf16 %v415, %v415
        %v448 = vpack.c.bf16 %v416, %v416
        %v449 = vpack.c.bf16 %v417, %v417
        %v450 = vld [vmem:[%s316] sm:$0xff]
        %v451 = vld [vmem:[%s316 + $0x8] sm:$0xff]
        %v452 = vld [vmem:[%s316 + $0x10] sm:$0xff]
        %v453 = vld [vmem:[%s316 + $0x18] sm:$0xff]
        %v454 = vld [vmem:[%s316 + $0x20] sm:$0xff]
        %v455 = vld [vmem:[%s316 + $0x28] sm:$0xff]
        %v456 = vld [vmem:[%s316 + $0x30] sm:$0xff]
        %v457 = vld [vmem:[%s316 + $0x38] sm:$0xff]
        %v458 = vld [vmem:[%s316 + $0x40] sm:$0xff]
        %v459 = vld [vmem:[%s316 + $0x48] sm:$0xff]
        %v460 = vld [vmem:[%s316 + $0x50] sm:$0xff]
        %v461 = vld [vmem:[%s316 + $0x58] sm:$0xff]
        %v462 = vld [vmem:[%s316 + $0x60] sm:$0xff]
        %v463 = vld [vmem:[%s316 + $0x68] sm:$0xff]
        %v464 = vld [vmem:[%s316 + $0x70] sm:$0xff]
        %v465 = vld [vmem:[%s316 + $0x78] sm:$0xff]
        %v466 = vld [vmem:[%s316 + $0x80] sm:$0xff]
        %v467 = vld [vmem:[%s316 + $0x88] sm:$0xff]
        %v468 = vld [vmem:[%s316 + $0x90] sm:$0xff]
        %v469 = vld [vmem:[%s316 + $0x98] sm:$0xff]
        %v470 = vld [vmem:[%s316 + $0xa0] sm:$0xff]
        %v471 = vld [vmem:[%s316 + $0xa8] sm:$0xff]
        %v472 = vld [vmem:[%s316 + $0xb0] sm:$0xff]
        %v473 = vld [vmem:[%s316 + $0xb8] sm:$0xff]
        %v474 = vld [vmem:[%s316 + $0xc0] sm:$0xff]
        %v475 = vld [vmem:[%s316 + $0xc8] sm:$0xff]
        %v476 = vld [vmem:[%s316 + $0xd0] sm:$0xff]
        %v477 = vld [vmem:[%s316 + $0xd8] sm:$0xff]
        %v478 = vld [vmem:[%s316 + $0xe0] sm:$0xff]
        %v479 = vld [vmem:[%s316 + $0xe8] sm:$0xff]
        %v480 = vld [vmem:[%s316 + $0xf0] sm:$0xff]
        %v481 = vld [vmem:[%s316 + $0xf8] sm:$0xff]
        %v482 = vld [vmem:[%s316 + $0x100] sm:$0xff]
        %v483 = vld [vmem:[%s316 + $0x108] sm:$0xff]
        %v484 = vld [vmem:[%s316 + $0x110] sm:$0xff]
        %v485 = vld [vmem:[%s316 + $0x118] sm:$0xff]
        %v486 = vld [vmem:[%s316 + $0x120] sm:$0xff]
        %v487 = vld [vmem:[%s316 + $0x128] sm:$0xff]
        %v488 = vld [vmem:[%s316 + $0x130] sm:$0xff]
        %v489 = vld [vmem:[%s316 + $0x138] sm:$0xff]
        %v490 = vld [vmem:[%s316 + $0x140] sm:$0xff]
        %v491 = vld [vmem:[%s316 + $0x148] sm:$0xff]
        %v492 = vld [vmem:[%s316 + $0x150] sm:$0xff]
        %v493 = vld [vmem:[%s316 + $0x158] sm:$0xff]
        %v494 = vld [vmem:[%s316 + $0x160] sm:$0xff]
        %v495 = vld [vmem:[%s316 + $0x168] sm:$0xff]
        %v496 = vld [vmem:[%s316 + $0x170] sm:$0xff]
        %v497 = vld [vmem:[%s316 + $0x178] sm:$0xff]
        %v498 = vld [vmem:[%s316 + $0x180] sm:$0xff]
        %v499 = vld [vmem:[%s316 + $0x188] sm:$0xff]
        %v500 = vld [vmem:[%s316 + $0x190] sm:$0xff]
        %v501 = vld [vmem:[%s316 + $0x198] sm:$0xff]
        %v502 = vld [vmem:[%s316 + $0x1a0] sm:$0xff]
        %v503 = vld [vmem:[%s316 + $0x1a8] sm:$0xff]
        %v504 = vld [vmem:[%s316 + $0x1b0] sm:$0xff]
        %v505 = vld [vmem:[%s316 + $0x1b8] sm:$0xff]
        %v506 = vld [vmem:[%s316 + $0x1c0] sm:$0xff]
        %v507 = vld [vmem:[%s316 + $0x1c8] sm:$0xff]
        %v508 = vld [vmem:[%s316 + $0x1d0] sm:$0xff]
        %v509 = vld [vmem:[%s316 + $0x1d8] sm:$0xff]
        %v510 = vld [vmem:[%s316 + $0x1e0] sm:$0xff]
        %v511 = vld [vmem:[%s316 + $0x1e8] sm:$0xff]
        %v512 = vld [vmem:[%s316 + $0x1f0] sm:$0xff]
        %v513 = vld [vmem:[%s316 + $0x1f8] sm:$0xff]
        %v514 = vld [vmem:[%s316 + $0x200] sm:$0xff]
        %v515 = vld [vmem:[%s316 + $0x208] sm:$0xff]
        %v516 = vld [vmem:[%s316 + $0x210] sm:$0xff]
        %v517 = vld [vmem:[%s316 + $0x218] sm:$0xff]
        %v518 = vld [vmem:[%s316 + $0x220] sm:$0xff]
        %v519 = vld [vmem:[%s316 + $0x228] sm:$0xff]
        %v520 = vld [vmem:[%s316 + $0x230] sm:$0xff]
        %v521 = vld [vmem:[%s316 + $0x238] sm:$0xff]
        %v522 = vld [vmem:[%s316 + $0x240] sm:$0xff]
        %v523 = vld [vmem:[%s316 + $0x248] sm:$0xff]
        %v524 = vld [vmem:[%s316 + $0x250] sm:$0xff]
        %v525 = vld [vmem:[%s316 + $0x258] sm:$0xff]
        %v526 = vld [vmem:[%s316 + $0x260] sm:$0xff]
        %v527 = vld [vmem:[%s316 + $0x268] sm:$0xff]
        %v528 = vld [vmem:[%s316 + $0x270] sm:$0xff]
        %v529 = vld [vmem:[%s316 + $0x278] sm:$0xff]
        %v530 = vld [vmem:[%s316 + $0x280] sm:$0xff]
        %v531 = vld [vmem:[%s316 + $0x288] sm:$0xff]
        %v532 = vld [vmem:[%s316 + $0x290] sm:$0xff]
        %v533 = vld [vmem:[%s316 + $0x298] sm:$0xff]
        %v534 = vld [vmem:[%s316 + $0x2a0] sm:$0xff]
        %v535 = vld [vmem:[%s316 + $0x2a8] sm:$0xff]
        %v536 = vld [vmem:[%s316 + $0x2b0] sm:$0xff]
        %v537 = vld [vmem:[%s316 + $0x2b8] sm:$0xff]
        %v538 = vld [vmem:[%s316 + $0x2c0] sm:$0xff]
        %v539 = vld [vmem:[%s316 + $0x2c8] sm:$0xff]
        %v540 = vld [vmem:[%s316 + $0x2d0] sm:$0xff]
        %v541 = vld [vmem:[%s316 + $0x2d8] sm:$0xff]
        %v542 = vld [vmem:[%s316 + $0x2e0] sm:$0xff]
        %v543 = vld [vmem:[%s316 + $0x2e8] sm:$0xff]
        %v544 = vld [vmem:[%s316 + $0x2f0] sm:$0xff]
        %v545 = vld [vmem:[%s316 + $0x2f8] sm:$0xff]
        %v546 = vld [vmem:[%s316 + $0x300] sm:$0xff]
        %v547 = vld [vmem:[%s316 + $0x308] sm:$0xff]
        %v548 = vld [vmem:[%s316 + $0x310] sm:$0xff]
        %v549 = vld [vmem:[%s316 + $0x318] sm:$0xff]
        %v550 = vld [vmem:[%s316 + $0x320] sm:$0xff]
        %v551 = vld [vmem:[%s316 + $0x328] sm:$0xff]
        %v552 = vld [vmem:[%s316 + $0x330] sm:$0xff]
        %v553 = vld [vmem:[%s316 + $0x338] sm:$0xff]
        %v554 = vld [vmem:[%s316 + $0x340] sm:$0xff]
        %v555 = vld [vmem:[%s316 + $0x348] sm:$0xff]
        %v556 = vld [vmem:[%s316 + $0x350] sm:$0xff]
        %v557 = vld [vmem:[%s316 + $0x358] sm:$0xff]
        %v558 = vld [vmem:[%s316 + $0x360] sm:$0xff]
        %v559 = vld [vmem:[%s316 + $0x368] sm:$0xff]
        %v560 = vld [vmem:[%s316 + $0x370] sm:$0xff]
        %v561 = vld [vmem:[%s316 + $0x378] sm:$0xff]
        %v562 = vld [vmem:[%s316 + $0x380] sm:$0xff]
        %v563 = vld [vmem:[%s316 + $0x388] sm:$0xff]
        %v564 = vld [vmem:[%s316 + $0x390] sm:$0xff]
        %v565 = vld [vmem:[%s316 + $0x398] sm:$0xff]
        %v566 = vld [vmem:[%s316 + $0x3a0] sm:$0xff]
        %v567 = vld [vmem:[%s316 + $0x3a8] sm:$0xff]
        %v568 = vld [vmem:[%s316 + $0x3b0] sm:$0xff]
        %v569 = vld [vmem:[%s316 + $0x3b8] sm:$0xff]
        %v570 = vld [vmem:[%s316 + $0x3c0] sm:$0xff]
        %v571 = vld [vmem:[%s316 + $0x3c8] sm:$0xff]
        %v572 = vld [vmem:[%s316 + $0x3d0] sm:$0xff]
        %v573 = vld [vmem:[%s316 + $0x3d8] sm:$0xff]
        %v574 = vld [vmem:[%s316 + $0x3e0] sm:$0xff]
        %v575 = vld [vmem:[%s316 + $0x3e8] sm:$0xff]
        %v576 = vld [vmem:[%s316 + $0x3f0] sm:$0xff]
        %v577 = vld [vmem:[%s316 + $0x3f8] sm:$0xff]
        %v578 = vld [vmem:[%s316 + $0x400] sm:$0xff]
        %v579 = vld [vmem:[%s316 + $0x408] sm:$0xff]
        %v580 = vld [vmem:[%s316 + $0x410] sm:$0xff]
        %v581 = vld [vmem:[%s316 + $0x418] sm:$0xff]
        %v582 = vld [vmem:[%s316 + $0x420] sm:$0xff]
        %v583 = vld [vmem:[%s316 + $0x428] sm:$0xff]
        %v584 = vld [vmem:[%s316 + $0x430] sm:$0xff]
        %v585 = vld [vmem:[%s316 + $0x438] sm:$0xff]
        %v586 = vld [vmem:[%s316 + $0x440] sm:$0xff]
        %v587 = vld [vmem:[%s316 + $0x448] sm:$0xff]
        %v588 = vld [vmem:[%s316 + $0x450] sm:$0xff]
        %v589 = vld [vmem:[%s316 + $0x458] sm:$0xff]
        %v590 = vld [vmem:[%s316 + $0x460] sm:$0xff]
        %v591 = vld [vmem:[%s316 + $0x468] sm:$0xff]
        %v592 = vld [vmem:[%s316 + $0x470] sm:$0xff]
        %v593 = vld [vmem:[%s316 + $0x478] sm:$0xff]
        %v594 = vld [vmem:[%s316 + $0x480] sm:$0xff]
        %v595 = vld [vmem:[%s316 + $0x488] sm:$0xff]
        %v596 = vld [vmem:[%s316 + $0x490] sm:$0xff]
        %v597 = vld [vmem:[%s316 + $0x498] sm:$0xff]
        %v598 = vld [vmem:[%s316 + $0x4a0] sm:$0xff]
        %v599 = vld [vmem:[%s316 + $0x4a8] sm:$0xff]
        %v600 = vld [vmem:[%s316 + $0x4b0] sm:$0xff]
        %v601 = vld [vmem:[%s316 + $0x4b8] sm:$0xff]
        %v602 = vld [vmem:[%s316 + $0x4c0] sm:$0xff]
        %v603 = vld [vmem:[%s316 + $0x4c8] sm:$0xff]
        %v604 = vld [vmem:[%s316 + $0x4d0] sm:$0xff]
        %v605 = vld [vmem:[%s316 + $0x4d8] sm:$0xff]
        %v606 = vld [vmem:[%s316 + $0x4e0] sm:$0xff]
        %v607 = vld [vmem:[%s316 + $0x4e8] sm:$0xff]
        %v608 = vld [vmem:[%s316 + $0x4f0] sm:$0xff]
        %v609 = vld [vmem:[%s316 + $0x4f8] sm:$0xff]
        %v610 = vld [vmem:[%s316 + $0x500] sm:$0xff]
        %v611 = vld [vmem:[%s316 + $0x508] sm:$0xff]
        %v612 = vld [vmem:[%s316 + $0x510] sm:$0xff]
        %v613 = vld [vmem:[%s316 + $0x518] sm:$0xff]
        %v614 = vld [vmem:[%s316 + $0x520] sm:$0xff]
        %v615 = vld [vmem:[%s316 + $0x528] sm:$0xff]
        %v616 = vld [vmem:[%s316 + $0x530] sm:$0xff]
        %v617 = vld [vmem:[%s316 + $0x538] sm:$0xff]
        %v618 = vld [vmem:[%s316 + $0x540] sm:$0xff]
        %v619 = vld [vmem:[%s316 + $0x548] sm:$0xff]
        %v620 = vld [vmem:[%s316 + $0x550] sm:$0xff]
        %v621 = vld [vmem:[%s316 + $0x558] sm:$0xff]
        %v622 = vld [vmem:[%s316 + $0x560] sm:$0xff]
        %v623 = vld [vmem:[%s316 + $0x568] sm:$0xff]
        %v624 = vld [vmem:[%s316 + $0x570] sm:$0xff]
        %v625 = vld [vmem:[%s316 + $0x578] sm:$0xff]
        %v626 = vld [vmem:[%s316 + $0x580] sm:$0xff]
        %v627 = vld [vmem:[%s316 + $0x588] sm:$0xff]
        %v628 = vld [vmem:[%s316 + $0x590] sm:$0xff]
        %v629 = vld [vmem:[%s316 + $0x598] sm:$0xff]
        %v630 = vld [vmem:[%s316 + $0x5a0] sm:$0xff]
        %v631 = vld [vmem:[%s316 + $0x5a8] sm:$0xff]
        %v632 = vld [vmem:[%s316 + $0x5b0] sm:$0xff]
        %v633 = vld [vmem:[%s316 + $0x5b8] sm:$0xff]
        %v634 = vld [vmem:[%s316 + $0x5c0] sm:$0xff]
        %v635 = vld [vmem:[%s316 + $0x5c8] sm:$0xff]
        %v636 = vld [vmem:[%s316 + $0x5d0] sm:$0xff]
        %v637 = vld [vmem:[%s316 + $0x5d8] sm:$0xff]
        %v638 = vld [vmem:[%s316 + $0x5e0] sm:$0xff]
        %v639 = vld [vmem:[%s316 + $0x5e8] sm:$0xff]
        %v640 = vld [vmem:[%s316 + $0x5f0] sm:$0xff]
        %v641 = vld [vmem:[%s316 + $0x5f8] sm:$0xff]
        %v642 = vld [vmem:[%s316 + $0x600] sm:$0xff]
        %v643 = vld [vmem:[%s316 + $0x608] sm:$0xff]
        %v644 = vld [vmem:[%s316 + $0x610] sm:$0xff]
        %v645 = vld [vmem:[%s316 + $0x618] sm:$0xff]
        %v646 = vld [vmem:[%s316 + $0x620] sm:$0xff]
        %v647 = vld [vmem:[%s316 + $0x628] sm:$0xff]
        %v648 = vld [vmem:[%s316 + $0x630] sm:$0xff]
        %v649 = vld [vmem:[%s316 + $0x638] sm:$0xff]
        %v650 = vld [vmem:[%s316 + $0x640] sm:$0xff]
        %v651 = vld [vmem:[%s316 + $0x648] sm:$0xff]
        %v652 = vld [vmem:[%s316 + $0x650] sm:$0xff]
        %v653 = vld [vmem:[%s316 + $0x658] sm:$0xff]
        %v654 = vld [vmem:[%s316 + $0x660] sm:$0xff]
        %v655 = vld [vmem:[%s316 + $0x668] sm:$0xff]
        %v656 = vld [vmem:[%s316 + $0x670] sm:$0xff]
        %v657 = vld [vmem:[%s316 + $0x678] sm:$0xff]
        %v658 = vld [vmem:[%s316 + $0x680] sm:$0xff]
        %v659 = vld [vmem:[%s316 + $0x688] sm:$0xff]
        %v660 = vld [vmem:[%s316 + $0x690] sm:$0xff]
        %v661 = vld [vmem:[%s316 + $0x698] sm:$0xff]
        %v662 = vld [vmem:[%s316 + $0x6a0] sm:$0xff]
        %v663 = vld [vmem:[%s316 + $0x6a8] sm:$0xff]
        %v664 = vld [vmem:[%s316 + $0x6b0] sm:$0xff]
        %v665 = vld [vmem:[%s316 + $0x6b8] sm:$0xff]
        %v666 = vld [vmem:[%s316 + $0x6c0] sm:$0xff]
        %v667 = vld [vmem:[%s316 + $0x6c8] sm:$0xff]
        %v668 = vld [vmem:[%s316 + $0x6d0] sm:$0xff]
        %v669 = vld [vmem:[%s316 + $0x6d8] sm:$0xff]
        %v670 = vld [vmem:[%s316 + $0x6e0] sm:$0xff]
        %v671 = vld [vmem:[%s316 + $0x6e8] sm:$0xff]
        %v672 = vld [vmem:[%s316 + $0x6f0] sm:$0xff]
        %v673 = vld [vmem:[%s316 + $0x6f8] sm:$0xff]
        %v674 = vld [vmem:[%s316 + $0x700] sm:$0xff]
        %v675 = vld [vmem:[%s316 + $0x708] sm:$0xff]
        %v676 = vld [vmem:[%s316 + $0x710] sm:$0xff]
        %v677 = vld [vmem:[%s316 + $0x718] sm:$0xff]
        %v678 = vld [vmem:[%s316 + $0x720] sm:$0xff]
        %v679 = vld [vmem:[%s316 + $0x728] sm:$0xff]
        %v680 = vld [vmem:[%s316 + $0x730] sm:$0xff]
        %v681 = vld [vmem:[%s316 + $0x738] sm:$0xff]
        %v682 = vld [vmem:[%s316 + $0x740] sm:$0xff]
        %v683 = vld [vmem:[%s316 + $0x748] sm:$0xff]
        %v684 = vld [vmem:[%s316 + $0x750] sm:$0xff]
        %v685 = vld [vmem:[%s316 + $0x758] sm:$0xff]
        %v686 = vld [vmem:[%s316 + $0x760] sm:$0xff]
        %v687 = vld [vmem:[%s316 + $0x768] sm:$0xff]
        %v688 = vld [vmem:[%s316 + $0x770] sm:$0xff]
        %v689 = vld [vmem:[%s316 + $0x778] sm:$0xff]
        %v690 = vld [vmem:[%s316 + $0x780] sm:$0xff]
        %v691 = vld [vmem:[%s316 + $0x788] sm:$0xff]
        %v692 = vld [vmem:[%s316 + $0x790] sm:$0xff]
        %v693 = vld [vmem:[%s316 + $0x798] sm:$0xff]
        %v694 = vld [vmem:[%s316 + $0x7a0] sm:$0xff]
        %v695 = vld [vmem:[%s316 + $0x7a8] sm:$0xff]
        %v696 = vld [vmem:[%s316 + $0x7b0] sm:$0xff]
        %v697 = vld [vmem:[%s316 + $0x7b8] sm:$0xff]
        %v698 = vld [vmem:[%s316 + $0x7c0] sm:$0xff]
        %v699 = vld [vmem:[%s316 + $0x7c8] sm:$0xff]
        %v700 = vld [vmem:[%s316 + $0x7d0] sm:$0xff]
        %v701 = vld [vmem:[%s316 + $0x7d8] sm:$0xff]
        %v702 = vld [vmem:[%s316 + $0x7e0] sm:$0xff]
        %v703 = vld [vmem:[%s316 + $0x7e8] sm:$0xff]
        %v704 = vld [vmem:[%s316 + $0x7f0] sm:$0xff]
        %v705 = vld [vmem:[%s316 + $0x7f8] sm:$0xff]
        %v706 = vld [vmem:[%s316 + $0x800] sm:$0xff]
        %v707 = vld [vmem:[%s316 + $0x808] sm:$0xff]
        %v708 = vld [vmem:[%s316 + $0x810] sm:$0xff]
        %v709 = vld [vmem:[%s316 + $0x818] sm:$0xff]
        %v710 = vld [vmem:[%s316 + $0x820] sm:$0xff]
        %v711 = vld [vmem:[%s316 + $0x828] sm:$0xff]
        %v712 = vld [vmem:[%s316 + $0x830] sm:$0xff]
        %v713 = vld [vmem:[%s316 + $0x838] sm:$0xff]
        %v714 = vld [vmem:[%s316 + $0x840] sm:$0xff]
        %v715 = vld [vmem:[%s316 + $0x848] sm:$0xff]
        %v716 = vld [vmem:[%s316 + $0x850] sm:$0xff]
        %v717 = vld [vmem:[%s316 + $0x858] sm:$0xff]
        %v718 = vld [vmem:[%s316 + $0x860] sm:$0xff]
        %v719 = vld [vmem:[%s316 + $0x868] sm:$0xff]
        %v720 = vld [vmem:[%s316 + $0x870] sm:$0xff]
        %v721 = vld [vmem:[%s316 + $0x878] sm:$0xff]
        %v722 = vld [vmem:[%s316 + $0x880] sm:$0xff]
        %v723 = vld [vmem:[%s316 + $0x888] sm:$0xff]
        %v724 = vld [vmem:[%s316 + $0x890] sm:$0xff]
        %v725 = vld [vmem:[%s316 + $0x898] sm:$0xff]
        %v726 = vld [vmem:[%s316 + $0x8a0] sm:$0xff]
        %v727 = vld [vmem:[%s316 + $0x8a8] sm:$0xff]
        %v728 = vld [vmem:[%s316 + $0x8b0] sm:$0xff]
        %v729 = vld [vmem:[%s316 + $0x8b8] sm:$0xff]
        %v730 = vld [vmem:[%s316 + $0x8c0] sm:$0xff]
        %v731 = vld [vmem:[%s316 + $0x8c8] sm:$0xff]
        %v732 = vld [vmem:[%s316 + $0x8d0] sm:$0xff]
        %v733 = vld [vmem:[%s316 + $0x8d8] sm:$0xff]
        %v734 = vld [vmem:[%s316 + $0x8e0] sm:$0xff]
        %v735 = vld [vmem:[%s316 + $0x8e8] sm:$0xff]
        %v736 = vld [vmem:[%s316 + $0x8f0] sm:$0xff]
        %v737 = vld [vmem:[%s316 + $0x8f8] sm:$0xff]
        %v738 = vld [vmem:[%s316 + $0x900] sm:$0xff]
        %v739 = vld [vmem:[%s316 + $0x908] sm:$0xff]
        %v740 = vld [vmem:[%s316 + $0x910] sm:$0xff]
        %v741 = vld [vmem:[%s316 + $0x918] sm:$0xff]
        %v742 = vld [vmem:[%s316 + $0x920] sm:$0xff]
        %v743 = vld [vmem:[%s316 + $0x928] sm:$0xff]
        %v744 = vld [vmem:[%s316 + $0x930] sm:$0xff]
        %v745 = vld [vmem:[%s316 + $0x938] sm:$0xff]
        %v746 = vld [vmem:[%s316 + $0x940] sm:$0xff]
        %v747 = vld [vmem:[%s316 + $0x948] sm:$0xff]
        %v748 = vld [vmem:[%s316 + $0x950] sm:$0xff]
        %v749 = vld [vmem:[%s316 + $0x958] sm:$0xff]
        %v750 = vld [vmem:[%s316 + $0x960] sm:$0xff]
        %v751 = vld [vmem:[%s316 + $0x968] sm:$0xff]
        %v752 = vld [vmem:[%s316 + $0x970] sm:$0xff]
        %v753 = vld [vmem:[%s316 + $0x978] sm:$0xff]
        %v754 = vld [vmem:[%s316 + $0x980] sm:$0xff]
        %v755 = vld [vmem:[%s316 + $0x988] sm:$0xff]
        %v756 = vld [vmem:[%s316 + $0x990] sm:$0xff]
        %v757 = vld [vmem:[%s316 + $0x998] sm:$0xff]
        %v758 = vld [vmem:[%s316 + $0x9a0] sm:$0xff]
        %v759 = vld [vmem:[%s316 + $0x9a8] sm:$0xff]
        %v760 = vld [vmem:[%s316 + $0x9b0] sm:$0xff]
        %v761 = vld [vmem:[%s316 + $0x9b8] sm:$0xff]
        %v762 = vld [vmem:[%s316 + $0x9c0] sm:$0xff]
        %v763 = vld [vmem:[%s316 + $0x9c8] sm:$0xff]
        %v764 = vld [vmem:[%s316 + $0x9d0] sm:$0xff]
        %v765 = vld [vmem:[%s316 + $0x9d8] sm:$0xff]
        %v766 = vld [vmem:[%s316 + $0x9e0] sm:$0xff]
        %v767 = vld [vmem:[%s316 + $0x9e8] sm:$0xff]
        %v768 = vld [vmem:[%s316 + $0x9f0] sm:$0xff]
        %v769 = vld [vmem:[%s316 + $0x9f8] sm:$0xff]
        %v770 = vld [vmem:[%s316 + $0xa00] sm:$0xff]
        %v771 = vld [vmem:[%s316 + $0xa08] sm:$0xff]
        %v772 = vld [vmem:[%s316 + $0xa10] sm:$0xff]
        %v773 = vld [vmem:[%s316 + $0xa18] sm:$0xff]
        %v774 = vld [vmem:[%s316 + $0xa20] sm:$0xff]
        %v775 = vld [vmem:[%s316 + $0xa28] sm:$0xff]
        %v776 = vld [vmem:[%s316 + $0xa30] sm:$0xff]
        %v777 = vld [vmem:[%s316 + $0xa38] sm:$0xff]
        %v778 = vld [vmem:[%s316 + $0xa40] sm:$0xff]
        %v779 = vld [vmem:[%s316 + $0xa48] sm:$0xff]
        %v780 = vld [vmem:[%s316 + $0xa50] sm:$0xff]
        %v781 = vld [vmem:[%s316 + $0xa58] sm:$0xff]
        %v782 = vld [vmem:[%s316 + $0xa60] sm:$0xff]
        %v783 = vld [vmem:[%s316 + $0xa68] sm:$0xff]
        %v784 = vld [vmem:[%s316 + $0xa70] sm:$0xff]
        %v785 = vld [vmem:[%s316 + $0xa78] sm:$0xff]
        %v786 = vld [vmem:[%s316 + $0xa80] sm:$0xff]
        %v787 = vld [vmem:[%s316 + $0xa88] sm:$0xff]
        %v788 = vld [vmem:[%s316 + $0xa90] sm:$0xff]
        %v789 = vld [vmem:[%s316 + $0xa98] sm:$0xff]
        %v790 = vld [vmem:[%s316 + $0xaa0] sm:$0xff]
        %v791 = vld [vmem:[%s316 + $0xaa8] sm:$0xff]
        %v792 = vld [vmem:[%s316 + $0xab0] sm:$0xff]
        %v793 = vld [vmem:[%s316 + $0xab8] sm:$0xff]
        %v794 = vld [vmem:[%s316 + $0xac0] sm:$0xff]
        %v795 = vld [vmem:[%s316 + $0xac8] sm:$0xff]
        %v796 = vld [vmem:[%s316 + $0xad0] sm:$0xff]
        %v797 = vld [vmem:[%s316 + $0xad8] sm:$0xff]
        %v798 = vld [vmem:[%s316 + $0xae0] sm:$0xff]
        %v799 = vld [vmem:[%s316 + $0xae8] sm:$0xff]
        %v800 = vld [vmem:[%s316 + $0xaf0] sm:$0xff]
        %v801 = vld [vmem:[%s316 + $0xaf8] sm:$0xff]
        %v802 = vld [vmem:[%s316 + $0xb00] sm:$0xff]
        %v803 = vld [vmem:[%s316 + $0xb08] sm:$0xff]
        %v804 = vld [vmem:[%s316 + $0xb10] sm:$0xff]
        %v805 = vld [vmem:[%s316 + $0xb18] sm:$0xff]
        %v806 = vld [vmem:[%s316 + $0xb20] sm:$0xff]
        %v807 = vld [vmem:[%s316 + $0xb28] sm:$0xff]
        %v808 = vld [vmem:[%s316 + $0xb30] sm:$0xff]
        %v809 = vld [vmem:[%s316 + $0xb38] sm:$0xff]
        %v810 = vld [vmem:[%s316 + $0xb40] sm:$0xff]
        %v811 = vld [vmem:[%s316 + $0xb48] sm:$0xff]
        %v812 = vld [vmem:[%s316 + $0xb50] sm:$0xff]
        %v813 = vld [vmem:[%s316 + $0xb58] sm:$0xff]
        %v814 = vld [vmem:[%s316 + $0xb60] sm:$0xff]
        %v815 = vld [vmem:[%s316 + $0xb68] sm:$0xff]
        %v816 = vld [vmem:[%s316 + $0xb70] sm:$0xff]
        %v817 = vld [vmem:[%s316 + $0xb78] sm:$0xff]
        %v818 = vld [vmem:[%s316 + $0xb80] sm:$0xff]
        %v819 = vld [vmem:[%s316 + $0xb88] sm:$0xff]
        %v820 = vld [vmem:[%s316 + $0xb90] sm:$0xff]
        %v821 = vld [vmem:[%s316 + $0xb98] sm:$0xff]
        %v822 = vld [vmem:[%s316 + $0xba0] sm:$0xff]
        %v823 = vld [vmem:[%s316 + $0xba8] sm:$0xff]
        %v824 = vld [vmem:[%s316 + $0xbb0] sm:$0xff]
        %v825 = vld [vmem:[%s316 + $0xbb8] sm:$0xff]
        %v826 = vld [vmem:[%s316 + $0xbc0] sm:$0xff]
        %v827 = vld [vmem:[%s316 + $0xbc8] sm:$0xff]
        %v828 = vld [vmem:[%s316 + $0xbd0] sm:$0xff]
        %v829 = vld [vmem:[%s316 + $0xbd8] sm:$0xff]
        %v830 = vld [vmem:[%s316 + $0xbe0] sm:$0xff]
        %v831 = vld [vmem:[%s316 + $0xbe8] sm:$0xff]
        %v832 = vld [vmem:[%s316 + $0xbf0] sm:$0xff]
        %v833 = vld [vmem:[%s316 + $0xbf8] sm:$0xff]
        %v834 = vld [vmem:[%s316 + $0xc00] sm:$0xff]
        %v835 = vld [vmem:[%s316 + $0xc08] sm:$0xff]
        %v836 = vld [vmem:[%s316 + $0xc10] sm:$0xff]
        %v837 = vld [vmem:[%s316 + $0xc18] sm:$0xff]
        %v838 = vld [vmem:[%s316 + $0xc20] sm:$0xff]
        %v839 = vld [vmem:[%s316 + $0xc28] sm:$0xff]
        %v840 = vld [vmem:[%s316 + $0xc30] sm:$0xff]
        %v841 = vld [vmem:[%s316 + $0xc38] sm:$0xff]
        %v842 = vld [vmem:[%s316 + $0xc40] sm:$0xff]
        %v843 = vld [vmem:[%s316 + $0xc48] sm:$0xff]
        %v844 = vld [vmem:[%s316 + $0xc50] sm:$0xff]
        %v845 = vld [vmem:[%s316 + $0xc58] sm:$0xff]
        %v846 = vld [vmem:[%s316 + $0xc60] sm:$0xff]
        %v847 = vld [vmem:[%s316 + $0xc68] sm:$0xff]
        %v848 = vld [vmem:[%s316 + $0xc70] sm:$0xff]
        %v849 = vld [vmem:[%s316 + $0xc78] sm:$0xff]
        %v850 = vld [vmem:[%s316 + $0xc80] sm:$0xff]
        %v851 = vld [vmem:[%s316 + $0xc88] sm:$0xff]
        %v852 = vld [vmem:[%s316 + $0xc90] sm:$0xff]
        %v853 = vld [vmem:[%s316 + $0xc98] sm:$0xff]
        %v854 = vld [vmem:[%s316 + $0xca0] sm:$0xff]
        %v855 = vld [vmem:[%s316 + $0xca8] sm:$0xff]
        %v856 = vld [vmem:[%s316 + $0xcb0] sm:$0xff]
        %v857 = vld [vmem:[%s316 + $0xcb8] sm:$0xff]
        %v858 = vld [vmem:[%s316 + $0xcc0] sm:$0xff]
        %v859 = vld [vmem:[%s316 + $0xcc8] sm:$0xff]
        %v860 = vld [vmem:[%s316 + $0xcd0] sm:$0xff]
        %v861 = vld [vmem:[%s316 + $0xcd8] sm:$0xff]
        %v862 = vld [vmem:[%s316 + $0xce0] sm:$0xff]
        %v863 = vld [vmem:[%s316 + $0xce8] sm:$0xff]
        %v864 = vld [vmem:[%s316 + $0xcf0] sm:$0xff]
        %v865 = vld [vmem:[%s316 + $0xcf8] sm:$0xff]
        %v866 = vld [vmem:[%s316 + $0xd00] sm:$0xff]
        %v867 = vld [vmem:[%s316 + $0xd08] sm:$0xff]
        %v868 = vld [vmem:[%s316 + $0xd10] sm:$0xff]
        %v869 = vld [vmem:[%s316 + $0xd18] sm:$0xff]
        %v870 = vld [vmem:[%s316 + $0xd20] sm:$0xff]
        %v871 = vld [vmem:[%s316 + $0xd28] sm:$0xff]
        %v872 = vld [vmem:[%s316 + $0xd30] sm:$0xff]
        %v873 = vld [vmem:[%s316 + $0xd38] sm:$0xff]
        %v874 = vld [vmem:[%s316 + $0xd40] sm:$0xff]
        %v875 = vld [vmem:[%s316 + $0xd48] sm:$0xff]
        %v876 = vld [vmem:[%s316 + $0xd50] sm:$0xff]
        %v877 = vld [vmem:[%s316 + $0xd58] sm:$0xff]
        %v878 = vld [vmem:[%s316 + $0xd60] sm:$0xff]
        %v879 = vld [vmem:[%s316 + $0xd68] sm:$0xff]
        %v880 = vld [vmem:[%s316 + $0xd70] sm:$0xff]
        %v881 = vld [vmem:[%s316 + $0xd78] sm:$0xff]
        %v882 = vld [vmem:[%s316 + $0xd80] sm:$0xff]
        %v883 = vld [vmem:[%s316 + $0xd88] sm:$0xff]
        %v884 = vld [vmem:[%s316 + $0xd90] sm:$0xff]
        %v885 = vld [vmem:[%s316 + $0xd98] sm:$0xff]
        %v886 = vld [vmem:[%s316 + $0xda0] sm:$0xff]
        %v887 = vld [vmem:[%s316 + $0xda8] sm:$0xff]
        %v888 = vld [vmem:[%s316 + $0xdb0] sm:$0xff]
        %v889 = vld [vmem:[%s316 + $0xdb8] sm:$0xff]
        %v890 = vld [vmem:[%s316 + $0xdc0] sm:$0xff]
        %v891 = vld [vmem:[%s316 + $0xdc8] sm:$0xff]
        %v892 = vld [vmem:[%s316 + $0xdd0] sm:$0xff]
        %v893 = vld [vmem:[%s316 + $0xdd8] sm:$0xff]
        %v894 = vld [vmem:[%s316 + $0xde0] sm:$0xff]
        %v895 = vld [vmem:[%s316 + $0xde8] sm:$0xff]
        %v896 = vld [vmem:[%s316 + $0xdf0] sm:$0xff]
        %v897 = vld [vmem:[%s316 + $0xdf8] sm:$0xff]
        %v898 = vld [vmem:[%s316 + $0xe00] sm:$0xff]
        %v899 = vld [vmem:[%s316 + $0xe08] sm:$0xff]
        %v900 = vld [vmem:[%s316 + $0xe10] sm:$0xff]
        %v901 = vld [vmem:[%s316 + $0xe18] sm:$0xff]
        %v902 = vld [vmem:[%s316 + $0xe20] sm:$0xff]
        %v903 = vld [vmem:[%s316 + $0xe28] sm:$0xff]
        %v904 = vld [vmem:[%s316 + $0xe30] sm:$0xff]
        %v905 = vld [vmem:[%s316 + $0xe38] sm:$0xff]
        %v906 = vld [vmem:[%s316 + $0xe40] sm:$0xff]
        %v907 = vld [vmem:[%s316 + $0xe48] sm:$0xff]
        %v908 = vld [vmem:[%s316 + $0xe50] sm:$0xff]
        %v909 = vld [vmem:[%s316 + $0xe58] sm:$0xff]
        %v910 = vld [vmem:[%s316 + $0xe60] sm:$0xff]
        %v911 = vld [vmem:[%s316 + $0xe68] sm:$0xff]
        %v912 = vld [vmem:[%s316 + $0xe70] sm:$0xff]
        %v913 = vld [vmem:[%s316 + $0xe78] sm:$0xff]
        %v914 = vld [vmem:[%s316 + $0xe80] sm:$0xff]
        %v915 = vld [vmem:[%s316 + $0xe88] sm:$0xff]
        %v916 = vld [vmem:[%s316 + $0xe90] sm:$0xff]
        %v917 = vld [vmem:[%s316 + $0xe98] sm:$0xff]
        %v918 = vld [vmem:[%s316 + $0xea0] sm:$0xff]
        %v919 = vld [vmem:[%s316 + $0xea8] sm:$0xff]
        %v920 = vld [vmem:[%s316 + $0xeb0] sm:$0xff]
        %v921 = vld [vmem:[%s316 + $0xeb8] sm:$0xff]
        %v922 = vld [vmem:[%s316 + $0xec0] sm:$0xff]
        %v923 = vld [vmem:[%s316 + $0xec8] sm:$0xff]
        %v924 = vld [vmem:[%s316 + $0xed0] sm:$0xff]
        %v925 = vld [vmem:[%s316 + $0xed8] sm:$0xff]
        %v926 = vld [vmem:[%s316 + $0xee0] sm:$0xff]
        %v927 = vld [vmem:[%s316 + $0xee8] sm:$0xff]
        %v928 = vld [vmem:[%s316 + $0xef0] sm:$0xff]
        %v929 = vld [vmem:[%s316 + $0xef8] sm:$0xff]
        %v930 = vld [vmem:[%s316 + $0xf00] sm:$0xff]
        %v931 = vld [vmem:[%s316 + $0xf08] sm:$0xff]
        %v932 = vld [vmem:[%s316 + $0xf10] sm:$0xff]
        %v933 = vld [vmem:[%s316 + $0xf18] sm:$0xff]
        %v934 = vld [vmem:[%s316 + $0xf20] sm:$0xff]
        %v935 = vld [vmem:[%s316 + $0xf28] sm:$0xff]
        %v936 = vld [vmem:[%s316 + $0xf30] sm:$0xff]
        %v937 = vld [vmem:[%s316 + $0xf38] sm:$0xff]
        %v938 = vld [vmem:[%s316 + $0xf40] sm:$0xff]
        %v939 = vld [vmem:[%s316 + $0xf48] sm:$0xff]
        %v940 = vld [vmem:[%s316 + $0xf50] sm:$0xff]
        %v941 = vld [vmem:[%s316 + $0xf58] sm:$0xff]
        %v942 = vld [vmem:[%s316 + $0xf60] sm:$0xff]
        %v943 = vld [vmem:[%s316 + $0xf68] sm:$0xff]
        %v944 = vld [vmem:[%s316 + $0xf70] sm:$0xff]
        %v945 = vld [vmem:[%s316 + $0xf78] sm:$0xff]
        %v946 = vld [vmem:[%s316 + $0xf80] sm:$0xff]
        %v947 = vld [vmem:[%s316 + $0xf88] sm:$0xff]
        %v948 = vld [vmem:[%s316 + $0xf90] sm:$0xff]
        %v949 = vld [vmem:[%s316 + $0xf98] sm:$0xff]
        %v950 = vld [vmem:[%s316 + $0xfa0] sm:$0xff]
        %v951 = vld [vmem:[%s316 + $0xfa8] sm:$0xff]
        %v952 = vld [vmem:[%s316 + $0xfb0] sm:$0xff]
        %v953 = vld [vmem:[%s316 + $0xfb8] sm:$0xff]
        %v954 = vld [vmem:[%s316 + $0xfc0] sm:$0xff]
        %v955 = vld [vmem:[%s316 + $0xfc8] sm:$0xff]
        %v956 = vld [vmem:[%s316 + $0xfd0] sm:$0xff]
        %v957 = vld [vmem:[%s316 + $0xfd8] sm:$0xff]
        %v958 = vld [vmem:[%s316 + $0xfe0] sm:$0xff]
        %v959 = vld [vmem:[%s316 + $0xfe8] sm:$0xff]
        %v960 = vld [vmem:[%s316 + $0xff0] sm:$0xff]
        %v961 = vld [vmem:[%s316 + $0xff8] sm:$0xff]
        %v1474 = vunpack.c.l.b16 %v450
        %v1475 = vunpack.c.h.b16 %v450
        %v1476 = vunpack.c.l.b16 %v451
        %v1477 = vunpack.c.h.b16 %v451
        %v1478 = vunpack.c.l.b16 %v452
        %v1479 = vunpack.c.h.b16 %v452
        %v1480 = vunpack.c.l.b16 %v453
        %v1481 = vunpack.c.h.b16 %v453
        %v1482 = vunpack.c.l.b16 %v454
        %v1483 = vunpack.c.h.b16 %v454
        %v1484 = vunpack.c.l.b16 %v455
        %v1485 = vunpack.c.h.b16 %v455
        %v1486 = vunpack.c.l.b16 %v456
        %v1487 = vunpack.c.h.b16 %v456
        %v1488 = vunpack.c.l.b16 %v457
        %v1489 = vunpack.c.h.b16 %v457
        %v1490 = vunpack.c.l.b16 %v458
        %v1491 = vunpack.c.h.b16 %v458
        %v1492 = vunpack.c.l.b16 %v459
        %v1493 = vunpack.c.h.b16 %v459
        %v1494 = vunpack.c.l.b16 %v460
        %v1495 = vunpack.c.h.b16 %v460
        %v1496 = vunpack.c.l.b16 %v461
        %v1497 = vunpack.c.h.b16 %v461
        %v1498 = vunpack.c.l.b16 %v462
        %v1499 = vunpack.c.h.b16 %v462
        %v1500 = vunpack.c.l.b16 %v463
        %v1501 = vunpack.c.h.b16 %v463
        %v1502 = vunpack.c.l.b16 %v464
        %v1503 = vunpack.c.h.b16 %v464
        %v1504 = vunpack.c.l.b16 %v465
        %v1505 = vunpack.c.h.b16 %v465
        %v1506 = vunpack.c.l.b16 %v466
        %v1507 = vunpack.c.h.b16 %v466
        %v1508 = vunpack.c.l.b16 %v467
        %v1509 = vunpack.c.h.b16 %v467
        %v1510 = vunpack.c.l.b16 %v468
        %v1511 = vunpack.c.h.b16 %v468
        %v1512 = vunpack.c.l.b16 %v469
        %v1513 = vunpack.c.h.b16 %v469
        %v1514 = vunpack.c.l.b16 %v470
        %v1515 = vunpack.c.h.b16 %v470
        %v1516 = vunpack.c.l.b16 %v471
        %v1517 = vunpack.c.h.b16 %v471
        %v1518 = vunpack.c.l.b16 %v472
        %v1519 = vunpack.c.h.b16 %v472
        %v1520 = vunpack.c.l.b16 %v473
        %v1521 = vunpack.c.h.b16 %v473
        %v1522 = vunpack.c.l.b16 %v474
        %v1523 = vunpack.c.h.b16 %v474
        %v1524 = vunpack.c.l.b16 %v475
        %v1525 = vunpack.c.h.b16 %v475
        %v1526 = vunpack.c.l.b16 %v476
        %v1527 = vunpack.c.h.b16 %v476
        %v1528 = vunpack.c.l.b16 %v477
        %v1529 = vunpack.c.h.b16 %v477
        %v1530 = vunpack.c.l.b16 %v478
        %v1531 = vunpack.c.h.b16 %v478
        %v1532 = vunpack.c.l.b16 %v479
        %v1533 = vunpack.c.h.b16 %v479
        %v1534 = vunpack.c.l.b16 %v480
        %v1535 = vunpack.c.h.b16 %v480
        %v1536 = vunpack.c.l.b16 %v481
        %v1537 = vunpack.c.h.b16 %v481
        %v1538 = vunpack.c.l.b16 %v482
        %v1539 = vunpack.c.h.b16 %v482
        %v1540 = vunpack.c.l.b16 %v483
        %v1541 = vunpack.c.h.b16 %v483
        %v1542 = vunpack.c.l.b16 %v484
        %v1543 = vunpack.c.h.b16 %v484
        %v1544 = vunpack.c.l.b16 %v485
        %v1545 = vunpack.c.h.b16 %v485
        %v1546 = vunpack.c.l.b16 %v486
        %v1547 = vunpack.c.h.b16 %v486
        %v1548 = vunpack.c.l.b16 %v487
        %v1549 = vunpack.c.h.b16 %v487
        %v1550 = vunpack.c.l.b16 %v488
        %v1551 = vunpack.c.h.b16 %v488
        %v1552 = vunpack.c.l.b16 %v489
        %v1553 = vunpack.c.h.b16 %v489
        %v1554 = vunpack.c.l.b16 %v490
        %v1555 = vunpack.c.h.b16 %v490
        %v1556 = vunpack.c.l.b16 %v491
        %v1557 = vunpack.c.h.b16 %v491
        %v1558 = vunpack.c.l.b16 %v492
        %v1559 = vunpack.c.h.b16 %v492
        %v1560 = vunpack.c.l.b16 %v493
        %v1561 = vunpack.c.h.b16 %v493
        %v1562 = vunpack.c.l.b16 %v494
        %v1563 = vunpack.c.h.b16 %v494
        %v1564 = vunpack.c.l.b16 %v495
        %v1565 = vunpack.c.h.b16 %v495
        %v1566 = vunpack.c.l.b16 %v496
        %v1567 = vunpack.c.h.b16 %v496
        %v1568 = vunpack.c.l.b16 %v497
        %v1569 = vunpack.c.h.b16 %v497
        %v1570 = vunpack.c.l.b16 %v498
        %v1571 = vunpack.c.h.b16 %v498
        %v1572 = vunpack.c.l.b16 %v499
        %v1573 = vunpack.c.h.b16 %v499
        %v1574 = vunpack.c.l.b16 %v500
        %v1575 = vunpack.c.h.b16 %v500
        %v1576 = vunpack.c.l.b16 %v501
        %v1577 = vunpack.c.h.b16 %v501
        %v1578 = vunpack.c.l.b16 %v502
        %v1579 = vunpack.c.h.b16 %v502
        %v1580 = vunpack.c.l.b16 %v503
        %v1581 = vunpack.c.h.b16 %v503
        %v1582 = vunpack.c.l.b16 %v504
        %v1583 = vunpack.c.h.b16 %v504
        %v1584 = vunpack.c.l.b16 %v505
        %v1585 = vunpack.c.h.b16 %v505
        %v1586 = vunpack.c.l.b16 %v506
        %v1587 = vunpack.c.h.b16 %v506
        %v1588 = vunpack.c.l.b16 %v507
        %v1589 = vunpack.c.h.b16 %v507
        %v1590 = vunpack.c.l.b16 %v508
        %v1591 = vunpack.c.h.b16 %v508
        %v1592 = vunpack.c.l.b16 %v509
        %v1593 = vunpack.c.h.b16 %v509
        %v1594 = vunpack.c.l.b16 %v510
        %v1595 = vunpack.c.h.b16 %v510
        %v1596 = vunpack.c.l.b16 %v511
        %v1597 = vunpack.c.h.b16 %v511
        %v1598 = vunpack.c.l.b16 %v512
        %v1599 = vunpack.c.h.b16 %v512
        %v1600 = vunpack.c.l.b16 %v513
        %v1601 = vunpack.c.h.b16 %v513
        %v1602 = vunpack.c.l.b16 %v514
        %v1603 = vunpack.c.h.b16 %v514
        %v1604 = vunpack.c.l.b16 %v515
        %v1605 = vunpack.c.h.b16 %v515
        %v1606 = vunpack.c.l.b16 %v516
        %v1607 = vunpack.c.h.b16 %v516
        %v1608 = vunpack.c.l.b16 %v517
        %v1609 = vunpack.c.h.b16 %v517
        %v1610 = vunpack.c.l.b16 %v518
        %v1611 = vunpack.c.h.b16 %v518
        %v1612 = vunpack.c.l.b16 %v519
        %v1613 = vunpack.c.h.b16 %v519
        %v1614 = vunpack.c.l.b16 %v520
        %v1615 = vunpack.c.h.b16 %v520
        %v1616 = vunpack.c.l.b16 %v521
        %v1617 = vunpack.c.h.b16 %v521
        %v1618 = vunpack.c.l.b16 %v522
        %v1619 = vunpack.c.h.b16 %v522
        %v1620 = vunpack.c.l.b16 %v523
        %v1621 = vunpack.c.h.b16 %v523
        %v1622 = vunpack.c.l.b16 %v524
        %v1623 = vunpack.c.h.b16 %v524
        %v1624 = vunpack.c.l.b16 %v525
        %v1625 = vunpack.c.h.b16 %v525
        %v1626 = vunpack.c.l.b16 %v526
        %v1627 = vunpack.c.h.b16 %v526
        %v1628 = vunpack.c.l.b16 %v527
        %v1629 = vunpack.c.h.b16 %v527
        %v1630 = vunpack.c.l.b16 %v528
        %v1631 = vunpack.c.h.b16 %v528
        %v1632 = vunpack.c.l.b16 %v529
        %v1633 = vunpack.c.h.b16 %v529
        %v1634 = vunpack.c.l.b16 %v530
        %v1635 = vunpack.c.h.b16 %v530
        %v1636 = vunpack.c.l.b16 %v531
        %v1637 = vunpack.c.h.b16 %v531
        %v1638 = vunpack.c.l.b16 %v532
        %v1639 = vunpack.c.h.b16 %v532
        %v1640 = vunpack.c.l.b16 %v533
        %v1641 = vunpack.c.h.b16 %v533
        %v1642 = vunpack.c.l.b16 %v534
        %v1643 = vunpack.c.h.b16 %v534
        %v1644 = vunpack.c.l.b16 %v535
        %v1645 = vunpack.c.h.b16 %v535
        %v1646 = vunpack.c.l.b16 %v536
        %v1647 = vunpack.c.h.b16 %v536
        %v1648 = vunpack.c.l.b16 %v537
        %v1649 = vunpack.c.h.b16 %v537
        %v1650 = vunpack.c.l.b16 %v538
        %v1651 = vunpack.c.h.b16 %v538
        %v1652 = vunpack.c.l.b16 %v539
        %v1653 = vunpack.c.h.b16 %v539
        %v1654 = vunpack.c.l.b16 %v540
        %v1655 = vunpack.c.h.b16 %v540
        %v1656 = vunpack.c.l.b16 %v541
        %v1657 = vunpack.c.h.b16 %v541
        %v1658 = vunpack.c.l.b16 %v542
        %v1659 = vunpack.c.h.b16 %v542
        %v1660 = vunpack.c.l.b16 %v543
        %v1661 = vunpack.c.h.b16 %v543
        %v1662 = vunpack.c.l.b16 %v544
        %v1663 = vunpack.c.h.b16 %v544
        %v1664 = vunpack.c.l.b16 %v545
        %v1665 = vunpack.c.h.b16 %v545
        %v1666 = vunpack.c.l.b16 %v546
        %v1667 = vunpack.c.h.b16 %v546
        %v1668 = vunpack.c.l.b16 %v547
        %v1669 = vunpack.c.h.b16 %v547
        %v1670 = vunpack.c.l.b16 %v548
        %v1671 = vunpack.c.h.b16 %v548
        %v1672 = vunpack.c.l.b16 %v549
        %v1673 = vunpack.c.h.b16 %v549
        %v1674 = vunpack.c.l.b16 %v550
        %v1675 = vunpack.c.h.b16 %v550
        %v1676 = vunpack.c.l.b16 %v551
        %v1677 = vunpack.c.h.b16 %v551
        %v1678 = vunpack.c.l.b16 %v552
        %v1679 = vunpack.c.h.b16 %v552
        %v1680 = vunpack.c.l.b16 %v553
        %v1681 = vunpack.c.h.b16 %v553
        %v1682 = vunpack.c.l.b16 %v554
        %v1683 = vunpack.c.h.b16 %v554
        %v1684 = vunpack.c.l.b16 %v555
        %v1685 = vunpack.c.h.b16 %v555
        %v1686 = vunpack.c.l.b16 %v556
        %v1687 = vunpack.c.h.b16 %v556
        %v1688 = vunpack.c.l.b16 %v557
        %v1689 = vunpack.c.h.b16 %v557
        %v1690 = vunpack.c.l.b16 %v558
        %v1691 = vunpack.c.h.b16 %v558
        %v1692 = vunpack.c.l.b16 %v559
        %v1693 = vunpack.c.h.b16 %v559
        %v1694 = vunpack.c.l.b16 %v560
        %v1695 = vunpack.c.h.b16 %v560
        %v1696 = vunpack.c.l.b16 %v561
        %v1697 = vunpack.c.h.b16 %v561
        %v1698 = vunpack.c.l.b16 %v562
        %v1699 = vunpack.c.h.b16 %v562
        %v1700 = vunpack.c.l.b16 %v563
        %v1701 = vunpack.c.h.b16 %v563
        %v1702 = vunpack.c.l.b16 %v564
        %v1703 = vunpack.c.h.b16 %v564
        %v1704 = vunpack.c.l.b16 %v565
        %v1705 = vunpack.c.h.b16 %v565
        %v1706 = vunpack.c.l.b16 %v566
        %v1707 = vunpack.c.h.b16 %v566
        %v1708 = vunpack.c.l.b16 %v567
        %v1709 = vunpack.c.h.b16 %v567
        %v1710 = vunpack.c.l.b16 %v568
        %v1711 = vunpack.c.h.b16 %v568
        %v1712 = vunpack.c.l.b16 %v569
        %v1713 = vunpack.c.h.b16 %v569
        %v1714 = vunpack.c.l.b16 %v570
        %v1715 = vunpack.c.h.b16 %v570
        %v1716 = vunpack.c.l.b16 %v571
        %v1717 = vunpack.c.h.b16 %v571
        %v1718 = vunpack.c.l.b16 %v572
        %v1719 = vunpack.c.h.b16 %v572
        %v1720 = vunpack.c.l.b16 %v573
        %v1721 = vunpack.c.h.b16 %v573
        %v1722 = vunpack.c.l.b16 %v574
        %v1723 = vunpack.c.h.b16 %v574
        %v1724 = vunpack.c.l.b16 %v575
        %v1725 = vunpack.c.h.b16 %v575
        %v1726 = vunpack.c.l.b16 %v576
        %v1727 = vunpack.c.h.b16 %v576
        %v1728 = vunpack.c.l.b16 %v577
        %v1729 = vunpack.c.h.b16 %v577
        %v1730 = vunpack.c.l.b16 %v578
        %v1731 = vunpack.c.h.b16 %v578
        %v1732 = vunpack.c.l.b16 %v579
        %v1733 = vunpack.c.h.b16 %v579
        %v1734 = vunpack.c.l.b16 %v580
        %v1735 = vunpack.c.h.b16 %v580
        %v1736 = vunpack.c.l.b16 %v581
        %v1737 = vunpack.c.h.b16 %v581
        %v1738 = vunpack.c.l.b16 %v582
        %v1739 = vunpack.c.h.b16 %v582
        %v1740 = vunpack.c.l.b16 %v583
        %v1741 = vunpack.c.h.b16 %v583
        %v1742 = vunpack.c.l.b16 %v584
        %v1743 = vunpack.c.h.b16 %v584
        %v1744 = vunpack.c.l.b16 %v585
        %v1745 = vunpack.c.h.b16 %v585
        %v1746 = vunpack.c.l.b16 %v586
        %v1747 = vunpack.c.h.b16 %v586
        %v1748 = vunpack.c.l.b16 %v587
        %v1749 = vunpack.c.h.b16 %v587
        %v1750 = vunpack.c.l.b16 %v588
        %v1751 = vunpack.c.h.b16 %v588
        %v1752 = vunpack.c.l.b16 %v589
        %v1753 = vunpack.c.h.b16 %v589
        %v1754 = vunpack.c.l.b16 %v590
        %v1755 = vunpack.c.h.b16 %v590
        %v1756 = vunpack.c.l.b16 %v591
        %v1757 = vunpack.c.h.b16 %v591
        %v1758 = vunpack.c.l.b16 %v592
        %v1759 = vunpack.c.h.b16 %v592
        %v1760 = vunpack.c.l.b16 %v593
        %v1761 = vunpack.c.h.b16 %v593
        %v1762 = vunpack.c.l.b16 %v594
        %v1763 = vunpack.c.h.b16 %v594
        %v1764 = vunpack.c.l.b16 %v595
        %v1765 = vunpack.c.h.b16 %v595
        %v1766 = vunpack.c.l.b16 %v596
        %v1767 = vunpack.c.h.b16 %v596
        %v1768 = vunpack.c.l.b16 %v597
        %v1769 = vunpack.c.h.b16 %v597
        %v1770 = vunpack.c.l.b16 %v598
        %v1771 = vunpack.c.h.b16 %v598
        %v1772 = vunpack.c.l.b16 %v599
        %v1773 = vunpack.c.h.b16 %v599
        %v1774 = vunpack.c.l.b16 %v600
        %v1775 = vunpack.c.h.b16 %v600
        %v1776 = vunpack.c.l.b16 %v601
        %v1777 = vunpack.c.h.b16 %v601
        %v1778 = vunpack.c.l.b16 %v602
        %v1779 = vunpack.c.h.b16 %v602
        %v1780 = vunpack.c.l.b16 %v603
        %v1781 = vunpack.c.h.b16 %v603
        %v1782 = vunpack.c.l.b16 %v604
        %v1783 = vunpack.c.h.b16 %v604
        %v1784 = vunpack.c.l.b16 %v605
        %v1785 = vunpack.c.h.b16 %v605
        %v1786 = vunpack.c.l.b16 %v606
        %v1787 = vunpack.c.h.b16 %v606
        %v1788 = vunpack.c.l.b16 %v607
        %v1789 = vunpack.c.h.b16 %v607
        %v1790 = vunpack.c.l.b16 %v608
        %v1791 = vunpack.c.h.b16 %v608
        %v1792 = vunpack.c.l.b16 %v609
        %v1793 = vunpack.c.h.b16 %v609
        %v1794 = vunpack.c.l.b16 %v610
        %v1795 = vunpack.c.h.b16 %v610
        %v1796 = vunpack.c.l.b16 %v611
        %v1797 = vunpack.c.h.b16 %v611
        %v1798 = vunpack.c.l.b16 %v612
        %v1799 = vunpack.c.h.b16 %v612
        %v1800 = vunpack.c.l.b16 %v613
        %v1801 = vunpack.c.h.b16 %v613
        %v1802 = vunpack.c.l.b16 %v614
        %v1803 = vunpack.c.h.b16 %v614
        %v1804 = vunpack.c.l.b16 %v615
        %v1805 = vunpack.c.h.b16 %v615
        %v1806 = vunpack.c.l.b16 %v616
        %v1807 = vunpack.c.h.b16 %v616
        %v1808 = vunpack.c.l.b16 %v617
        %v1809 = vunpack.c.h.b16 %v617
        %v1810 = vunpack.c.l.b16 %v618
        %v1811 = vunpack.c.h.b16 %v618
        %v1812 = vunpack.c.l.b16 %v619
        %v1813 = vunpack.c.h.b16 %v619
        %v1814 = vunpack.c.l.b16 %v620
        %v1815 = vunpack.c.h.b16 %v620
        %v1816 = vunpack.c.l.b16 %v621
        %v1817 = vunpack.c.h.b16 %v621
        %v1818 = vunpack.c.l.b16 %v622
        %v1819 = vunpack.c.h.b16 %v622
        %v1820 = vunpack.c.l.b16 %v623
        %v1821 = vunpack.c.h.b16 %v623
        %v1822 = vunpack.c.l.b16 %v624
        %v1823 = vunpack.c.h.b16 %v624
        %v1824 = vunpack.c.l.b16 %v625
        %v1825 = vunpack.c.h.b16 %v625
        %v1826 = vunpack.c.l.b16 %v626
        %v1827 = vunpack.c.h.b16 %v626
        %v1828 = vunpack.c.l.b16 %v627
        %v1829 = vunpack.c.h.b16 %v627
        %v1830 = vunpack.c.l.b16 %v628
        %v1831 = vunpack.c.h.b16 %v628
        %v1832 = vunpack.c.l.b16 %v629
        %v1833 = vunpack.c.h.b16 %v629
        %v1834 = vunpack.c.l.b16 %v630
        %v1835 = vunpack.c.h.b16 %v630
        %v1836 = vunpack.c.l.b16 %v631
        %v1837 = vunpack.c.h.b16 %v631
        %v1838 = vunpack.c.l.b16 %v632
        %v1839 = vunpack.c.h.b16 %v632
        %v1840 = vunpack.c.l.b16 %v633
        %v1841 = vunpack.c.h.b16 %v633
        %v1842 = vunpack.c.l.b16 %v634
        %v1843 = vunpack.c.h.b16 %v634
        %v1844 = vunpack.c.l.b16 %v635
        %v1845 = vunpack.c.h.b16 %v635
        %v1846 = vunpack.c.l.b16 %v636
        %v1847 = vunpack.c.h.b16 %v636
        %v1848 = vunpack.c.l.b16 %v637
        %v1849 = vunpack.c.h.b16 %v637
        %v1850 = vunpack.c.l.b16 %v638
        %v1851 = vunpack.c.h.b16 %v638
        %v1852 = vunpack.c.l.b16 %v639
        %v1853 = vunpack.c.h.b16 %v639
        %v1854 = vunpack.c.l.b16 %v640
        %v1855 = vunpack.c.h.b16 %v640
        %v1856 = vunpack.c.l.b16 %v641
        %v1857 = vunpack.c.h.b16 %v641
        %v1858 = vunpack.c.l.b16 %v642
        %v1859 = vunpack.c.h.b16 %v642
        %v1860 = vunpack.c.l.b16 %v643
        %v1861 = vunpack.c.h.b16 %v643
        %v1862 = vunpack.c.l.b16 %v644
        %v1863 = vunpack.c.h.b16 %v644
        %v1864 = vunpack.c.l.b16 %v645
        %v1865 = vunpack.c.h.b16 %v645
        %v1866 = vunpack.c.l.b16 %v646
        %v1867 = vunpack.c.h.b16 %v646
        %v1868 = vunpack.c.l.b16 %v647
        %v1869 = vunpack.c.h.b16 %v647
        %v1870 = vunpack.c.l.b16 %v648
        %v1871 = vunpack.c.h.b16 %v648
        %v1872 = vunpack.c.l.b16 %v649
        %v1873 = vunpack.c.h.b16 %v649
        %v1874 = vunpack.c.l.b16 %v650
        %v1875 = vunpack.c.h.b16 %v650
        %v1876 = vunpack.c.l.b16 %v651
        %v1877 = vunpack.c.h.b16 %v651
        %v1878 = vunpack.c.l.b16 %v652
        %v1879 = vunpack.c.h.b16 %v652
        %v1880 = vunpack.c.l.b16 %v653
        %v1881 = vunpack.c.h.b16 %v653
        %v1882 = vunpack.c.l.b16 %v654
        %v1883 = vunpack.c.h.b16 %v654
        %v1884 = vunpack.c.l.b16 %v655
        %v1885 = vunpack.c.h.b16 %v655
        %v1886 = vunpack.c.l.b16 %v656
        %v1887 = vunpack.c.h.b16 %v656
        %v1888 = vunpack.c.l.b16 %v657
        %v1889 = vunpack.c.h.b16 %v657
        %v1890 = vunpack.c.l.b16 %v658
        %v1891 = vunpack.c.h.b16 %v658
        %v1892 = vunpack.c.l.b16 %v659
        %v1893 = vunpack.c.h.b16 %v659
        %v1894 = vunpack.c.l.b16 %v660
        %v1895 = vunpack.c.h.b16 %v660
        %v1896 = vunpack.c.l.b16 %v661
        %v1897 = vunpack.c.h.b16 %v661
        %v1898 = vunpack.c.l.b16 %v662
        %v1899 = vunpack.c.h.b16 %v662
        %v1900 = vunpack.c.l.b16 %v663
        %v1901 = vunpack.c.h.b16 %v663
        %v1902 = vunpack.c.l.b16 %v664
        %v1903 = vunpack.c.h.b16 %v664
        %v1904 = vunpack.c.l.b16 %v665
        %v1905 = vunpack.c.h.b16 %v665
        %v1906 = vunpack.c.l.b16 %v666
        %v1907 = vunpack.c.h.b16 %v666
        %v1908 = vunpack.c.l.b16 %v667
        %v1909 = vunpack.c.h.b16 %v667
        %v1910 = vunpack.c.l.b16 %v668
        %v1911 = vunpack.c.h.b16 %v668
        %v1912 = vunpack.c.l.b16 %v669
        %v1913 = vunpack.c.h.b16 %v669
        %v1914 = vunpack.c.l.b16 %v670
        %v1915 = vunpack.c.h.b16 %v670
        %v1916 = vunpack.c.l.b16 %v671
        %v1917 = vunpack.c.h.b16 %v671
        %v1918 = vunpack.c.l.b16 %v672
        %v1919 = vunpack.c.h.b16 %v672
        %v1920 = vunpack.c.l.b16 %v673
        %v1921 = vunpack.c.h.b16 %v673
        %v1922 = vunpack.c.l.b16 %v674
        %v1923 = vunpack.c.h.b16 %v674
        %v1924 = vunpack.c.l.b16 %v675
        %v1925 = vunpack.c.h.b16 %v675
        %v1926 = vunpack.c.l.b16 %v676
        %v1927 = vunpack.c.h.b16 %v676
        %v1928 = vunpack.c.l.b16 %v677
        %v1929 = vunpack.c.h.b16 %v677
        %v1930 = vunpack.c.l.b16 %v678
        %v1931 = vunpack.c.h.b16 %v678
        %v1932 = vunpack.c.l.b16 %v679
        %v1933 = vunpack.c.h.b16 %v679
        %v1934 = vunpack.c.l.b16 %v680
        %v1935 = vunpack.c.h.b16 %v680
        %v1936 = vunpack.c.l.b16 %v681
        %v1937 = vunpack.c.h.b16 %v681
        %v1938 = vunpack.c.l.b16 %v682
        %v1939 = vunpack.c.h.b16 %v682
        %v1940 = vunpack.c.l.b16 %v683
        %v1941 = vunpack.c.h.b16 %v683
        %v1942 = vunpack.c.l.b16 %v684
        %v1943 = vunpack.c.h.b16 %v684
        %v1944 = vunpack.c.l.b16 %v685
        %v1945 = vunpack.c.h.b16 %v685
        %v1946 = vunpack.c.l.b16 %v686
        %v1947 = vunpack.c.h.b16 %v686
        %v1948 = vunpack.c.l.b16 %v687
        %v1949 = vunpack.c.h.b16 %v687
        %v1950 = vunpack.c.l.b16 %v688
        %v1951 = vunpack.c.h.b16 %v688
        %v1952 = vunpack.c.l.b16 %v689
        %v1953 = vunpack.c.h.b16 %v689
        %v1954 = vunpack.c.l.b16 %v690
        %v1955 = vunpack.c.h.b16 %v690
        %v1956 = vunpack.c.l.b16 %v691
        %v1957 = vunpack.c.h.b16 %v691
        %v1958 = vunpack.c.l.b16 %v692
        %v1959 = vunpack.c.h.b16 %v692
        %v1960 = vunpack.c.l.b16 %v693
        %v1961 = vunpack.c.h.b16 %v693
        %v1962 = vunpack.c.l.b16 %v694
        %v1963 = vunpack.c.h.b16 %v694
        %v1964 = vunpack.c.l.b16 %v695
        %v1965 = vunpack.c.h.b16 %v695
        %v1966 = vunpack.c.l.b16 %v696
        %v1967 = vunpack.c.h.b16 %v696
        %v1968 = vunpack.c.l.b16 %v697
        %v1969 = vunpack.c.h.b16 %v697
        %v1970 = vunpack.c.l.b16 %v698
        %v1971 = vunpack.c.h.b16 %v698
        %v1972 = vunpack.c.l.b16 %v699
        %v1973 = vunpack.c.h.b16 %v699
        %v1974 = vunpack.c.l.b16 %v700
        %v1975 = vunpack.c.h.b16 %v700
        %v1976 = vunpack.c.l.b16 %v701
        %v1977 = vunpack.c.h.b16 %v701
        %v1978 = vunpack.c.l.b16 %v702
        %v1979 = vunpack.c.h.b16 %v702
        %v1980 = vunpack.c.l.b16 %v703
        %v1981 = vunpack.c.h.b16 %v703
        %v1982 = vunpack.c.l.b16 %v704
        %v1983 = vunpack.c.h.b16 %v704
        %v1984 = vunpack.c.l.b16 %v705
        %v1985 = vunpack.c.h.b16 %v705
        %v1986 = vunpack.c.l.b16 %v706
        %v1987 = vunpack.c.h.b16 %v706
        %v1988 = vunpack.c.l.b16 %v707
        %v1989 = vunpack.c.h.b16 %v707
        %v1990 = vunpack.c.l.b16 %v708
        %v1991 = vunpack.c.h.b16 %v708
        %v1992 = vunpack.c.l.b16 %v709
        %v1993 = vunpack.c.h.b16 %v709
        %v1994 = vunpack.c.l.b16 %v710
        %v1995 = vunpack.c.h.b16 %v710
        %v1996 = vunpack.c.l.b16 %v711
        %v1997 = vunpack.c.h.b16 %v711
        %v1998 = vunpack.c.l.b16 %v712
        %v1999 = vunpack.c.h.b16 %v712
        %v2000 = vunpack.c.l.b16 %v713
        %v2001 = vunpack.c.h.b16 %v713
        %v2002 = vunpack.c.l.b16 %v714
        %v2003 = vunpack.c.h.b16 %v714
        %v2004 = vunpack.c.l.b16 %v715
        %v2005 = vunpack.c.h.b16 %v715
        %v2006 = vunpack.c.l.b16 %v716
        %v2007 = vunpack.c.h.b16 %v716
        %v2008 = vunpack.c.l.b16 %v717
        %v2009 = vunpack.c.h.b16 %v717
        %v2010 = vunpack.c.l.b16 %v718
        %v2011 = vunpack.c.h.b16 %v718
        %v2012 = vunpack.c.l.b16 %v719
        %v2013 = vunpack.c.h.b16 %v719
        %v2014 = vunpack.c.l.b16 %v720
        %v2015 = vunpack.c.h.b16 %v720
        %v2016 = vunpack.c.l.b16 %v721
        %v2017 = vunpack.c.h.b16 %v721
        %v2018 = vunpack.c.l.b16 %v722
        %v2019 = vunpack.c.h.b16 %v722
        %v2020 = vunpack.c.l.b16 %v723
        %v2021 = vunpack.c.h.b16 %v723
        %v2022 = vunpack.c.l.b16 %v724
        %v2023 = vunpack.c.h.b16 %v724
        %v2024 = vunpack.c.l.b16 %v725
        %v2025 = vunpack.c.h.b16 %v725
        %v2026 = vunpack.c.l.b16 %v726
        %v2027 = vunpack.c.h.b16 %v726
        %v2028 = vunpack.c.l.b16 %v727
        %v2029 = vunpack.c.h.b16 %v727
        %v2030 = vunpack.c.l.b16 %v728
        %v2031 = vunpack.c.h.b16 %v728
        %v2032 = vunpack.c.l.b16 %v729
        %v2033 = vunpack.c.h.b16 %v729
        %v2034 = vunpack.c.l.b16 %v730
        %v2035 = vunpack.c.h.b16 %v730
        %v2036 = vunpack.c.l.b16 %v731
        %v2037 = vunpack.c.h.b16 %v731
        %v2038 = vunpack.c.l.b16 %v732
        %v2039 = vunpack.c.h.b16 %v732
        %v2040 = vunpack.c.l.b16 %v733
        %v2041 = vunpack.c.h.b16 %v733
        %v2042 = vunpack.c.l.b16 %v734
        %v2043 = vunpack.c.h.b16 %v734
        %v2044 = vunpack.c.l.b16 %v735
        %v2045 = vunpack.c.h.b16 %v735
        %v2046 = vunpack.c.l.b16 %v736
        %v2047 = vunpack.c.h.b16 %v736
        %v2048 = vunpack.c.l.b16 %v737
        %v2049 = vunpack.c.h.b16 %v737
        %v2050 = vunpack.c.l.b16 %v738
        %v2051 = vunpack.c.h.b16 %v738
        %v2052 = vunpack.c.l.b16 %v739
        %v2053 = vunpack.c.h.b16 %v739
        %v2054 = vunpack.c.l.b16 %v740
        %v2055 = vunpack.c.h.b16 %v740
        %v2056 = vunpack.c.l.b16 %v741
        %v2057 = vunpack.c.h.b16 %v741
        %v2058 = vunpack.c.l.b16 %v742
        %v2059 = vunpack.c.h.b16 %v742
        %v2060 = vunpack.c.l.b16 %v743
        %v2061 = vunpack.c.h.b16 %v743
        %v2062 = vunpack.c.l.b16 %v744
        %v2063 = vunpack.c.h.b16 %v744
        %v2064 = vunpack.c.l.b16 %v745
        %v2065 = vunpack.c.h.b16 %v745
        %v2066 = vunpack.c.l.b16 %v746
        %v2067 = vunpack.c.h.b16 %v746
        %v2068 = vunpack.c.l.b16 %v747
        %v2069 = vunpack.c.h.b16 %v747
        %v2070 = vunpack.c.l.b16 %v748
        %v2071 = vunpack.c.h.b16 %v748
        %v2072 = vunpack.c.l.b16 %v749
        %v2073 = vunpack.c.h.b16 %v749
        %v2074 = vunpack.c.l.b16 %v750
        %v2075 = vunpack.c.h.b16 %v750
        %v2076 = vunpack.c.l.b16 %v751
        %v2077 = vunpack.c.h.b16 %v751
        %v2078 = vunpack.c.l.b16 %v752
        %v2079 = vunpack.c.h.b16 %v752
        %v2080 = vunpack.c.l.b16 %v753
        %v2081 = vunpack.c.h.b16 %v753
        %v2082 = vunpack.c.l.b16 %v754
        %v2083 = vunpack.c.h.b16 %v754
        %v2084 = vunpack.c.l.b16 %v755
        %v2085 = vunpack.c.h.b16 %v755
        %v2086 = vunpack.c.l.b16 %v756
        %v2087 = vunpack.c.h.b16 %v756
        %v2088 = vunpack.c.l.b16 %v757
        %v2089 = vunpack.c.h.b16 %v757
        %v2090 = vunpack.c.l.b16 %v758
        %v2091 = vunpack.c.h.b16 %v758
        %v2092 = vunpack.c.l.b16 %v759
        %v2093 = vunpack.c.h.b16 %v759
        %v2094 = vunpack.c.l.b16 %v760
        %v2095 = vunpack.c.h.b16 %v760
        %v2096 = vunpack.c.l.b16 %v761
        %v2097 = vunpack.c.h.b16 %v761
        %v2098 = vunpack.c.l.b16 %v762
        %v2099 = vunpack.c.h.b16 %v762
        %v2100 = vunpack.c.l.b16 %v763
        %v2101 = vunpack.c.h.b16 %v763
        %v2102 = vunpack.c.l.b16 %v764
        %v2103 = vunpack.c.h.b16 %v764
        %v2104 = vunpack.c.l.b16 %v765
        %v2105 = vunpack.c.h.b16 %v765
        %v2106 = vunpack.c.l.b16 %v766
        %v2107 = vunpack.c.h.b16 %v766
        %v2108 = vunpack.c.l.b16 %v767
        %v2109 = vunpack.c.h.b16 %v767
        %v2110 = vunpack.c.l.b16 %v768
        %v2111 = vunpack.c.h.b16 %v768
        %v2112 = vunpack.c.l.b16 %v769
        %v2113 = vunpack.c.h.b16 %v769
        %v2114 = vunpack.c.l.b16 %v770
        %v2115 = vunpack.c.h.b16 %v770
        %v2116 = vunpack.c.l.b16 %v771
        %v2117 = vunpack.c.h.b16 %v771
        %v2118 = vunpack.c.l.b16 %v772
        %v2119 = vunpack.c.h.b16 %v772
        %v2120 = vunpack.c.l.b16 %v773
        %v2121 = vunpack.c.h.b16 %v773
        %v2122 = vunpack.c.l.b16 %v774
        %v2123 = vunpack.c.h.b16 %v774
        %v2124 = vunpack.c.l.b16 %v775
        %v2125 = vunpack.c.h.b16 %v775
        %v2126 = vunpack.c.l.b16 %v776
        %v2127 = vunpack.c.h.b16 %v776
        %v2128 = vunpack.c.l.b16 %v777
        %v2129 = vunpack.c.h.b16 %v777
        %v2130 = vunpack.c.l.b16 %v778
        %v2131 = vunpack.c.h.b16 %v778
        %v2132 = vunpack.c.l.b16 %v779
        %v2133 = vunpack.c.h.b16 %v779
        %v2134 = vunpack.c.l.b16 %v780
        %v2135 = vunpack.c.h.b16 %v780
        %v2136 = vunpack.c.l.b16 %v781
        %v2137 = vunpack.c.h.b16 %v781
        %v2138 = vunpack.c.l.b16 %v782
        %v2139 = vunpack.c.h.b16 %v782
        %v2140 = vunpack.c.l.b16 %v783
        %v2141 = vunpack.c.h.b16 %v783
        %v2142 = vunpack.c.l.b16 %v784
        %v2143 = vunpack.c.h.b16 %v784
        %v2144 = vunpack.c.l.b16 %v785
        %v2145 = vunpack.c.h.b16 %v785
        %v2146 = vunpack.c.l.b16 %v786
        %v2147 = vunpack.c.h.b16 %v786
        %v2148 = vunpack.c.l.b16 %v787
        %v2149 = vunpack.c.h.b16 %v787
        %v2150 = vunpack.c.l.b16 %v788
        %v2151 = vunpack.c.h.b16 %v788
        %v2152 = vunpack.c.l.b16 %v789
        %v2153 = vunpack.c.h.b16 %v789
        %v2154 = vunpack.c.l.b16 %v790
        %v2155 = vunpack.c.h.b16 %v790
        %v2156 = vunpack.c.l.b16 %v791
        %v2157 = vunpack.c.h.b16 %v791
        %v2158 = vunpack.c.l.b16 %v792
        %v2159 = vunpack.c.h.b16 %v792
        %v2160 = vunpack.c.l.b16 %v793
        %v2161 = vunpack.c.h.b16 %v793
        %v2162 = vunpack.c.l.b16 %v794
        %v2163 = vunpack.c.h.b16 %v794
        %v2164 = vunpack.c.l.b16 %v795
        %v2165 = vunpack.c.h.b16 %v795
        %v2166 = vunpack.c.l.b16 %v796
        %v2167 = vunpack.c.h.b16 %v796
        %v2168 = vunpack.c.l.b16 %v797
        %v2169 = vunpack.c.h.b16 %v797
        %v2170 = vunpack.c.l.b16 %v798
        %v2171 = vunpack.c.h.b16 %v798
        %v2172 = vunpack.c.l.b16 %v799
        %v2173 = vunpack.c.h.b16 %v799
        %v2174 = vunpack.c.l.b16 %v800
        %v2175 = vunpack.c.h.b16 %v800
        %v2176 = vunpack.c.l.b16 %v801
        %v2177 = vunpack.c.h.b16 %v801
        %v2178 = vunpack.c.l.b16 %v802
        %v2179 = vunpack.c.h.b16 %v802
        %v2180 = vunpack.c.l.b16 %v803
        %v2181 = vunpack.c.h.b16 %v803
        %v2182 = vunpack.c.l.b16 %v804
        %v2183 = vunpack.c.h.b16 %v804
        %v2184 = vunpack.c.l.b16 %v805
        %v2185 = vunpack.c.h.b16 %v805
        %v2186 = vunpack.c.l.b16 %v806
        %v2187 = vunpack.c.h.b16 %v806
        %v2188 = vunpack.c.l.b16 %v807
        %v2189 = vunpack.c.h.b16 %v807
        %v2190 = vunpack.c.l.b16 %v808
        %v2191 = vunpack.c.h.b16 %v808
        %v2192 = vunpack.c.l.b16 %v809
        %v2193 = vunpack.c.h.b16 %v809
        %v2194 = vunpack.c.l.b16 %v810
        %v2195 = vunpack.c.h.b16 %v810
        %v2196 = vunpack.c.l.b16 %v811
        %v2197 = vunpack.c.h.b16 %v811
        %v2198 = vunpack.c.l.b16 %v812
        %v2199 = vunpack.c.h.b16 %v812
        %v2200 = vunpack.c.l.b16 %v813
        %v2201 = vunpack.c.h.b16 %v813
        %v2202 = vunpack.c.l.b16 %v814
        %v2203 = vunpack.c.h.b16 %v814
        %v2204 = vunpack.c.l.b16 %v815
        %v2205 = vunpack.c.h.b16 %v815
        %v2206 = vunpack.c.l.b16 %v816
        %v2207 = vunpack.c.h.b16 %v816
        %v2208 = vunpack.c.l.b16 %v817
        %v2209 = vunpack.c.h.b16 %v817
        %v2210 = vunpack.c.l.b16 %v818
        %v2211 = vunpack.c.h.b16 %v818
        %v2212 = vunpack.c.l.b16 %v819
        %v2213 = vunpack.c.h.b16 %v819
        %v2214 = vunpack.c.l.b16 %v820
        %v2215 = vunpack.c.h.b16 %v820
        %v2216 = vunpack.c.l.b16 %v821
        %v2217 = vunpack.c.h.b16 %v821
        %v2218 = vunpack.c.l.b16 %v822
        %v2219 = vunpack.c.h.b16 %v822
        %v2220 = vunpack.c.l.b16 %v823
        %v2221 = vunpack.c.h.b16 %v823
        %v2222 = vunpack.c.l.b16 %v824
        %v2223 = vunpack.c.h.b16 %v824
        %v2224 = vunpack.c.l.b16 %v825
        %v2225 = vunpack.c.h.b16 %v825
        %v2226 = vunpack.c.l.b16 %v826
        %v2227 = vunpack.c.h.b16 %v826
        %v2228 = vunpack.c.l.b16 %v827
        %v2229 = vunpack.c.h.b16 %v827
        %v2230 = vunpack.c.l.b16 %v828
        %v2231 = vunpack.c.h.b16 %v828
        %v2232 = vunpack.c.l.b16 %v829
        %v2233 = vunpack.c.h.b16 %v829
        %v2234 = vunpack.c.l.b16 %v830
        %v2235 = vunpack.c.h.b16 %v830
        %v2236 = vunpack.c.l.b16 %v831
        %v2237 = vunpack.c.h.b16 %v831
        %v2238 = vunpack.c.l.b16 %v832
        %v2239 = vunpack.c.h.b16 %v832
        %v2240 = vunpack.c.l.b16 %v833
        %v2241 = vunpack.c.h.b16 %v833
        %v2242 = vunpack.c.l.b16 %v834
        %v2243 = vunpack.c.h.b16 %v834
        %v2244 = vunpack.c.l.b16 %v835
        %v2245 = vunpack.c.h.b16 %v835
        %v2246 = vunpack.c.l.b16 %v836
        %v2247 = vunpack.c.h.b16 %v836
        %v2248 = vunpack.c.l.b16 %v837
        %v2249 = vunpack.c.h.b16 %v837
        %v2250 = vunpack.c.l.b16 %v838
        %v2251 = vunpack.c.h.b16 %v838
        %v2252 = vunpack.c.l.b16 %v839
        %v2253 = vunpack.c.h.b16 %v839
        %v2254 = vunpack.c.l.b16 %v840
        %v2255 = vunpack.c.h.b16 %v840
        %v2256 = vunpack.c.l.b16 %v841
        %v2257 = vunpack.c.h.b16 %v841
        %v2258 = vunpack.c.l.b16 %v842
        %v2259 = vunpack.c.h.b16 %v842
        %v2260 = vunpack.c.l.b16 %v843
        %v2261 = vunpack.c.h.b16 %v843
        %v2262 = vunpack.c.l.b16 %v844
        %v2263 = vunpack.c.h.b16 %v844
        %v2264 = vunpack.c.l.b16 %v845
        %v2265 = vunpack.c.h.b16 %v845
        %v2266 = vunpack.c.l.b16 %v846
        %v2267 = vunpack.c.h.b16 %v846
        %v2268 = vunpack.c.l.b16 %v847
        %v2269 = vunpack.c.h.b16 %v847
        %v2270 = vunpack.c.l.b16 %v848
        %v2271 = vunpack.c.h.b16 %v848
        %v2272 = vunpack.c.l.b16 %v849
        %v2273 = vunpack.c.h.b16 %v849
        %v2274 = vunpack.c.l.b16 %v850
        %v2275 = vunpack.c.h.b16 %v850
        %v2276 = vunpack.c.l.b16 %v851
        %v2277 = vunpack.c.h.b16 %v851
        %v2278 = vunpack.c.l.b16 %v852
        %v2279 = vunpack.c.h.b16 %v852
        %v2280 = vunpack.c.l.b16 %v853
        %v2281 = vunpack.c.h.b16 %v853
        %v2282 = vunpack.c.l.b16 %v854
        %v2283 = vunpack.c.h.b16 %v854
        %v2284 = vunpack.c.l.b16 %v855
        %v2285 = vunpack.c.h.b16 %v855
        %v2286 = vunpack.c.l.b16 %v856
        %v2287 = vunpack.c.h.b16 %v856
        %v2288 = vunpack.c.l.b16 %v857
        %v2289 = vunpack.c.h.b16 %v857
        %v2290 = vunpack.c.l.b16 %v858
        %v2291 = vunpack.c.h.b16 %v858
        %v2292 = vunpack.c.l.b16 %v859
        %v2293 = vunpack.c.h.b16 %v859
        %v2294 = vunpack.c.l.b16 %v860
        %v2295 = vunpack.c.h.b16 %v860
        %v2296 = vunpack.c.l.b16 %v861
        %v2297 = vunpack.c.h.b16 %v861
        %v2298 = vunpack.c.l.b16 %v862
        %v2299 = vunpack.c.h.b16 %v862
        %v2300 = vunpack.c.l.b16 %v863
        %v2301 = vunpack.c.h.b16 %v863
        %v2302 = vunpack.c.l.b16 %v864
        %v2303 = vunpack.c.h.b16 %v864
        %v2304 = vunpack.c.l.b16 %v865
        %v2305 = vunpack.c.h.b16 %v865
        %v2306 = vunpack.c.l.b16 %v866
        %v2307 = vunpack.c.h.b16 %v866
        %v2308 = vunpack.c.l.b16 %v867
        %v2309 = vunpack.c.h.b16 %v867
        %v2310 = vunpack.c.l.b16 %v868
        %v2311 = vunpack.c.h.b16 %v868
        %v2312 = vunpack.c.l.b16 %v869
        %v2313 = vunpack.c.h.b16 %v869
        %v2314 = vunpack.c.l.b16 %v870
        %v2315 = vunpack.c.h.b16 %v870
        %v2316 = vunpack.c.l.b16 %v871
        %v2317 = vunpack.c.h.b16 %v871
        %v2318 = vunpack.c.l.b16 %v872
        %v2319 = vunpack.c.h.b16 %v872
        %v2320 = vunpack.c.l.b16 %v873
        %v2321 = vunpack.c.h.b16 %v873
        %v2322 = vunpack.c.l.b16 %v874
        %v2323 = vunpack.c.h.b16 %v874
        %v2324 = vunpack.c.l.b16 %v875
        %v2325 = vunpack.c.h.b16 %v875
        %v2326 = vunpack.c.l.b16 %v876
        %v2327 = vunpack.c.h.b16 %v876
        %v2328 = vunpack.c.l.b16 %v877
        %v2329 = vunpack.c.h.b16 %v877
        %v2330 = vunpack.c.l.b16 %v878
        %v2331 = vunpack.c.h.b16 %v878
        %v2332 = vunpack.c.l.b16 %v879
        %v2333 = vunpack.c.h.b16 %v879
        %v2334 = vunpack.c.l.b16 %v880
        %v2335 = vunpack.c.h.b16 %v880
        %v2336 = vunpack.c.l.b16 %v881
        %v2337 = vunpack.c.h.b16 %v881
        %v2338 = vunpack.c.l.b16 %v882
        %v2339 = vunpack.c.h.b16 %v882
        %v2340 = vunpack.c.l.b16 %v883
        %v2341 = vunpack.c.h.b16 %v883
        %v2342 = vunpack.c.l.b16 %v884
        %v2343 = vunpack.c.h.b16 %v884
        %v2344 = vunpack.c.l.b16 %v885
        %v2345 = vunpack.c.h.b16 %v885
        %v2346 = vunpack.c.l.b16 %v886
        %v2347 = vunpack.c.h.b16 %v886
        %v2348 = vunpack.c.l.b16 %v887
        %v2349 = vunpack.c.h.b16 %v887
        %v2350 = vunpack.c.l.b16 %v888
        %v2351 = vunpack.c.h.b16 %v888
        %v2352 = vunpack.c.l.b16 %v889
        %v2353 = vunpack.c.h.b16 %v889
        %v2354 = vunpack.c.l.b16 %v890
        %v2355 = vunpack.c.h.b16 %v890
        %v2356 = vunpack.c.l.b16 %v891
        %v2357 = vunpack.c.h.b16 %v891
        %v2358 = vunpack.c.l.b16 %v892
        %v2359 = vunpack.c.h.b16 %v892
        %v2360 = vunpack.c.l.b16 %v893
        %v2361 = vunpack.c.h.b16 %v893
        %v2362 = vunpack.c.l.b16 %v894
        %v2363 = vunpack.c.h.b16 %v894
        %v2364 = vunpack.c.l.b16 %v895
        %v2365 = vunpack.c.h.b16 %v895
        %v2366 = vunpack.c.l.b16 %v896
        %v2367 = vunpack.c.h.b16 %v896
        %v2368 = vunpack.c.l.b16 %v897
        %v2369 = vunpack.c.h.b16 %v897
        %v2370 = vunpack.c.l.b16 %v898
        %v2371 = vunpack.c.h.b16 %v898
        %v2372 = vunpack.c.l.b16 %v899
        %v2373 = vunpack.c.h.b16 %v899
        %v2374 = vunpack.c.l.b16 %v900
        %v2375 = vunpack.c.h.b16 %v900
        %v2376 = vunpack.c.l.b16 %v901
        %v2377 = vunpack.c.h.b16 %v901
        %v2378 = vunpack.c.l.b16 %v902
        %v2379 = vunpack.c.h.b16 %v902
        %v2380 = vunpack.c.l.b16 %v903
        %v2381 = vunpack.c.h.b16 %v903
        %v2382 = vunpack.c.l.b16 %v904
        %v2383 = vunpack.c.h.b16 %v904
        %v2384 = vunpack.c.l.b16 %v905
        %v2385 = vunpack.c.h.b16 %v905
        %v2386 = vunpack.c.l.b16 %v906
        %v2387 = vunpack.c.h.b16 %v906
        %v2388 = vunpack.c.l.b16 %v907
        %v2389 = vunpack.c.h.b16 %v907
        %v2390 = vunpack.c.l.b16 %v908
        %v2391 = vunpack.c.h.b16 %v908
        %v2392 = vunpack.c.l.b16 %v909
        %v2393 = vunpack.c.h.b16 %v909
        %v2394 = vunpack.c.l.b16 %v910
        %v2395 = vunpack.c.h.b16 %v910
        %v2396 = vunpack.c.l.b16 %v911
        %v2397 = vunpack.c.h.b16 %v911
        %v2398 = vunpack.c.l.b16 %v912
        %v2399 = vunpack.c.h.b16 %v912
        %v2400 = vunpack.c.l.b16 %v913
        %v2401 = vunpack.c.h.b16 %v913
        %v2402 = vunpack.c.l.b16 %v914
        %v2403 = vunpack.c.h.b16 %v914
        %v2404 = vunpack.c.l.b16 %v915
        %v2405 = vunpack.c.h.b16 %v915
        %v2406 = vunpack.c.l.b16 %v916
        %v2407 = vunpack.c.h.b16 %v916
        %v2408 = vunpack.c.l.b16 %v917
        %v2409 = vunpack.c.h.b16 %v917
        %v2410 = vunpack.c.l.b16 %v918
        %v2411 = vunpack.c.h.b16 %v918
        %v2412 = vunpack.c.l.b16 %v919
        %v2413 = vunpack.c.h.b16 %v919
        %v2414 = vunpack.c.l.b16 %v920
        %v2415 = vunpack.c.h.b16 %v920
        %v2416 = vunpack.c.l.b16 %v921
        %v2417 = vunpack.c.h.b16 %v921
        %v2418 = vunpack.c.l.b16 %v922
        %v2419 = vunpack.c.h.b16 %v922
        %v2420 = vunpack.c.l.b16 %v923
        %v2421 = vunpack.c.h.b16 %v923
        %v2422 = vunpack.c.l.b16 %v924
        %v2423 = vunpack.c.h.b16 %v924
        %v2424 = vunpack.c.l.b16 %v925
        %v2425 = vunpack.c.h.b16 %v925
        %v2426 = vunpack.c.l.b16 %v926
        %v2427 = vunpack.c.h.b16 %v926
        %v2428 = vunpack.c.l.b16 %v927
        %v2429 = vunpack.c.h.b16 %v927
        %v2430 = vunpack.c.l.b16 %v928
        %v2431 = vunpack.c.h.b16 %v928
        %v2432 = vunpack.c.l.b16 %v929
        %v2433 = vunpack.c.h.b16 %v929
        %v2434 = vunpack.c.l.b16 %v930
        %v2435 = vunpack.c.h.b16 %v930
        %v2436 = vunpack.c.l.b16 %v931
        %v2437 = vunpack.c.h.b16 %v931
        %v2438 = vunpack.c.l.b16 %v932
        %v2439 = vunpack.c.h.b16 %v932
        %v2440 = vunpack.c.l.b16 %v933
        %v2441 = vunpack.c.h.b16 %v933
        %v2442 = vunpack.c.l.b16 %v934
        %v2443 = vunpack.c.h.b16 %v934
        %v2444 = vunpack.c.l.b16 %v935
        %v2445 = vunpack.c.h.b16 %v935
        %v2446 = vunpack.c.l.b16 %v936
        %v2447 = vunpack.c.h.b16 %v936
        %v2448 = vunpack.c.l.b16 %v937
        %v2449 = vunpack.c.h.b16 %v937
        %v2450 = vunpack.c.l.b16 %v938
        %v2451 = vunpack.c.h.b16 %v938
        %v2452 = vunpack.c.l.b16 %v939
        %v2453 = vunpack.c.h.b16 %v939
        %v2454 = vunpack.c.l.b16 %v940
        %v2455 = vunpack.c.h.b16 %v940
        %v2456 = vunpack.c.l.b16 %v941
        %v2457 = vunpack.c.h.b16 %v941
        %v2458 = vunpack.c.l.b16 %v942
        %v2459 = vunpack.c.h.b16 %v942
        %v2460 = vunpack.c.l.b16 %v943
        %v2461 = vunpack.c.h.b16 %v943
        %v2462 = vunpack.c.l.b16 %v944
        %v2463 = vunpack.c.h.b16 %v944
        %v2464 = vunpack.c.l.b16 %v945
        %v2465 = vunpack.c.h.b16 %v945
        %v2466 = vunpack.c.l.b16 %v946
        %v2467 = vunpack.c.h.b16 %v946
        %v2468 = vunpack.c.l.b16 %v947
        %v2469 = vunpack.c.h.b16 %v947
        %v2470 = vunpack.c.l.b16 %v948
        %v2471 = vunpack.c.h.b16 %v948
        %v2472 = vunpack.c.l.b16 %v949
        %v2473 = vunpack.c.h.b16 %v949
        %v2474 = vunpack.c.l.b16 %v950
        %v2475 = vunpack.c.h.b16 %v950
        %v2476 = vunpack.c.l.b16 %v951
        %v2477 = vunpack.c.h.b16 %v951
        %v2478 = vunpack.c.l.b16 %v952
        %v2479 = vunpack.c.h.b16 %v952
        %v2480 = vunpack.c.l.b16 %v953
        %v2481 = vunpack.c.h.b16 %v953
        %v2482 = vunpack.c.l.b16 %v954
        %v2483 = vunpack.c.h.b16 %v954
        %v2484 = vunpack.c.l.b16 %v955
        %v2485 = vunpack.c.h.b16 %v955
        %v2486 = vunpack.c.l.b16 %v956
        %v2487 = vunpack.c.h.b16 %v956
        %v2488 = vunpack.c.l.b16 %v957
        %v2489 = vunpack.c.h.b16 %v957
        %v2490 = vunpack.c.l.b16 %v958
        %v2491 = vunpack.c.h.b16 %v958
        %v2492 = vunpack.c.l.b16 %v959
        %v2493 = vunpack.c.h.b16 %v959
        %v2494 = vunpack.c.l.b16 %v960
        %v2495 = vunpack.c.h.b16 %v960
        %v2496 = vunpack.c.l.b16 %v961
        %v2497 = vunpack.c.h.b16 %v961
        %v2498 = vpack.c.b16 %v1476, %v1474
        %v2499 = vpack.c.b16 %v1477, %v1475
        %v2500 = vpack.c.b16 %v1480, %v1478
        %v2501 = vpack.c.b16 %v1481, %v1479
        %v2502 = vpack.c.b16 %v1484, %v1482
        %v2503 = vpack.c.b16 %v1485, %v1483
        %v2504 = vpack.c.b16 %v1488, %v1486
        %v2505 = vpack.c.b16 %v1489, %v1487
        %v2506 = vpack.c.b16 %v1492, %v1490
        %v2507 = vpack.c.b16 %v1493, %v1491
        %v2508 = vpack.c.b16 %v1496, %v1494
        %v2509 = vpack.c.b16 %v1497, %v1495
        %v2510 = vpack.c.b16 %v1500, %v1498
        %v2511 = vpack.c.b16 %v1501, %v1499
        %v2512 = vpack.c.b16 %v1504, %v1502
        %v2513 = vpack.c.b16 %v1505, %v1503
        %v2514 = vpack.c.b16 %v1508, %v1506
        %v2515 = vpack.c.b16 %v1509, %v1507
        %v2516 = vpack.c.b16 %v1512, %v1510
        %v2517 = vpack.c.b16 %v1513, %v1511
        %v2518 = vpack.c.b16 %v1516, %v1514
        %v2519 = vpack.c.b16 %v1517, %v1515
        %v2520 = vpack.c.b16 %v1520, %v1518
        %v2521 = vpack.c.b16 %v1521, %v1519
        %v2522 = vpack.c.b16 %v1524, %v1522
        %v2523 = vpack.c.b16 %v1525, %v1523
        %v2524 = vpack.c.b16 %v1528, %v1526
        %v2525 = vpack.c.b16 %v1529, %v1527
        %v2526 = vpack.c.b16 %v1532, %v1530
        %v2527 = vpack.c.b16 %v1533, %v1531
        %v2528 = vpack.c.b16 %v1536, %v1534
        %v2529 = vpack.c.b16 %v1537, %v1535
        %v2530 = vpack.c.b16 %v1540, %v1538
        %v2531 = vpack.c.b16 %v1541, %v1539
        %v2532 = vpack.c.b16 %v1544, %v1542
        %v2533 = vpack.c.b16 %v1545, %v1543
        %v2534 = vpack.c.b16 %v1548, %v1546
        %v2535 = vpack.c.b16 %v1549, %v1547
        %v2536 = vpack.c.b16 %v1552, %v1550
        %v2537 = vpack.c.b16 %v1553, %v1551
        %v2538 = vpack.c.b16 %v1556, %v1554
        %v2539 = vpack.c.b16 %v1557, %v1555
        %v2540 = vpack.c.b16 %v1560, %v1558
        %v2541 = vpack.c.b16 %v1561, %v1559
        %v2542 = vpack.c.b16 %v1564, %v1562
        %v2543 = vpack.c.b16 %v1565, %v1563
        %v2544 = vpack.c.b16 %v1568, %v1566
        %v2545 = vpack.c.b16 %v1569, %v1567
        %v2546 = vpack.c.b16 %v1572, %v1570
        %v2547 = vpack.c.b16 %v1573, %v1571
        %v2548 = vpack.c.b16 %v1576, %v1574
        %v2549 = vpack.c.b16 %v1577, %v1575
        %v2550 = vpack.c.b16 %v1580, %v1578
        %v2551 = vpack.c.b16 %v1581, %v1579
        %v2552 = vpack.c.b16 %v1584, %v1582
        %v2553 = vpack.c.b16 %v1585, %v1583
        %v2554 = vpack.c.b16 %v1588, %v1586
        %v2555 = vpack.c.b16 %v1589, %v1587
        %v2556 = vpack.c.b16 %v1592, %v1590
        %v2557 = vpack.c.b16 %v1593, %v1591
        %v2558 = vpack.c.b16 %v1596, %v1594
        %v2559 = vpack.c.b16 %v1597, %v1595
        %v2560 = vpack.c.b16 %v1600, %v1598
        %v2561 = vpack.c.b16 %v1601, %v1599
        %v2562 = vpack.c.b16 %v1604, %v1602
        %v2563 = vpack.c.b16 %v1605, %v1603
        %v2564 = vpack.c.b16 %v1608, %v1606
        %v2565 = vpack.c.b16 %v1609, %v1607
        %v2566 = vpack.c.b16 %v1612, %v1610
        %v2567 = vpack.c.b16 %v1613, %v1611
        %v2568 = vpack.c.b16 %v1616, %v1614
        %v2569 = vpack.c.b16 %v1617, %v1615
        %v2570 = vpack.c.b16 %v1620, %v1618
        %v2571 = vpack.c.b16 %v1621, %v1619
        %v2572 = vpack.c.b16 %v1624, %v1622
        %v2573 = vpack.c.b16 %v1625, %v1623
        %v2574 = vpack.c.b16 %v1628, %v1626
        %v2575 = vpack.c.b16 %v1629, %v1627
        %v2576 = vpack.c.b16 %v1632, %v1630
        %v2577 = vpack.c.b16 %v1633, %v1631
        %v2578 = vpack.c.b16 %v1636, %v1634
        %v2579 = vpack.c.b16 %v1637, %v1635
        %v2580 = vpack.c.b16 %v1640, %v1638
        %v2581 = vpack.c.b16 %v1641, %v1639
        %v2582 = vpack.c.b16 %v1644, %v1642
        %v2583 = vpack.c.b16 %v1645, %v1643
        %v2584 = vpack.c.b16 %v1648, %v1646
        %v2585 = vpack.c.b16 %v1649, %v1647
        %v2586 = vpack.c.b16 %v1652, %v1650
        %v2587 = vpack.c.b16 %v1653, %v1651
        %v2588 = vpack.c.b16 %v1656, %v1654
        %v2589 = vpack.c.b16 %v1657, %v1655
        %v2590 = vpack.c.b16 %v1660, %v1658
        %v2591 = vpack.c.b16 %v1661, %v1659
        %v2592 = vpack.c.b16 %v1664, %v1662
        %v2593 = vpack.c.b16 %v1665, %v1663
        %v2594 = vpack.c.b16 %v1668, %v1666
        %v2595 = vpack.c.b16 %v1669, %v1667
        %v2596 = vpack.c.b16 %v1672, %v1670
        %v2597 = vpack.c.b16 %v1673, %v1671
        %v2598 = vpack.c.b16 %v1676, %v1674
        %v2599 = vpack.c.b16 %v1677, %v1675
        %v2600 = vpack.c.b16 %v1680, %v1678
        %v2601 = vpack.c.b16 %v1681, %v1679
        %v2602 = vpack.c.b16 %v1684, %v1682
        %v2603 = vpack.c.b16 %v1685, %v1683
        %v2604 = vpack.c.b16 %v1688, %v1686
        %v2605 = vpack.c.b16 %v1689, %v1687
        %v2606 = vpack.c.b16 %v1692, %v1690
        %v2607 = vpack.c.b16 %v1693, %v1691
        %v2608 = vpack.c.b16 %v1696, %v1694
        %v2609 = vpack.c.b16 %v1697, %v1695
        %v2610 = vpack.c.b16 %v1700, %v1698
        %v2611 = vpack.c.b16 %v1701, %v1699
        %v2612 = vpack.c.b16 %v1704, %v1702
        %v2613 = vpack.c.b16 %v1705, %v1703
        %v2614 = vpack.c.b16 %v1708, %v1706
        %v2615 = vpack.c.b16 %v1709, %v1707
        %v2616 = vpack.c.b16 %v1712, %v1710
        %v2617 = vpack.c.b16 %v1713, %v1711
        %v2618 = vpack.c.b16 %v1716, %v1714
        %v2619 = vpack.c.b16 %v1717, %v1715
        %v2620 = vpack.c.b16 %v1720, %v1718
        %v2621 = vpack.c.b16 %v1721, %v1719
        %v2622 = vpack.c.b16 %v1724, %v1722
        %v2623 = vpack.c.b16 %v1725, %v1723
        %v2624 = vpack.c.b16 %v1728, %v1726
        %v2625 = vpack.c.b16 %v1729, %v1727
        %v2626 = vpack.c.b16 %v1732, %v1730
        %v2627 = vpack.c.b16 %v1733, %v1731
        %v2628 = vpack.c.b16 %v1736, %v1734
        %v2629 = vpack.c.b16 %v1737, %v1735
        %v2630 = vpack.c.b16 %v1740, %v1738
        %v2631 = vpack.c.b16 %v1741, %v1739
        %v2632 = vpack.c.b16 %v1744, %v1742
        %v2633 = vpack.c.b16 %v1745, %v1743
        %v2634 = vpack.c.b16 %v1748, %v1746
        %v2635 = vpack.c.b16 %v1749, %v1747
        %v2636 = vpack.c.b16 %v1752, %v1750
        %v2637 = vpack.c.b16 %v1753, %v1751
        %v2638 = vpack.c.b16 %v1756, %v1754
        %v2639 = vpack.c.b16 %v1757, %v1755
        %v2640 = vpack.c.b16 %v1760, %v1758
        %v2641 = vpack.c.b16 %v1761, %v1759
        %v2642 = vpack.c.b16 %v1764, %v1762
        %v2643 = vpack.c.b16 %v1765, %v1763
        %v2644 = vpack.c.b16 %v1768, %v1766
        %v2645 = vpack.c.b16 %v1769, %v1767
        %v2646 = vpack.c.b16 %v1772, %v1770
        %v2647 = vpack.c.b16 %v1773, %v1771
        %v2648 = vpack.c.b16 %v1776, %v1774
        %v2649 = vpack.c.b16 %v1777, %v1775
        %v2650 = vpack.c.b16 %v1780, %v1778
        %v2651 = vpack.c.b16 %v1781, %v1779
        %v2652 = vpack.c.b16 %v1784, %v1782
        %v2653 = vpack.c.b16 %v1785, %v1783
        %v2654 = vpack.c.b16 %v1788, %v1786
        %v2655 = vpack.c.b16 %v1789, %v1787
        %v2656 = vpack.c.b16 %v1792, %v1790
        %v2657 = vpack.c.b16 %v1793, %v1791
        %v2658 = vpack.c.b16 %v1796, %v1794
        %v2659 = vpack.c.b16 %v1797, %v1795
        %v2660 = vpack.c.b16 %v1800, %v1798
        %v2661 = vpack.c.b16 %v1801, %v1799
        %v2662 = vpack.c.b16 %v1804, %v1802
        %v2663 = vpack.c.b16 %v1805, %v1803
        %v2664 = vpack.c.b16 %v1808, %v1806
        %v2665 = vpack.c.b16 %v1809, %v1807
        %v2666 = vpack.c.b16 %v1812, %v1810
        %v2667 = vpack.c.b16 %v1813, %v1811
        %v2668 = vpack.c.b16 %v1816, %v1814
        %v2669 = vpack.c.b16 %v1817, %v1815
        %v2670 = vpack.c.b16 %v1820, %v1818
        %v2671 = vpack.c.b16 %v1821, %v1819
        %v2672 = vpack.c.b16 %v1824, %v1822
        %v2673 = vpack.c.b16 %v1825, %v1823
        %v2674 = vpack.c.b16 %v1828, %v1826
        %v2675 = vpack.c.b16 %v1829, %v1827
        %v2676 = vpack.c.b16 %v1832, %v1830
        %v2677 = vpack.c.b16 %v1833, %v1831
        %v2678 = vpack.c.b16 %v1836, %v1834
        %v2679 = vpack.c.b16 %v1837, %v1835
        %v2680 = vpack.c.b16 %v1840, %v1838
        %v2681 = vpack.c.b16 %v1841, %v1839
        %v2682 = vpack.c.b16 %v1844, %v1842
        %v2683 = vpack.c.b16 %v1845, %v1843
        %v2684 = vpack.c.b16 %v1848, %v1846
        %v2685 = vpack.c.b16 %v1849, %v1847
        %v2686 = vpack.c.b16 %v1852, %v1850
        %v2687 = vpack.c.b16 %v1853, %v1851
        %v2688 = vpack.c.b16 %v1856, %v1854
        %v2689 = vpack.c.b16 %v1857, %v1855
        %v2690 = vpack.c.b16 %v1860, %v1858
        %v2691 = vpack.c.b16 %v1861, %v1859
        %v2692 = vpack.c.b16 %v1864, %v1862
        %v2693 = vpack.c.b16 %v1865, %v1863
        %v2694 = vpack.c.b16 %v1868, %v1866
        %v2695 = vpack.c.b16 %v1869, %v1867
        %v2696 = vpack.c.b16 %v1872, %v1870
        %v2697 = vpack.c.b16 %v1873, %v1871
        %v2698 = vpack.c.b16 %v1876, %v1874
        %v2699 = vpack.c.b16 %v1877, %v1875
        %v2700 = vpack.c.b16 %v1880, %v1878
        %v2701 = vpack.c.b16 %v1881, %v1879
        %v2702 = vpack.c.b16 %v1884, %v1882
        %v2703 = vpack.c.b16 %v1885, %v1883
        %v2704 = vpack.c.b16 %v1888, %v1886
        %v2705 = vpack.c.b16 %v1889, %v1887
        %v2706 = vpack.c.b16 %v1892, %v1890
        %v2707 = vpack.c.b16 %v1893, %v1891
        %v2708 = vpack.c.b16 %v1896, %v1894
        %v2709 = vpack.c.b16 %v1897, %v1895
        %v2710 = vpack.c.b16 %v1900, %v1898
        %v2711 = vpack.c.b16 %v1901, %v1899
        %v2712 = vpack.c.b16 %v1904, %v1902
        %v2713 = vpack.c.b16 %v1905, %v1903
        %v2714 = vpack.c.b16 %v1908, %v1906
        %v2715 = vpack.c.b16 %v1909, %v1907
        %v2716 = vpack.c.b16 %v1912, %v1910
        %v2717 = vpack.c.b16 %v1913, %v1911
        %v2718 = vpack.c.b16 %v1916, %v1914
        %v2719 = vpack.c.b16 %v1917, %v1915
        %v2720 = vpack.c.b16 %v1920, %v1918
        %v2721 = vpack.c.b16 %v1921, %v1919
        %v2722 = vpack.c.b16 %v1924, %v1922
        %v2723 = vpack.c.b16 %v1925, %v1923
        %v2724 = vpack.c.b16 %v1928, %v1926
        %v2725 = vpack.c.b16 %v1929, %v1927
        %v2726 = vpack.c.b16 %v1932, %v1930
        %v2727 = vpack.c.b16 %v1933, %v1931
        %v2728 = vpack.c.b16 %v1936, %v1934
        %v2729 = vpack.c.b16 %v1937, %v1935
        %v2730 = vpack.c.b16 %v1940, %v1938
        %v2731 = vpack.c.b16 %v1941, %v1939
        %v2732 = vpack.c.b16 %v1944, %v1942
        %v2733 = vpack.c.b16 %v1945, %v1943
        %v2734 = vpack.c.b16 %v1948, %v1946
        %v2735 = vpack.c.b16 %v1949, %v1947
        %v2736 = vpack.c.b16 %v1952, %v1950
        %v2737 = vpack.c.b16 %v1953, %v1951
        %v2738 = vpack.c.b16 %v1956, %v1954
        %v2739 = vpack.c.b16 %v1957, %v1955
        %v2740 = vpack.c.b16 %v1960, %v1958
        %v2741 = vpack.c.b16 %v1961, %v1959
        %v2742 = vpack.c.b16 %v1964, %v1962
        %v2743 = vpack.c.b16 %v1965, %v1963
        %v2744 = vpack.c.b16 %v1968, %v1966
        %v2745 = vpack.c.b16 %v1969, %v1967
        %v2746 = vpack.c.b16 %v1972, %v1970
        %v2747 = vpack.c.b16 %v1973, %v1971
        %v2748 = vpack.c.b16 %v1976, %v1974
        %v2749 = vpack.c.b16 %v1977, %v1975
        %v2750 = vpack.c.b16 %v1980, %v1978
        %v2751 = vpack.c.b16 %v1981, %v1979
        %v2752 = vpack.c.b16 %v1984, %v1982
        %v2753 = vpack.c.b16 %v1985, %v1983
        %v2754 = vpack.c.b16 %v1988, %v1986
        %v2755 = vpack.c.b16 %v1989, %v1987
        %v2756 = vpack.c.b16 %v1992, %v1990
        %v2757 = vpack.c.b16 %v1993, %v1991
        %v2758 = vpack.c.b16 %v1996, %v1994
        %v2759 = vpack.c.b16 %v1997, %v1995
        %v2760 = vpack.c.b16 %v2000, %v1998
        %v2761 = vpack.c.b16 %v2001, %v1999
        %v2762 = vpack.c.b16 %v2004, %v2002
        %v2763 = vpack.c.b16 %v2005, %v2003
        %v2764 = vpack.c.b16 %v2008, %v2006
        %v2765 = vpack.c.b16 %v2009, %v2007
        %v2766 = vpack.c.b16 %v2012, %v2010
        %v2767 = vpack.c.b16 %v2013, %v2011
        %v2768 = vpack.c.b16 %v2016, %v2014
        %v2769 = vpack.c.b16 %v2017, %v2015
        %v2770 = vpack.c.b16 %v2020, %v2018
        %v2771 = vpack.c.b16 %v2021, %v2019
        %v2772 = vpack.c.b16 %v2024, %v2022
        %v2773 = vpack.c.b16 %v2025, %v2023
        %v2774 = vpack.c.b16 %v2028, %v2026
        %v2775 = vpack.c.b16 %v2029, %v2027
        %v2776 = vpack.c.b16 %v2032, %v2030
        %v2777 = vpack.c.b16 %v2033, %v2031
        %v2778 = vpack.c.b16 %v2036, %v2034
        %v2779 = vpack.c.b16 %v2037, %v2035
        %v2780 = vpack.c.b16 %v2040, %v2038
        %v2781 = vpack.c.b16 %v2041, %v2039
        %v2782 = vpack.c.b16 %v2044, %v2042
        %v2783 = vpack.c.b16 %v2045, %v2043
        %v2784 = vpack.c.b16 %v2048, %v2046
        %v2785 = vpack.c.b16 %v2049, %v2047
        %v2786 = vpack.c.b16 %v2052, %v2050
        %v2787 = vpack.c.b16 %v2053, %v2051
        %v2788 = vpack.c.b16 %v2056, %v2054
        %v2789 = vpack.c.b16 %v2057, %v2055
        %v2790 = vpack.c.b16 %v2060, %v2058
        %v2791 = vpack.c.b16 %v2061, %v2059
        %v2792 = vpack.c.b16 %v2064, %v2062
        %v2793 = vpack.c.b16 %v2065, %v2063
        %v2794 = vpack.c.b16 %v2068, %v2066
        %v2795 = vpack.c.b16 %v2069, %v2067
        %v2796 = vpack.c.b16 %v2072, %v2070
        %v2797 = vpack.c.b16 %v2073, %v2071
        %v2798 = vpack.c.b16 %v2076, %v2074
        %v2799 = vpack.c.b16 %v2077, %v2075
        %v2800 = vpack.c.b16 %v2080, %v2078
        %v2801 = vpack.c.b16 %v2081, %v2079
        %v2802 = vpack.c.b16 %v2084, %v2082
        %v2803 = vpack.c.b16 %v2085, %v2083
        %v2804 = vpack.c.b16 %v2088, %v2086
        %v2805 = vpack.c.b16 %v2089, %v2087
        %v2806 = vpack.c.b16 %v2092, %v2090
        %v2807 = vpack.c.b16 %v2093, %v2091
        %v2808 = vpack.c.b16 %v2096, %v2094
        %v2809 = vpack.c.b16 %v2097, %v2095
        %v2810 = vpack.c.b16 %v2100, %v2098
        %v2811 = vpack.c.b16 %v2101, %v2099
        %v2812 = vpack.c.b16 %v2104, %v2102
        %v2813 = vpack.c.b16 %v2105, %v2103
        %v2814 = vpack.c.b16 %v2108, %v2106
        %v2815 = vpack.c.b16 %v2109, %v2107
        %v2816 = vpack.c.b16 %v2112, %v2110
        %v2817 = vpack.c.b16 %v2113, %v2111
        %v2818 = vpack.c.b16 %v2116, %v2114
        %v2819 = vpack.c.b16 %v2117, %v2115
        %v2820 = vpack.c.b16 %v2120, %v2118
        %v2821 = vpack.c.b16 %v2121, %v2119
        %v2822 = vpack.c.b16 %v2124, %v2122
        %v2823 = vpack.c.b16 %v2125, %v2123
        %v2824 = vpack.c.b16 %v2128, %v2126
        %v2825 = vpack.c.b16 %v2129, %v2127
        %v2826 = vpack.c.b16 %v2132, %v2130
        %v2827 = vpack.c.b16 %v2133, %v2131
        %v2828 = vpack.c.b16 %v2136, %v2134
        %v2829 = vpack.c.b16 %v2137, %v2135
        %v2830 = vpack.c.b16 %v2140, %v2138
        %v2831 = vpack.c.b16 %v2141, %v2139
        %v2832 = vpack.c.b16 %v2144, %v2142
        %v2833 = vpack.c.b16 %v2145, %v2143
        %v2834 = vpack.c.b16 %v2148, %v2146
        %v2835 = vpack.c.b16 %v2149, %v2147
        %v2836 = vpack.c.b16 %v2152, %v2150
        %v2837 = vpack.c.b16 %v2153, %v2151
        %v2838 = vpack.c.b16 %v2156, %v2154
        %v2839 = vpack.c.b16 %v2157, %v2155
        %v2840 = vpack.c.b16 %v2160, %v2158
        %v2841 = vpack.c.b16 %v2161, %v2159
        %v2842 = vpack.c.b16 %v2164, %v2162
        %v2843 = vpack.c.b16 %v2165, %v2163
        %v2844 = vpack.c.b16 %v2168, %v2166
        %v2845 = vpack.c.b16 %v2169, %v2167
        %v2846 = vpack.c.b16 %v2172, %v2170
        %v2847 = vpack.c.b16 %v2173, %v2171
        %v2848 = vpack.c.b16 %v2176, %v2174
        %v2849 = vpack.c.b16 %v2177, %v2175
        %v2850 = vpack.c.b16 %v2180, %v2178
        %v2851 = vpack.c.b16 %v2181, %v2179
        %v2852 = vpack.c.b16 %v2184, %v2182
        %v2853 = vpack.c.b16 %v2185, %v2183
        %v2854 = vpack.c.b16 %v2188, %v2186
        %v2855 = vpack.c.b16 %v2189, %v2187
        %v2856 = vpack.c.b16 %v2192, %v2190
        %v2857 = vpack.c.b16 %v2193, %v2191
        %v2858 = vpack.c.b16 %v2196, %v2194
        %v2859 = vpack.c.b16 %v2197, %v2195
        %v2860 = vpack.c.b16 %v2200, %v2198
        %v2861 = vpack.c.b16 %v2201, %v2199
        %v2862 = vpack.c.b16 %v2204, %v2202
        %v2863 = vpack.c.b16 %v2205, %v2203
        %v2864 = vpack.c.b16 %v2208, %v2206
        %v2865 = vpack.c.b16 %v2209, %v2207
        %v2866 = vpack.c.b16 %v2212, %v2210
        %v2867 = vpack.c.b16 %v2213, %v2211
        %v2868 = vpack.c.b16 %v2216, %v2214
        %v2869 = vpack.c.b16 %v2217, %v2215
        %v2870 = vpack.c.b16 %v2220, %v2218
        %v2871 = vpack.c.b16 %v2221, %v2219
        %v2872 = vpack.c.b16 %v2224, %v2222
        %v2873 = vpack.c.b16 %v2225, %v2223
        %v2874 = vpack.c.b16 %v2228, %v2226
        %v2875 = vpack.c.b16 %v2229, %v2227
        %v2876 = vpack.c.b16 %v2232, %v2230
        %v2877 = vpack.c.b16 %v2233, %v2231
        %v2878 = vpack.c.b16 %v2236, %v2234
        %v2879 = vpack.c.b16 %v2237, %v2235
        %v2880 = vpack.c.b16 %v2240, %v2238
        %v2881 = vpack.c.b16 %v2241, %v2239
        %v2882 = vpack.c.b16 %v2244, %v2242
        %v2883 = vpack.c.b16 %v2245, %v2243
        %v2884 = vpack.c.b16 %v2248, %v2246
        %v2885 = vpack.c.b16 %v2249, %v2247
        %v2886 = vpack.c.b16 %v2252, %v2250
        %v2887 = vpack.c.b16 %v2253, %v2251
        %v2888 = vpack.c.b16 %v2256, %v2254
        %v2889 = vpack.c.b16 %v2257, %v2255
        %v2890 = vpack.c.b16 %v2260, %v2258
        %v2891 = vpack.c.b16 %v2261, %v2259
        %v2892 = vpack.c.b16 %v2264, %v2262
        %v2893 = vpack.c.b16 %v2265, %v2263
        %v2894 = vpack.c.b16 %v2268, %v2266
        %v2895 = vpack.c.b16 %v2269, %v2267
        %v2896 = vpack.c.b16 %v2272, %v2270
        %v2897 = vpack.c.b16 %v2273, %v2271
        %v2898 = vpack.c.b16 %v2276, %v2274
        %v2899 = vpack.c.b16 %v2277, %v2275
        %v2900 = vpack.c.b16 %v2280, %v2278
        %v2901 = vpack.c.b16 %v2281, %v2279
        %v2902 = vpack.c.b16 %v2284, %v2282
        %v2903 = vpack.c.b16 %v2285, %v2283
        %v2904 = vpack.c.b16 %v2288, %v2286
        %v2905 = vpack.c.b16 %v2289, %v2287
        %v2906 = vpack.c.b16 %v2292, %v2290
        %v2907 = vpack.c.b16 %v2293, %v2291
        %v2908 = vpack.c.b16 %v2296, %v2294
        %v2909 = vpack.c.b16 %v2297, %v2295
        %v2910 = vpack.c.b16 %v2300, %v2298
        %v2911 = vpack.c.b16 %v2301, %v2299
        %v2912 = vpack.c.b16 %v2304, %v2302
        %v2913 = vpack.c.b16 %v2305, %v2303
        %v2914 = vpack.c.b16 %v2308, %v2306
        %v2915 = vpack.c.b16 %v2309, %v2307
        %v2916 = vpack.c.b16 %v2312, %v2310
        %v2917 = vpack.c.b16 %v2313, %v2311
        %v2918 = vpack.c.b16 %v2316, %v2314
        %v2919 = vpack.c.b16 %v2317, %v2315
        %v2920 = vpack.c.b16 %v2320, %v2318
        %v2921 = vpack.c.b16 %v2321, %v2319
        %v2922 = vpack.c.b16 %v2324, %v2322
        %v2923 = vpack.c.b16 %v2325, %v2323
        %v2924 = vpack.c.b16 %v2328, %v2326
        %v2925 = vpack.c.b16 %v2329, %v2327
        %v2926 = vpack.c.b16 %v2332, %v2330
        %v2927 = vpack.c.b16 %v2333, %v2331
        %v2928 = vpack.c.b16 %v2336, %v2334
        %v2929 = vpack.c.b16 %v2337, %v2335
        %v2930 = vpack.c.b16 %v2340, %v2338
        %v2931 = vpack.c.b16 %v2341, %v2339
        %v2932 = vpack.c.b16 %v2344, %v2342
        %v2933 = vpack.c.b16 %v2345, %v2343
        %v2934 = vpack.c.b16 %v2348, %v2346
        %v2935 = vpack.c.b16 %v2349, %v2347
        %v2936 = vpack.c.b16 %v2352, %v2350
        %v2937 = vpack.c.b16 %v2353, %v2351
        %v2938 = vpack.c.b16 %v2356, %v2354
        %v2939 = vpack.c.b16 %v2357, %v2355
        %v2940 = vpack.c.b16 %v2360, %v2358
        %v2941 = vpack.c.b16 %v2361, %v2359
        %v2942 = vpack.c.b16 %v2364, %v2362
        %v2943 = vpack.c.b16 %v2365, %v2363
        %v2944 = vpack.c.b16 %v2368, %v2366
        %v2945 = vpack.c.b16 %v2369, %v2367
        %v2946 = vpack.c.b16 %v2372, %v2370
        %v2947 = vpack.c.b16 %v2373, %v2371
        %v2948 = vpack.c.b16 %v2376, %v2374
        %v2949 = vpack.c.b16 %v2377, %v2375
        %v2950 = vpack.c.b16 %v2380, %v2378
        %v2951 = vpack.c.b16 %v2381, %v2379
        %v2952 = vpack.c.b16 %v2384, %v2382
        %v2953 = vpack.c.b16 %v2385, %v2383
        %v2954 = vpack.c.b16 %v2388, %v2386
        %v2955 = vpack.c.b16 %v2389, %v2387
        %v2956 = vpack.c.b16 %v2392, %v2390
        %v2957 = vpack.c.b16 %v2393, %v2391
        %v2958 = vpack.c.b16 %v2396, %v2394
        %v2959 = vpack.c.b16 %v2397, %v2395
        %v2960 = vpack.c.b16 %v2400, %v2398
        %v2961 = vpack.c.b16 %v2401, %v2399
        %v2962 = vpack.c.b16 %v2404, %v2402
        %v2963 = vpack.c.b16 %v2405, %v2403
        %v2964 = vpack.c.b16 %v2408, %v2406
        %v2965 = vpack.c.b16 %v2409, %v2407
        %v2966 = vpack.c.b16 %v2412, %v2410
        %v2967 = vpack.c.b16 %v2413, %v2411
        %v2968 = vpack.c.b16 %v2416, %v2414
        %v2969 = vpack.c.b16 %v2417, %v2415
        %v2970 = vpack.c.b16 %v2420, %v2418
        %v2971 = vpack.c.b16 %v2421, %v2419
        %v2972 = vpack.c.b16 %v2424, %v2422
        %v2973 = vpack.c.b16 %v2425, %v2423
        %v2974 = vpack.c.b16 %v2428, %v2426
        %v2975 = vpack.c.b16 %v2429, %v2427
        %v2976 = vpack.c.b16 %v2432, %v2430
        %v2977 = vpack.c.b16 %v2433, %v2431
        %v2978 = vpack.c.b16 %v2436, %v2434
        %v2979 = vpack.c.b16 %v2437, %v2435
        %v2980 = vpack.c.b16 %v2440, %v2438
        %v2981 = vpack.c.b16 %v2441, %v2439
        %v2982 = vpack.c.b16 %v2444, %v2442
        %v2983 = vpack.c.b16 %v2445, %v2443
        %v2984 = vpack.c.b16 %v2448, %v2446
        %v2985 = vpack.c.b16 %v2449, %v2447
        %v2986 = vpack.c.b16 %v2452, %v2450
        %v2987 = vpack.c.b16 %v2453, %v2451
        %v2988 = vpack.c.b16 %v2456, %v2454
        %v2989 = vpack.c.b16 %v2457, %v2455
        %v2990 = vpack.c.b16 %v2460, %v2458
        %v2991 = vpack.c.b16 %v2461, %v2459
        %v2992 = vpack.c.b16 %v2464, %v2462
        %v2993 = vpack.c.b16 %v2465, %v2463
        %v2994 = vpack.c.b16 %v2468, %v2466
        %v2995 = vpack.c.b16 %v2469, %v2467
        %v2996 = vpack.c.b16 %v2472, %v2470
        %v2997 = vpack.c.b16 %v2473, %v2471
        %v2998 = vpack.c.b16 %v2476, %v2474
        %v2999 = vpack.c.b16 %v2477, %v2475
        %v3000 = vpack.c.b16 %v2480, %v2478
        %v3001 = vpack.c.b16 %v2481, %v2479
        %v3002 = vpack.c.b16 %v2484, %v2482
        %v3003 = vpack.c.b16 %v2485, %v2483
        %v3004 = vpack.c.b16 %v2488, %v2486
        %v3005 = vpack.c.b16 %v2489, %v2487
        %v3006 = vpack.c.b16 %v2492, %v2490
        %v3007 = vpack.c.b16 %v2493, %v2491
        %v3008 = vpack.c.b16 %v2496, %v2494
        %v3009 = vpack.c.b16 %v2497, %v2495
        %3522 = vmatprep.subr.bf16.mxu0 %v2499
        %3523 = vmatpush1.bf16.msra.mxu0 %v2498
        %3524 = vmatprep.subr.bf16.mxu0 %v2501
        %3525 = vmatpush1.bf16.msra.mxu0 %v2500
        %3526 = vmatprep.subr.bf16.mxu0 %v2503
        %3527 = vmatpush1.bf16.msra.mxu0 %v2502
        %3528 = vmatprep.subr.bf16.mxu0 %v2505
        %3529 = vmatpush1.bf16.msra.mxu0 %v2504
        %3530 = vmatprep.subr.bf16.mxu0 %v2507
        %3531 = vmatpush1.bf16.msra.mxu0 %v2506
        %3532 = vmatprep.subr.bf16.mxu0 %v2509
        %3533 = vmatpush1.bf16.msra.mxu0 %v2508
        %3534 = vmatprep.subr.bf16.mxu0 %v2511
        %3535 = vmatpush1.bf16.msra.mxu0 %v2510
        %3536 = vmatprep.subr.bf16.mxu0 %v2513
        %3537 = vmatpush1.bf16.msra.mxu0 %v2512
        %3538 = vmatprep.subr.bf16.mxu0 %v2515
        %3539 = vmatpush1.bf16.msra.mxu0 %v2514
        %3540 = vmatprep.subr.bf16.mxu0 %v2517
        %3541 = vmatpush1.bf16.msra.mxu0 %v2516
        %3542 = vmatprep.subr.bf16.mxu0 %v2519
        %3543 = vmatpush1.bf16.msra.mxu0 %v2518
        %3544 = vmatprep.subr.bf16.mxu0 %v2521
        %3545 = vmatpush1.bf16.msra.mxu0 %v2520
        %3546 = vmatprep.subr.bf16.mxu0 %v2523
        %3547 = vmatpush1.bf16.msra.mxu0 %v2522
        %3548 = vmatprep.subr.bf16.mxu0 %v2525
        %3549 = vmatpush1.bf16.msra.mxu0 %v2524
        %3550 = vmatprep.subr.bf16.mxu0 %v2527
        %3551 = vmatpush1.bf16.msra.mxu0 %v2526
        %3552 = vmatprep.subr.bf16.mxu0 %v2529
        %3553 = vmatpush1.bf16.msra.mxu0 %v2528
        %3554 = vmatprep.mubr.bf16.mxu0 %v419
        %3555 = vmatmul.mubr.bf16.gmra.mrb[0].mxu0 %v418
        %v3556 = vpop.f32.mrb[0].mxu0
        %v3557 = vadd.f32 0.0, %v3556
        %v3558 = vpop.f32.mrb[0].mxu0
        %v3559 = vadd.f32 0.0, %v3558
        %v3560 = vpop.f32.mrb[0].mxu0
        %v3561 = vpop.f32.mrb[0].mxu0
        %3562 = vdwg.mxu0
        %3563 = vmatprep.subr.bf16.mxu0 %v2531
        %3564 = vmatpush1.bf16.msra.mxu0 %v2530
        %3565 = vmatprep.subr.bf16.mxu0 %v2533
        %3566 = vmatpush1.bf16.msra.mxu0 %v2532
        %3567 = vmatprep.subr.bf16.mxu0 %v2535
        %3568 = vmatpush1.bf16.msra.mxu0 %v2534
        %3569 = vmatprep.subr.bf16.mxu0 %v2537
        %3570 = vmatpush1.bf16.msra.mxu0 %v2536
        %3571 = vmatprep.subr.bf16.mxu0 %v2539
        %3572 = vmatpush1.bf16.msra.mxu0 %v2538
        %3573 = vmatprep.subr.bf16.mxu0 %v2541
        %3574 = vmatpush1.bf16.msra.mxu0 %v2540
        %3575 = vmatprep.subr.bf16.mxu0 %v2543
        %3576 = vmatpush1.bf16.msra.mxu0 %v2542
        %3577 = vmatprep.subr.bf16.mxu0 %v2545
        %3578 = vmatpush1.bf16.msra.mxu0 %v2544
        %3579 = vmatprep.subr.bf16.mxu0 %v2547
        %3580 = vmatpush1.bf16.msra.mxu0 %v2546
        %3581 = vmatprep.subr.bf16.mxu0 %v2549
        %3582 = vmatpush1.bf16.msra.mxu0 %v2548
        %3583 = vmatprep.subr.bf16.mxu0 %v2551
        %3584 = vmatpush1.bf16.msra.mxu0 %v2550
        %3585 = vmatprep.subr.bf16.mxu0 %v2553
        %3586 = vmatpush1.bf16.msra.mxu0 %v2552
        %3587 = vmatprep.subr.bf16.mxu0 %v2555
        %3588 = vmatpush1.bf16.msra.mxu0 %v2554
        %3589 = vmatprep.subr.bf16.mxu0 %v2557
        %3590 = vmatpush1.bf16.msra.mxu0 %v2556
        %3591 = vmatprep.subr.bf16.mxu0 %v2559
        %3592 = vmatpush1.bf16.msra.mxu0 %v2558
        %3593 = vmatprep.subr.bf16.mxu0 %v2561
        %3594 = vmatpush1.bf16.msra.mxu0 %v2560
        %3595 = vmatprep.mubr.bf16.mxu0 %v421
        %3596 = vmatmul.mubr.bf16.gmra.mrb[0].mxu0 %v420
        %v3597 = vpop.f32.mrb[0].mxu0
        %v3598 = vadd.f32 %v3557, %v3597
        %v3599 = vpop.f32.mrb[0].mxu0
        %v3600 = vadd.f32 %v3559, %v3599
        %v3601 = vpop.f32.mrb[0].mxu0
        %v3602 = vpop.f32.mrb[0].mxu0
        %3603 = vdwg.mxu0
        %3604 = vmatprep.subr.bf16.mxu0 %v2563
        %3605 = vmatpush1.bf16.msra.mxu0 %v2562
        %3606 = vmatprep.subr.bf16.mxu0 %v2565
        %3607 = vmatpush1.bf16.msra.mxu0 %v2564
        %3608 = vmatprep.subr.bf16.mxu0 %v2567
        %3609 = vmatpush1.bf16.msra.mxu0 %v2566
        %3610 = vmatprep.subr.bf16.mxu0 %v2569
        %3611 = vmatpush1.bf16.msra.mxu0 %v2568
        %3612 = vmatprep.subr.bf16.mxu0 %v2571
        %3613 = vmatpush1.bf16.msra.mxu0 %v2570
        %3614 = vmatprep.subr.bf16.mxu0 %v2573
        %3615 = vmatpush1.bf16.msra.mxu0 %v2572
        %3616 = vmatprep.subr.bf16.mxu0 %v2575
        %3617 = vmatpush1.bf16.msra.mxu0 %v2574
        %3618 = vmatprep.subr.bf16.mxu0 %v2577
        %3619 = vmatpush1.bf16.msra.mxu0 %v2576
        %3620 = vmatprep.subr.bf16.mxu0 %v2579
        %3621 = vmatpush1.bf16.msra.mxu0 %v2578
        %3622 = vmatprep.subr.bf16.mxu0 %v2581
        %3623 = vmatpush1.bf16.msra.mxu0 %v2580
        %3624 = vmatprep.subr.bf16.mxu0 %v2583
        %3625 = vmatpush1.bf16.msra.mxu0 %v2582
        %3626 = vmatprep.subr.bf16.mxu0 %v2585
        %3627 = vmatpush1.bf16.msra.mxu0 %v2584
        %3628 = vmatprep.subr.bf16.mxu0 %v2587
        %3629 = vmatpush1.bf16.msra.mxu0 %v2586
        %3630 = vmatprep.subr.bf16.mxu0 %v2589
        %3631 = vmatpush1.bf16.msra.mxu0 %v2588
        %3632 = vmatprep.subr.bf16.mxu0 %v2591
        %3633 = vmatpush1.bf16.msra.mxu0 %v2590
        %3634 = vmatprep.subr.bf16.mxu0 %v2593
        %3635 = vmatpush1.bf16.msra.mxu0 %v2592
        %3636 = vmatprep.mubr.bf16.mxu0 %v423
        %3637 = vmatmul.mubr.bf16.gmra.mrb[0].mxu0 %v422
        %v3638 = vpop.f32.mrb[0].mxu0
        %v3639 = vadd.f32 %v3598, %v3638
        %v3640 = vpop.f32.mrb[0].mxu0
        %v3641 = vadd.f32 %v3600, %v3640
        %v3642 = vpop.f32.mrb[0].mxu0
        %v3643 = vpop.f32.mrb[0].mxu0
        %3644 = vdwg.mxu0
        %3645 = vmatprep.subr.bf16.mxu0 %v2595
        %3646 = vmatpush1.bf16.msra.mxu0 %v2594
        %3647 = vmatprep.subr.bf16.mxu0 %v2597
        %3648 = vmatpush1.bf16.msra.mxu0 %v2596
        %3649 = vmatprep.subr.bf16.mxu0 %v2599
        %3650 = vmatpush1.bf16.msra.mxu0 %v2598
        %3651 = vmatprep.subr.bf16.mxu0 %v2601
        %3652 = vmatpush1.bf16.msra.mxu0 %v2600
        %3653 = vmatprep.subr.bf16.mxu0 %v2603
        %3654 = vmatpush1.bf16.msra.mxu0 %v2602
        %3655 = vmatprep.subr.bf16.mxu0 %v2605
        %3656 = vmatpush1.bf16.msra.mxu0 %v2604
        %3657 = vmatprep.subr.bf16.mxu0 %v2607
        %3658 = vmatpush1.bf16.msra.mxu0 %v2606
        %3659 = vmatprep.subr.bf16.mxu0 %v2609
        %3660 = vmatpush1.bf16.msra.mxu0 %v2608
        %3661 = vmatprep.subr.bf16.mxu0 %v2611
        %3662 = vmatpush1.bf16.msra.mxu0 %v2610
        %3663 = vmatprep.subr.bf16.mxu0 %v2613
        %3664 = vmatpush1.bf16.msra.mxu0 %v2612
        %3665 = vmatprep.subr.bf16.mxu0 %v2615
        %3666 = vmatpush1.bf16.msra.mxu0 %v2614
        %3667 = vmatprep.subr.bf16.mxu0 %v2617
        %3668 = vmatpush1.bf16.msra.mxu0 %v2616
        %3669 = vmatprep.subr.bf16.mxu0 %v2619
        %3670 = vmatpush1.bf16.msra.mxu0 %v2618
        %3671 = vmatprep.subr.bf16.mxu0 %v2621
        %3672 = vmatpush1.bf16.msra.mxu0 %v2620
        %3673 = vmatprep.subr.bf16.mxu0 %v2623
        %3674 = vmatpush1.bf16.msra.mxu0 %v2622
        %3675 = vmatprep.subr.bf16.mxu0 %v2625
        %3676 = vmatpush1.bf16.msra.mxu0 %v2624
        %3677 = vmatprep.mubr.bf16.mxu0 %v425
        %3678 = vmatmul.mubr.bf16.gmra.mrb[0].mxu0 %v424
        %v3679 = vpop.f32.mrb[0].mxu0
        %v3680 = vadd.f32 %v3639, %v3679
        %v3681 = vpop.f32.mrb[0].mxu0
        %v3682 = vadd.f32 %v3641, %v3681
        %v3683 = vpop.f32.mrb[0].mxu0
        %v3684 = vpop.f32.mrb[0].mxu0
        %3685 = vdwg.mxu0
        %3686 = vmatprep.subr.bf16.mxu0 %v2627
        %3687 = vmatpush1.bf16.msra.mxu0 %v2626
        %3688 = vmatprep.subr.bf16.mxu0 %v2629
        %3689 = vmatpush1.bf16.msra.mxu0 %v2628
        %3690 = vmatprep.subr.bf16.mxu0 %v2631
        %3691 = vmatpush1.bf16.msra.mxu0 %v2630
        %3692 = vmatprep.subr.bf16.mxu0 %v2633
        %3693 = vmatpush1.bf16.msra.mxu0 %v2632
        %3694 = vmatprep.subr.bf16.mxu0 %v2635
        %3695 = vmatpush1.bf16.msra.mxu0 %v2634
        %3696 = vmatprep.subr.bf16.mxu0 %v2637
        %3697 = vmatpush1.bf16.msra.mxu0 %v2636
        %3698 = vmatprep.subr.bf16.mxu0 %v2639
        %3699 = vmatpush1.bf16.msra.mxu0 %v2638
        %3700 = vmatprep.subr.bf16.mxu0 %v2641
        %3701 = vmatpush1.bf16.msra.mxu0 %v2640
        %3702 = vmatprep.subr.bf16.mxu0 %v2643
        %3703 = vmatpush1.bf16.msra.mxu0 %v2642
        %3704 = vmatprep.subr.bf16.mxu0 %v2645
        %3705 = vmatpush1.bf16.msra.mxu0 %v2644
        %3706 = vmatprep.subr.bf16.mxu0 %v2647
        %3707 = vmatpush1.bf16.msra.mxu0 %v2646
        %3708 = vmatprep.subr.bf16.mxu0 %v2649
        %3709 = vmatpush1.bf16.msra.mxu0 %v2648
        %3710 = vmatprep.subr.bf16.mxu0 %v2651
        %3711 = vmatpush1.bf16.msra.mxu0 %v2650
        %3712 = vmatprep.subr.bf16.mxu0 %v2653
        %3713 = vmatpush1.bf16.msra.mxu0 %v2652
        %3714 = vmatprep.subr.bf16.mxu0 %v2655
        %3715 = vmatpush1.bf16.msra.mxu0 %v2654
        %3716 = vmatprep.subr.bf16.mxu0 %v2657
        %3717 = vmatpush1.bf16.msra.mxu0 %v2656
        %3718 = vmatprep.mubr.bf16.mxu0 %v427
        %3719 = vmatmul.mubr.bf16.gmra.mrb[0].mxu0 %v426
        %v3720 = vpop.f32.mrb[0].mxu0
        %v3721 = vadd.f32 %v3680, %v3720
        %v3722 = vpop.f32.mrb[0].mxu0
        %v3723 = vadd.f32 %v3682, %v3722
        %v3724 = vpop.f32.mrb[0].mxu0
        %v3725 = vpop.f32.mrb[0].mxu0
        %3726 = vdwg.mxu0
        %3727 = vmatprep.subr.bf16.mxu0 %v2659
        %3728 = vmatpush1.bf16.msra.mxu0 %v2658
        %3729 = vmatprep.subr.bf16.mxu0 %v2661
        %3730 = vmatpush1.bf16.msra.mxu0 %v2660
        %3731 = vmatprep.subr.bf16.mxu0 %v2663
        %3732 = vmatpush1.bf16.msra.mxu0 %v2662
        %3733 = vmatprep.subr.bf16.mxu0 %v2665
        %3734 = vmatpush1.bf16.msra.mxu0 %v2664
        %3735 = vmatprep.subr.bf16.mxu0 %v2667
        %3736 = vmatpush1.bf16.msra.mxu0 %v2666
        %3737 = vmatprep.subr.bf16.mxu0 %v2669
        %3738 = vmatpush1.bf16.msra.mxu0 %v2668
        %3739 = vmatprep.subr.bf16.mxu0 %v2671
        %3740 = vmatpush1.bf16.msra.mxu0 %v2670
        %3741 = vmatprep.subr.bf16.mxu0 %v2673
        %3742 = vmatpush1.bf16.msra.mxu0 %v2672
        %3743 = vmatprep.subr.bf16.mxu0 %v2675
        %3744 = vmatpush1.bf16.msra.mxu0 %v2674
        %3745 = vmatprep.subr.bf16.mxu0 %v2677
        %3746 = vmatpush1.bf16.msra.mxu0 %v2676
        %3747 = vmatprep.subr.bf16.mxu0 %v2679
        %3748 = vmatpush1.bf16.msra.mxu0 %v2678
        %3749 = vmatprep.subr.bf16.mxu0 %v2681
        %3750 = vmatpush1.bf16.msra.mxu0 %v2680
        %3751 = vmatprep.subr.bf16.mxu0 %v2683
        %3752 = vmatpush1.bf16.msra.mxu0 %v2682
        %3753 = vmatprep.subr.bf16.mxu0 %v2685
        %3754 = vmatpush1.bf16.msra.mxu0 %v2684
        %3755 = vmatprep.subr.bf16.mxu0 %v2687
        %3756 = vmatpush1.bf16.msra.mxu0 %v2686
        %3757 = vmatprep.subr.bf16.mxu0 %v2689
        %3758 = vmatpush1.bf16.msra.mxu0 %v2688
        %3759 = vmatprep.mubr.bf16.mxu0 %v429
        %3760 = vmatmul.mubr.bf16.gmra.mrb[0].mxu0 %v428
        %v3761 = vpop.f32.mrb[0].mxu0
        %v3762 = vadd.f32 %v3721, %v3761
        %v3763 = vpop.f32.mrb[0].mxu0
        %v3764 = vadd.f32 %v3723, %v3763
        %v3765 = vpop.f32.mrb[0].mxu0
        %v3766 = vpop.f32.mrb[0].mxu0
        %3767 = vdwg.mxu0
        %3768 = vmatprep.subr.bf16.mxu0 %v2691
        %3769 = vmatpush1.bf16.msra.mxu0 %v2690
        %3770 = vmatprep.subr.bf16.mxu0 %v2693
        %3771 = vmatpush1.bf16.msra.mxu0 %v2692
        %3772 = vmatprep.subr.bf16.mxu0 %v2695
        %3773 = vmatpush1.bf16.msra.mxu0 %v2694
        %3774 = vmatprep.subr.bf16.mxu0 %v2697
        %3775 = vmatpush1.bf16.msra.mxu0 %v2696
        %3776 = vmatprep.subr.bf16.mxu0 %v2699
        %3777 = vmatpush1.bf16.msra.mxu0 %v2698
        %3778 = vmatprep.subr.bf16.mxu0 %v2701
        %3779 = vmatpush1.bf16.msra.mxu0 %v2700
        %3780 = vmatprep.subr.bf16.mxu0 %v2703
        %3781 = vmatpush1.bf16.msra.mxu0 %v2702
        %3782 = vmatprep.subr.bf16.mxu0 %v2705
        %3783 = vmatpush1.bf16.msra.mxu0 %v2704
        %3784 = vmatprep.subr.bf16.mxu0 %v2707
        %3785 = vmatpush1.bf16.msra.mxu0 %v2706
        %3786 = vmatprep.subr.bf16.mxu0 %v2709
        %3787 = vmatpush1.bf16.msra.mxu0 %v2708
        %3788 = vmatprep.subr.bf16.mxu0 %v2711
        %3789 = vmatpush1.bf16.msra.mxu0 %v2710
        %3790 = vmatprep.subr.bf16.mxu0 %v2713
        %3791 = vmatpush1.bf16.msra.mxu0 %v2712
        %3792 = vmatprep.subr.bf16.mxu0 %v2715
        %3793 = vmatpush1.bf16.msra.mxu0 %v2714
        %3794 = vmatprep.subr.bf16.mxu0 %v2717
        %3795 = vmatpush1.bf16.msra.mxu0 %v2716
        %3796 = vmatprep.subr.bf16.mxu0 %v2719
        %3797 = vmatpush1.bf16.msra.mxu0 %v2718
        %3798 = vmatprep.subr.bf16.mxu0 %v2721
        %3799 = vmatpush1.bf16.msra.mxu0 %v2720
        %3800 = vmatprep.mubr.bf16.mxu0 %v431
        %3801 = vmatmul.mubr.bf16.gmra.mrb[0].mxu0 %v430
        %v3802 = vpop.f32.mrb[0].mxu0
        %v3803 = vadd.f32 %v3762, %v3802
        %v3804 = vpop.f32.mrb[0].mxu0
        %v3805 = vadd.f32 %v3764, %v3804
        %v3806 = vpop.f32.mrb[0].mxu0
        %v3807 = vpop.f32.mrb[0].mxu0
        %3808 = vdwg.mxu0
        %3809 = vmatprep.subr.bf16.mxu0 %v2723
        %3810 = vmatpush1.bf16.msra.mxu0 %v2722
        %3811 = vmatprep.subr.bf16.mxu0 %v2725
        %3812 = vmatpush1.bf16.msra.mxu0 %v2724
        %3813 = vmatprep.subr.bf16.mxu0 %v2727
        %3814 = vmatpush1.bf16.msra.mxu0 %v2726
        %3815 = vmatprep.subr.bf16.mxu0 %v2729
        %3816 = vmatpush1.bf16.msra.mxu0 %v2728
        %3817 = vmatprep.subr.bf16.mxu0 %v2731
        %3818 = vmatpush1.bf16.msra.mxu0 %v2730
        %3819 = vmatprep.subr.bf16.mxu0 %v2733
        %3820 = vmatpush1.bf16.msra.mxu0 %v2732
        %3821 = vmatprep.subr.bf16.mxu0 %v2735
        %3822 = vmatpush1.bf16.msra.mxu0 %v2734
        %3823 = vmatprep.subr.bf16.mxu0 %v2737
        %3824 = vmatpush1.bf16.msra.mxu0 %v2736
        %3825 = vmatprep.subr.bf16.mxu0 %v2739
        %3826 = vmatpush1.bf16.msra.mxu0 %v2738
        %3827 = vmatprep.subr.bf16.mxu0 %v2741
        %3828 = vmatpush1.bf16.msra.mxu0 %v2740
        %3829 = vmatprep.subr.bf16.mxu0 %v2743
        %3830 = vmatpush1.bf16.msra.mxu0 %v2742
        %3831 = vmatprep.subr.bf16.mxu0 %v2745
        %3832 = vmatpush1.bf16.msra.mxu0 %v2744
        %3833 = vmatprep.subr.bf16.mxu0 %v2747
        %3834 = vmatpush1.bf16.msra.mxu0 %v2746
        %3835 = vmatprep.subr.bf16.mxu0 %v2749
        %3836 = vmatpush1.bf16.msra.mxu0 %v2748
        %3837 = vmatprep.subr.bf16.mxu0 %v2751
        %3838 = vmatpush1.bf16.msra.mxu0 %v2750
        %3839 = vmatprep.subr.bf16.mxu0 %v2753
        %3840 = vmatpush1.bf16.msra.mxu0 %v2752
        %3841 = vmatprep.mubr.bf16.mxu0 %v433
        %3842 = vmatmul.mubr.bf16.gmra.mrb[0].mxu0 %v432
        %v3843 = vpop.f32.mrb[0].mxu0
        %v3844 = vadd.f32 %v3803, %v3843
        %v3845 = vpop.f32.mrb[0].mxu0
        %v3846 = vadd.f32 %v3805, %v3845
        %v3847 = vpop.f32.mrb[0].mxu0
        %v3848 = vpop.f32.mrb[0].mxu0
        %3849 = vdwg.mxu0
        %3850 = vmatprep.subr.bf16.mxu0 %v2755
        %3851 = vmatpush1.bf16.msra.mxu0 %v2754
        %3852 = vmatprep.subr.bf16.mxu0 %v2757
        %3853 = vmatpush1.bf16.msra.mxu0 %v2756
        %3854 = vmatprep.subr.bf16.mxu0 %v2759
        %3855 = vmatpush1.bf16.msra.mxu0 %v2758
        %3856 = vmatprep.subr.bf16.mxu0 %v2761
        %3857 = vmatpush1.bf16.msra.mxu0 %v2760
        %3858 = vmatprep.subr.bf16.mxu0 %v2763
        %3859 = vmatpush1.bf16.msra.mxu0 %v2762
        %3860 = vmatprep.subr.bf16.mxu0 %v2765
        %3861 = vmatpush1.bf16.msra.mxu0 %v2764
        %3862 = vmatprep.subr.bf16.mxu0 %v2767
        %3863 = vmatpush1.bf16.msra.mxu0 %v2766
        %3864 = vmatprep.subr.bf16.mxu0 %v2769
        %3865 = vmatpush1.bf16.msra.mxu0 %v2768
        %3866 = vmatprep.subr.bf16.mxu0 %v2771
        %3867 = vmatpush1.bf16.msra.mxu0 %v2770
        %3868 = vmatprep.subr.bf16.mxu0 %v2773
        %3869 = vmatpush1.bf16.msra.mxu0 %v2772
        %3870 = vmatprep.subr.bf16.mxu0 %v2775
        %3871 = vmatpush1.bf16.msra.mxu0 %v2774
        %3872 = vmatprep.subr.bf16.mxu0 %v2777
        %3873 = vmatpush1.bf16.msra.mxu0 %v2776
        %3874 = vmatprep.subr.bf16.mxu0 %v2779
        %3875 = vmatpush1.bf16.msra.mxu0 %v2778
        %3876 = vmatprep.subr.bf16.mxu0 %v2781
        %3877 = vmatpush1.bf16.msra.mxu0 %v2780
        %3878 = vmatprep.subr.bf16.mxu0 %v2783
        %3879 = vmatpush1.bf16.msra.mxu0 %v2782
        %3880 = vmatprep.subr.bf16.mxu0 %v2785
        %3881 = vmatpush1.bf16.msra.mxu0 %v2784
        %3882 = vmatprep.mubr.bf16.mxu0 %v435
        %3883 = vmatmul.mubr.bf16.gmra.mrb[0].mxu0 %v434
        %v3884 = vpop.f32.mrb[0].mxu0
        %v3885 = vadd.f32 %v3844, %v3884
        %v3886 = vpop.f32.mrb[0].mxu0
        %v3887 = vadd.f32 %v3846, %v3886
        %v3888 = vpop.f32.mrb[0].mxu0
        %v3889 = vpop.f32.mrb[0].mxu0
        %3890 = vdwg.mxu0
        %3891 = vmatprep.subr.bf16.mxu0 %v2787
        %3892 = vmatpush1.bf16.msra.mxu0 %v2786
        %3893 = vmatprep.subr.bf16.mxu0 %v2789
        %3894 = vmatpush1.bf16.msra.mxu0 %v2788
        %3895 = vmatprep.subr.bf16.mxu0 %v2791
        %3896 = vmatpush1.bf16.msra.mxu0 %v2790
        %3897 = vmatprep.subr.bf16.mxu0 %v2793
        %3898 = vmatpush1.bf16.msra.mxu0 %v2792
        %3899 = vmatprep.subr.bf16.mxu0 %v2795
        %3900 = vmatpush1.bf16.msra.mxu0 %v2794
        %3901 = vmatprep.subr.bf16.mxu0 %v2797
        %3902 = vmatpush1.bf16.msra.mxu0 %v2796
        %3903 = vmatprep.subr.bf16.mxu0 %v2799
        %3904 = vmatpush1.bf16.msra.mxu0 %v2798
        %3905 = vmatprep.subr.bf16.mxu0 %v2801
        %3906 = vmatpush1.bf16.msra.mxu0 %v2800
        %3907 = vmatprep.subr.bf16.mxu0 %v2803
        %3908 = vmatpush1.bf16.msra.mxu0 %v2802
        %3909 = vmatprep.subr.bf16.mxu0 %v2805
        %3910 = vmatpush1.bf16.msra.mxu0 %v2804
        %3911 = vmatprep.subr.bf16.mxu0 %v2807
        %3912 = vmatpush1.bf16.msra.mxu0 %v2806
        %3913 = vmatprep.subr.bf16.mxu0 %v2809
        %3914 = vmatpush1.bf16.msra.mxu0 %v2808
        %3915 = vmatprep.subr.bf16.mxu0 %v2811
        %3916 = vmatpush1.bf16.msra.mxu0 %v2810
        %3917 = vmatprep.subr.bf16.mxu0 %v2813
        %3918 = vmatpush1.bf16.msra.mxu0 %v2812
        %3919 = vmatprep.subr.bf16.mxu0 %v2815
        %3920 = vmatpush1.bf16.msra.mxu0 %v2814
        %3921 = vmatprep.subr.bf16.mxu0 %v2817
        %3922 = vmatpush1.bf16.msra.mxu0 %v2816
        %3923 = vmatprep.mubr.bf16.mxu0 %v437
        %3924 = vmatmul.mubr.bf16.gmra.mrb[0].mxu0 %v436
        %v3925 = vpop.f32.mrb[0].mxu0
        %v3926 = vadd.f32 %v3885, %v3925
        %v3927 = vpop.f32.mrb[0].mxu0
        %v3928 = vadd.f32 %v3887, %v3927
        %v3929 = vpop.f32.mrb[0].mxu0
        %v3930 = vpop.f32.mrb[0].mxu0
        %3931 = vdwg.mxu0
        %3932 = vmatprep.subr.bf16.mxu0 %v2819
        %3933 = vmatpush1.bf16.msra.mxu0 %v2818
        %3934 = vmatprep.subr.bf16.mxu0 %v2821
        %3935 = vmatpush1.bf16.msra.mxu0 %v2820
        %3936 = vmatprep.subr.bf16.mxu0 %v2823
        %3937 = vmatpush1.bf16.msra.mxu0 %v2822
        %3938 = vmatprep.subr.bf16.mxu0 %v2825
        %3939 = vmatpush1.bf16.msra.mxu0 %v2824
        %3940 = vmatprep.subr.bf16.mxu0 %v2827
        %3941 = vmatpush1.bf16.msra.mxu0 %v2826
        %3942 = vmatprep.subr.bf16.mxu0 %v2829
        %3943 = vmatpush1.bf16.msra.mxu0 %v2828
        %3944 = vmatprep.subr.bf16.mxu0 %v2831
        %3945 = vmatpush1.bf16.msra.mxu0 %v2830
        %3946 = vmatprep.subr.bf16.mxu0 %v2833
        %3947 = vmatpush1.bf16.msra.mxu0 %v2832
        %3948 = vmatprep.subr.bf16.mxu0 %v2835
        %3949 = vmatpush1.bf16.msra.mxu0 %v2834
        %3950 = vmatprep.subr.bf16.mxu0 %v2837
        %3951 = vmatpush1.bf16.msra.mxu0 %v2836
        %3952 = vmatprep.subr.bf16.mxu0 %v2839
        %3953 = vmatpush1.bf16.msra.mxu0 %v2838
        %3954 = vmatprep.subr.bf16.mxu0 %v2841
        %3955 = vmatpush1.bf16.msra.mxu0 %v2840
        %3956 = vmatprep.subr.bf16.mxu0 %v2843
        %3957 = vmatpush1.bf16.msra.mxu0 %v2842
        %3958 = vmatprep.subr.bf16.mxu0 %v2845
        %3959 = vmatpush1.bf16.msra.mxu0 %v2844
        %3960 = vmatprep.subr.bf16.mxu0 %v2847
        %3961 = vmatpush1.bf16.msra.mxu0 %v2846
        %3962 = vmatprep.subr.bf16.mxu0 %v2849
        %3963 = vmatpush1.bf16.msra.mxu0 %v2848
        %3964 = vmatprep.mubr.bf16.mxu0 %v439
        %3965 = vmatmul.mubr.bf16.gmra.mrb[0].mxu0 %v438
        %v3966 = vpop.f32.mrb[0].mxu0
        %v3967 = vadd.f32 %v3926, %v3966
        %v3968 = vpop.f32.mrb[0].mxu0
        %v3969 = vadd.f32 %v3928, %v3968
        %v3970 = vpop.f32.mrb[0].mxu0
        %v3971 = vpop.f32.mrb[0].mxu0
        %3972 = vdwg.mxu0
        %3973 = vmatprep.subr.bf16.mxu0 %v2851
        %3974 = vmatpush1.bf16.msra.mxu0 %v2850
        %3975 = vmatprep.subr.bf16.mxu0 %v2853
        %3976 = vmatpush1.bf16.msra.mxu0 %v2852
        %3977 = vmatprep.subr.bf16.mxu0 %v2855
        %3978 = vmatpush1.bf16.msra.mxu0 %v2854
        %3979 = vmatprep.subr.bf16.mxu0 %v2857
        %3980 = vmatpush1.bf16.msra.mxu0 %v2856
        %3981 = vmatprep.subr.bf16.mxu0 %v2859
        %3982 = vmatpush1.bf16.msra.mxu0 %v2858
        %3983 = vmatprep.subr.bf16.mxu0 %v2861
        %3984 = vmatpush1.bf16.msra.mxu0 %v2860
        %3985 = vmatprep.subr.bf16.mxu0 %v2863
        %3986 = vmatpush1.bf16.msra.mxu0 %v2862
        %3987 = vmatprep.subr.bf16.mxu0 %v2865
        %3988 = vmatpush1.bf16.msra.mxu0 %v2864
        %3989 = vmatprep.subr.bf16.mxu0 %v2867
        %3990 = vmatpush1.bf16.msra.mxu0 %v2866
        %3991 = vmatprep.subr.bf16.mxu0 %v2869
        %3992 = vmatpush1.bf16.msra.mxu0 %v2868
        %3993 = vmatprep.subr.bf16.mxu0 %v2871
        %3994 = vmatpush1.bf16.msra.mxu0 %v2870
        %3995 = vmatprep.subr.bf16.mxu0 %v2873
        %3996 = vmatpush1.bf16.msra.mxu0 %v2872
        %3997 = vmatprep.subr.bf16.mxu0 %v2875
        %3998 = vmatpush1.bf16.msra.mxu0 %v2874
        %3999 = vmatprep.subr.bf16.mxu0 %v2877
        %4000 = vmatpush1.bf16.msra.mxu0 %v2876
        %4001 = vmatprep.subr.bf16.mxu0 %v2879
        %4002 = vmatpush1.bf16.msra.mxu0 %v2878
        %4003 = vmatprep.subr.bf16.mxu0 %v2881
        %4004 = vmatpush1.bf16.msra.mxu0 %v2880
        %4005 = vmatprep.mubr.bf16.mxu0 %v441
        %4006 = vmatmul.mubr.bf16.gmra.mrb[0].mxu0 %v440
        %v4007 = vpop.f32.mrb[0].mxu0
        %v4008 = vadd.f32 %v3967, %v4007
        %v4009 = vpop.f32.mrb[0].mxu0
        %v4010 = vadd.f32 %v3969, %v4009
        %v4011 = vpop.f32.mrb[0].mxu0
        %v4012 = vpop.f32.mrb[0].mxu0
        %4013 = vdwg.mxu0
        %4014 = vmatprep.subr.bf16.mxu0 %v2883
        %4015 = vmatpush1.bf16.msra.mxu0 %v2882
        %4016 = vmatprep.subr.bf16.mxu0 %v2885
        %4017 = vmatpush1.bf16.msra.mxu0 %v2884
        %4018 = vmatprep.subr.bf16.mxu0 %v2887
        %4019 = vmatpush1.bf16.msra.mxu0 %v2886
        %4020 = vmatprep.subr.bf16.mxu0 %v2889
        %4021 = vmatpush1.bf16.msra.mxu0 %v2888
        %4022 = vmatprep.subr.bf16.mxu0 %v2891
        %4023 = vmatpush1.bf16.msra.mxu0 %v2890
        %4024 = vmatprep.subr.bf16.mxu0 %v2893
        %4025 = vmatpush1.bf16.msra.mxu0 %v2892
        %4026 = vmatprep.subr.bf16.mxu0 %v2895
        %4027 = vmatpush1.bf16.msra.mxu0 %v2894
        %4028 = vmatprep.subr.bf16.mxu0 %v2897
        %4029 = vmatpush1.bf16.msra.mxu0 %v2896
        %4030 = vmatprep.subr.bf16.mxu0 %v2899
        %4031 = vmatpush1.bf16.msra.mxu0 %v2898
        %4032 = vmatprep.subr.bf16.mxu0 %v2901
        %4033 = vmatpush1.bf16.msra.mxu0 %v2900
        %4034 = vmatprep.subr.bf16.mxu0 %v2903
        %4035 = vmatpush1.bf16.msra.mxu0 %v2902
        %4036 = vmatprep.subr.bf16.mxu0 %v2905
        %4037 = vmatpush1.bf16.msra.mxu0 %v2904
        %4038 = vmatprep.subr.bf16.mxu0 %v2907
        %4039 = vmatpush1.bf16.msra.mxu0 %v2906
        %4040 = vmatprep.subr.bf16.mxu0 %v2909
        %4041 = vmatpush1.bf16.msra.mxu0 %v2908
        %4042 = vmatprep.subr.bf16.mxu0 %v2911
        %4043 = vmatpush1.bf16.msra.mxu0 %v2910
        %4044 = vmatprep.subr.bf16.mxu0 %v2913
        %4045 = vmatpush1.bf16.msra.mxu0 %v2912
        %4046 = vmatprep.mubr.bf16.mxu0 %v443
        %4047 = vmatmul.mubr.bf16.gmra.mrb[0].mxu0 %v442
        %v4048 = vpop.f32.mrb[0].mxu0
        %v4049 = vadd.f32 %v4008, %v4048
        %v4050 = vpop.f32.mrb[0].mxu0
        %v4051 = vadd.f32 %v4010, %v4050
        %v4052 = vpop.f32.mrb[0].mxu0
        %v4053 = vpop.f32.mrb[0].mxu0
        %4054 = vdwg.mxu0
        %4055 = vmatprep.subr.bf16.mxu0 %v2915
        %4056 = vmatpush1.bf16.msra.mxu0 %v2914
        %4057 = vmatprep.subr.bf16.mxu0 %v2917
        %4058 = vmatpush1.bf16.msra.mxu0 %v2916
        %4059 = vmatprep.subr.bf16.mxu0 %v2919
        %4060 = vmatpush1.bf16.msra.mxu0 %v2918
        %4061 = vmatprep.subr.bf16.mxu0 %v2921
        %4062 = vmatpush1.bf16.msra.mxu0 %v2920
        %4063 = vmatprep.subr.bf16.mxu0 %v2923
        %4064 = vmatpush1.bf16.msra.mxu0 %v2922
        %4065 = vmatprep.subr.bf16.mxu0 %v2925
        %4066 = vmatpush1.bf16.msra.mxu0 %v2924
        %4067 = vmatprep.subr.bf16.mxu0 %v2927
        %4068 = vmatpush1.bf16.msra.mxu0 %v2926
        %4069 = vmatprep.subr.bf16.mxu0 %v2929
        %4070 = vmatpush1.bf16.msra.mxu0 %v2928
        %4071 = vmatprep.subr.bf16.mxu0 %v2931
        %4072 = vmatpush1.bf16.msra.mxu0 %v2930
        %4073 = vmatprep.subr.bf16.mxu0 %v2933
        %4074 = vmatpush1.bf16.msra.mxu0 %v2932
        %4075 = vmatprep.subr.bf16.mxu0 %v2935
        %4076 = vmatpush1.bf16.msra.mxu0 %v2934
        %4077 = vmatprep.subr.bf16.mxu0 %v2937
        %4078 = vmatpush1.bf16.msra.mxu0 %v2936
        %4079 = vmatprep.subr.bf16.mxu0 %v2939
        %4080 = vmatpush1.bf16.msra.mxu0 %v2938
        %4081 = vmatprep.subr.bf16.mxu0 %v2941
        %4082 = vmatpush1.bf16.msra.mxu0 %v2940
        %4083 = vmatprep.subr.bf16.mxu0 %v2943
        %4084 = vmatpush1.bf16.msra.mxu0 %v2942
        %4085 = vmatprep.subr.bf16.mxu0 %v2945
        %4086 = vmatpush1.bf16.msra.mxu0 %v2944
        %4087 = vmatprep.mubr.bf16.mxu0 %v445
        %4088 = vmatmul.mubr.bf16.gmra.mrb[0].mxu0 %v444
        %v4089 = vpop.f32.mrb[0].mxu0
        %v4090 = vadd.f32 %v4049, %v4089
        %v4091 = vpop.f32.mrb[0].mxu0
        %v4092 = vadd.f32 %v4051, %v4091
        %v4093 = vpop.f32.mrb[0].mxu0
        %v4094 = vpop.f32.mrb[0].mxu0
        %4095 = vdwg.mxu0
        %4096 = vmatprep.subr.bf16.mxu0 %v2947
        %4097 = vmatpush1.bf16.msra.mxu0 %v2946
        %4098 = vmatprep.subr.bf16.mxu0 %v2949
        %4099 = vmatpush1.bf16.msra.mxu0 %v2948
        %4100 = vmatprep.subr.bf16.mxu0 %v2951
        %4101 = vmatpush1.bf16.msra.mxu0 %v2950
        %4102 = vmatprep.subr.bf16.mxu0 %v2953
        %4103 = vmatpush1.bf16.msra.mxu0 %v2952
        %4104 = vmatprep.subr.bf16.mxu0 %v2955
        %4105 = vmatpush1.bf16.msra.mxu0 %v2954
        %4106 = vmatprep.subr.bf16.mxu0 %v2957
        %4107 = vmatpush1.bf16.msra.mxu0 %v2956
        %4108 = vmatprep.subr.bf16.mxu0 %v2959
        %4109 = vmatpush1.bf16.msra.mxu0 %v2958
        %4110 = vmatprep.subr.bf16.mxu0 %v2961
        %4111 = vmatpush1.bf16.msra.mxu0 %v2960
        %4112 = vmatprep.subr.bf16.mxu0 %v2963
        %4113 = vmatpush1.bf16.msra.mxu0 %v2962
        %4114 = vmatprep.subr.bf16.mxu0 %v2965
        %4115 = vmatpush1.bf16.msra.mxu0 %v2964
        %4116 = vmatprep.subr.bf16.mxu0 %v2967
        %4117 = vmatpush1.bf16.msra.mxu0 %v2966
        %4118 = vmatprep.subr.bf16.mxu0 %v2969
        %4119 = vmatpush1.bf16.msra.mxu0 %v2968
        %4120 = vmatprep.subr.bf16.mxu0 %v2971
        %4121 = vmatpush1.bf16.msra.mxu0 %v2970
        %4122 = vmatprep.subr.bf16.mxu0 %v2973
        %4123 = vmatpush1.bf16.msra.mxu0 %v2972
        %4124 = vmatprep.subr.bf16.mxu0 %v2975
        %4125 = vmatpush1.bf16.msra.mxu0 %v2974
        %4126 = vmatprep.subr.bf16.mxu0 %v2977
        %4127 = vmatpush1.bf16.msra.mxu0 %v2976
        %4128 = vmatprep.mubr.bf16.mxu0 %v447
        %4129 = vmatmul.mubr.bf16.gmra.mrb[0].mxu0 %v446
        %v4130 = vpop.f32.mrb[0].mxu0
        %v4131 = vadd.f32 %v4090, %v4130
        %v4132 = vpop.f32.mrb[0].mxu0
        %v4133 = vadd.f32 %v4092, %v4132
        %v4134 = vpop.f32.mrb[0].mxu0
        %v4135 = vpop.f32.mrb[0].mxu0
        %4136 = vdwg.mxu0
        %4137 = vmatprep.subr.bf16.mxu0 %v2979
        %4138 = vmatpush1.bf16.msra.mxu0 %v2978
        %4139 = vmatprep.subr.bf16.mxu0 %v2981
        %4140 = vmatpush1.bf16.msra.mxu0 %v2980
        %4141 = vmatprep.subr.bf16.mxu0 %v2983
        %4142 = vmatpush1.bf16.msra.mxu0 %v2982
        %4143 = vmatprep.subr.bf16.mxu0 %v2985
        %4144 = vmatpush1.bf16.msra.mxu0 %v2984
        %4145 = vmatprep.subr.bf16.mxu0 %v2987
        %4146 = vmatpush1.bf16.msra.mxu0 %v2986
        %4147 = vmatprep.subr.bf16.mxu0 %v2989
        %4148 = vmatpush1.bf16.msra.mxu0 %v2988
        %4149 = vmatprep.subr.bf16.mxu0 %v2991
        %4150 = vmatpush1.bf16.msra.mxu0 %v2990
        %4151 = vmatprep.subr.bf16.mxu0 %v2993
        %4152 = vmatpush1.bf16.msra.mxu0 %v2992
        %4153 = vmatprep.subr.bf16.mxu0 %v2995
        %4154 = vmatpush1.bf16.msra.mxu0 %v2994
        %4155 = vmatprep.subr.bf16.mxu0 %v2997
        %4156 = vmatpush1.bf16.msra.mxu0 %v2996
        %4157 = vmatprep.subr.bf16.mxu0 %v2999
        %4158 = vmatpush1.bf16.msra.mxu0 %v2998
        %4159 = vmatprep.subr.bf16.mxu0 %v3001
        %4160 = vmatpush1.bf16.msra.mxu0 %v3000
        %4161 = vmatprep.subr.bf16.mxu0 %v3003
        %4162 = vmatpush1.bf16.msra.mxu0 %v3002
        %4163 = vmatprep.subr.bf16.mxu0 %v3005
        %4164 = vmatpush1.bf16.msra.mxu0 %v3004
        %4165 = vmatprep.subr.bf16.mxu0 %v3007
        %4166 = vmatpush1.bf16.msra.mxu0 %v3006
        %4167 = vmatprep.subr.bf16.mxu0 %v3009
        %4168 = vmatpush1.bf16.msra.mxu0 %v3008
        %4169 = vmatprep.mubr.bf16.mxu0 %v449
        %4170 = vmatmul.mubr.bf16.gmra.mrb[0].mxu0 %v448
        %v4171 = vpop.f32.mrb[0].mxu0
        %v4172 = vadd.f32 %v4131, %v4171
        %v4173 = vpop.f32.mrb[0].mxu0
        %v4174 = vadd.f32 %v4133, %v4173
        %v4175 = vpop.f32.mrb[0].mxu0
        %v4176 = vpop.f32.mrb[0].mxu0
        %4177 = vdwg.mxu0
        %v4178 = vrot.slane %v4172, 4
        %v4179 = vadd.f32 %v4172, %v4178
        %v4180 = vrot.slane %v4179, 2
        %v4181 = vadd.f32 %v4179, %v4180
        %v4182 = vrot.slane %v4181, 1
        %v4183 = vadd.f32 %v4181, %v4182
        %v4184 = vrot.slane %v4174, 4
        %v4185 = vadd.f32 %v4174, %v4184
        %v4186 = vrot.slane %v4185, 2
        %v4187 = vadd.f32 %v4185, %v4186
        %v4188 = vrot.slane %v4187, 1
        %v4189 = vadd.f32 %v4187, %v4188
        %v4190 = vmul.f32 %v4183, 0.125
        %v4191 = vmul.f32 %v4189, 0.125
        %v4192 = vmul.f32 %v4172, %v4172
        %v4193 = vmul.f32 %v4174, %v4174
        %v4194 = vrot.slane %v4192, 4
        %v4195 = vadd.f32 %v4192, %v4194
        %v4196 = vrot.slane %v4195, 2
        %v4197 = vadd.f32 %v4195, %v4196
        %v4198 = vrot.slane %v4197, 1
        %v4199 = vadd.f32 %v4197, %v4198
        %v4200 = vrot.slane %v4193, 4
        %v4201 = vadd.f32 %v4193, %v4200
        %v4202 = vrot.slane %v4201, 2
        %v4203 = vadd.f32 %v4201, %v4202
        %v4204 = vrot.slane %v4203, 1
        %v4205 = vadd.f32 %v4203, %v4204
        %v4206 = vmul.f32 %v4199, 0.125
        %v4207 = vmul.f32 %v4205, 0.125
        %v4208 = vmul.f32 %v4190, %v4190
        %v4209 = vmul.f32 %v4191, %v4191
        %v4210 = vsub.f32 %v4206, %v4208
        %v4211 = vsub.f32 %v4207, %v4209
        %v4212 = vsub.f32 %v4172, %v4190
        %v4213 = vsub.f32 %v4174, %v4191
        %v4214 = vadd.f32 %v4210, 1e-05
        %v4215 = vadd.f32 %v4211, 1e-05
        %v4216 = vrsqrt.pop %v4214
        %v4217 = vrsqrt.pop %v4215
        %v4218 = vmul.f32 %v4212, %v4216
        %v4219 = vmul.f32 %v4213, %v4217
        %v4220 = vld [vmem:[%s325] sm:$0x3]
        %v4222 = vlaneseq
        %v4223 = vshrl.u32 %v4222, 7
        %v4224 = vsub.s32 0, %v4223
        %v4225 = vrot.slane %v4220, %v4224
        %v4226 = vlaneseq
        %v4227 = vshrl.u32 %v4226, 7
        %v4228 = vsub.s32 1, %v4227
        %v4229 = vrot.slane %v4220, %v4228
        %v4232 = vmul.f32 %v4218, %v4225
        %v4233 = vmul.f32 %v4219, %v4229
        %v4234 = vld [vmem:[%s334] sm:$0x3]
        %v4236 = vlaneseq
        %v4237 = vshrl.u32 %v4236, 7
        %v4238 = vsub.s32 0, %v4237
        %v4239 = vrot.slane %v4234, %v4238
        %v4240 = vlaneseq
        %v4241 = vshrl.u32 %v4240, 7
        %v4242 = vsub.s32 1, %v4241
        %v4243 = vrot.slane %v4234, %v4242
        %v4246 = vadd.f32 %v4232, %v4239
        %v4247 = vadd.f32 %v4233, %v4243
        %v4248 = vmax.f32 %v4246, 0.0
        %v4249 = vmax.f32 %v4247, 0.0
        %v4250 = vld [vmem:[%s343] sm:$0x3]
        %v4252 = vlaneseq
        %v4253 = vshrl.u32 %v4252, 7
        %v4254 = vsub.s32 0, %v4253
        %v4255 = vrot.slane %v4250, %v4254
        %v4256 = vlaneseq
        %v4257 = vshrl.u32 %v4256, 7
        %v4258 = vsub.s32 1, %v4257
        %v4259 = vrot.slane %v4250, %v4258
        %v4262 = vmul.f32 %v4248, %v4255
        %v4263 = vmul.f32 %v4249, %v4259
        %v4264 = vadd.f32 %v4262, %v4263
        %4265 = vadd.xlane.f32.xlu0 %v4264
        %v4266 = vpop.xlane.xlu0 %4265
        %p4267 = scmp.eq.s32.totalorder %s28, 0
        // Predicated region
        $region65: #{tpu_custom_call.1} parent=43 // pred_check
          %p4268 = pneg %p4267
        $region66: #{tpu_custom_call.1} parent=43 // pred_check_branch
          %4270 = sbr.rel (%p4268) target = $region68
        $region67: #{tpu_custom_call.1} parent=43 // pred_region
          %v4271 = vld [vmem:[#allocation4] sm:$0x1]
          %v4273 = vlaneseq
          %v4274 = vshrl.u32 %v4273, 7
          %v4275 = vsub.s32 0, %v4274
          %v4276 = vrot.slane %v4271, %v4275
          %v4278 = vadd.f32 %v4266, %v4276
          %vm4279 = vcmask 7168
          %4280 = vst.msk [vmem:[%s7] sm:$0xff] %vm4279, %v4278
        $region68: #{tpu_custom_call.1} parent=43 // pred_fallthru
          _
        %p4281 = scmp.gt.s32.totalorder %s28, 0
        // Predicated region
        $region69: #{tpu_custom_call.1} parent=43 // pred_check
          %p4282 = pneg %p4281
        $region70: #{tpu_custom_call.1} parent=43 // pred_check_branch
          %4284 = sbr.rel (%p4282) target = $region72
        $region71: #{tpu_custom_call.1} parent=43 // pred_region
          %v4285 = vld [vmem:[%s7] sm:$0xff]
          %v4286 = vadd.f32 %v4285, %v4266
          %vm4287 = vcmask 7168
          %4288 = vst.msk [vmem:[%s7] sm:$0xff] %vm4287, %v4286
        $region72: #{tpu_custom_call.1} parent=43 // pred_fallthru
          _
        // Predicated region
        $region73: #{tpu_custom_call.1} parent=43 // pred_check
          %p4289 = pneg %p187
        $region74: #{tpu_custom_call.1} parent=43 // pred_check_branch
          %4291 = sbr.rel (%p4289) target = $region76
        $region75: #{tpu_custom_call.1} parent=43 // pred_region
          _
        $region76: #{tpu_custom_call.1} parent=43 // pred_fallthru
          _
        // Predicated region
        $region77: #{tpu_custom_call.1} parent=43 // pred_check
          %p4292 = pneg %p187
        $region78: #{tpu_custom_call.1} parent=43 // pred_check_branch
          %4294 = sbr.rel (%p4292) target = $region80
        $region79: #{tpu_custom_call.1} parent=43 // pred_region
          _
        $region80: #{tpu_custom_call.1} parent=43 // pred_fallthru
          _
      $region44: #{tpu_custom_call.1} parent=5 // pred_fallthru
        _
      %p4295 = scmp.le.s32.totalorder 2, %s23
      // Predicated region
      $region81: #{tpu_custom_call.1} parent=5 // pred_check
        %p4296 = pneg %p4295
      $region82: #{tpu_custom_call.1} parent=5 // pred_check_branch
        %4298 = sbr.rel (%p4296) target = $region84
      $region83: #{tpu_custom_call.1} parent=5 // pred_region
        %s4299 = ssub.s32 %s23, 2
      $region84: #{tpu_custom_call.1} parent=5 // pred_fallthru
        _
    $region6: #{tpu_custom_call.1} parent=1 // loop_footer
      %s27 = sadd.s32 1, %s23
    $region7: #{tpu_custom_call.1} parent=1 // loop_footer_branch
      %22 = sbr.rel target = $region3
    $region8: #{tpu_custom_call.1} parent=1 // loop_exit
      _
    %4300 = vsyncpa [#allocation6], 1
    %s4301 = scalar_lea.sflag [#allocation6], 1
    %4302 = vsyncpa %s4301, 1
    %4303 = vsyncpa [#allocation8], 1
    %s4304 = scalar_lea.sflag [#allocation8], 1
    %4305 = vsyncpa %s4304, 1
    %4306 = vsyncpa [#allocation11], 1
    %s4307 = scalar_lea.sflag [#allocation11], 1
    %4308 = vsyncpa %s4307, 1

</llo_original>
